<compile_context>
chip_gen: v7x
topology: tpu7x:2x2x1
jax: 0.10.0
libtpu: 0.0.40
codegen_flags: <defaults>
</compile_context>

<pallas_src>
import functools
import numpy as np
import jax
import jax.numpy as jnp
from jax import lax
from jax.experimental import pallas as pl
from jax.experimental.pallas import tpu as pltpu

N_MAX = 128  # padded number of sampled pixels per image (sublane aligned)


# ---------------------------------------------------------------------------
# Pallas kernel: B_TILE batch elements per grid step.
# ---------------------------------------------------------------------------
def _pi_loss_kernel(*refs, b_tile, margin, pos_wght, sigma, loss_type, use_wght):
    if use_wght:
        pred_ref, tgt_ref, msk_ref, wgt_ref, out_ref = refs
    else:
        pred_ref, tgt_ref, msk_ref, out_ref = refs
        wgt_ref = None

    f32 = jnp.float32
    N = pred_ref.shape[1]
    Cp = pred_ref.shape[2]

    # HIGHEST only where a full-precision f32 value rides through the MXU
    # (bf16 single-pass would round it); DEFAULT for 0/1 masks & one-hot
    # targets where a single bf16 pass is already bit-exact.
    def dg_hi(a, b):
        return lax.dot_general(a, b, (((1,), (1,)), ((), ())),
                               precision=lax.Precision.HIGHEST,
                               preferred_element_type=f32)

    def dg_lo(a, b):
        return lax.dot_general(a, b, (((1,), (1,)), ((), ())),
                               precision=lax.Precision.DEFAULT,
                               preferred_element_type=f32)

    # Hoisted iotas (broadcast_in_dim is not CSE'd inside the loop).
    row_idx = lax.broadcasted_iota(jnp.int32, (8, 128), 0)
    col_idx = lax.broadcasted_iota(jnp.int32, (8, 128), 1)

    def one_image(i):
        p = pred_ref[i].astype(f32)    # (N, Cp) sampled predictions
        t = tgt_ref[i].astype(f32)     # (N, Ct) sampled one-hot targets
        m = msk_ref[i].astype(f32)     # (N, 1)  1.0 valid row, 0.0 padding
        ones = jnp.ones((N, 1), f32)

        # ---- pairwise prediction distance ---------------------------------
        if Cp == 1:
            p_col = jnp.broadcast_to(p, (N, N))   # p[i] across lanes (VPU, exact)
            p_row = dg_hi(ones, p)                # p[j] across sublanes (exact)
            pi_pred = jnp.minimum(jnp.abs(p_col - p_row), 5.0)
        else:
            inv_nrm = lax.rsqrt(jnp.sum(p * p, axis=1, keepdims=True) + 1e-12)
            pn = p * inv_nrm
            pi_pred = 1.0 - dg_hi(pn, pn)         # 1 - cosine similarity

        # ---- pairwise target (no_grad / constant in torch) ----------------
        # Targets are one-hot, so row norms are 1 and cosine == dot product.
        pi_target = (dg_lo(t, t) < 0.5).astype(f32)
        neg_target = 1.0 - pi_target

        # ---- pair loss -----------------------------------------------------
        if loss_type == 'l1':
            theta = 0.1
            lf = 1.0 / (2.0 * theta)
            lb = lf * theta * theta

            def asl1(y):  # adjust_smooth_l1_loss
                lt = (y < theta).astype(f32)
                return lt * y * y * lf + (1.0 - lt) * (y - theta + lb)

            loss = (asl1(jnp.maximum(margin - pi_pred, 0.0)) * pi_target * pos_wght
                    + asl1(pi_pred) * neg_target)
        else:  # 'exp'  (pi_exp_loss)
            pi_sims = 2.0 * (margin - jax.nn.sigmoid(pi_pred))
            eps = 1e-6  # guard log(0): torch produces NaN on the diagonal here
            loss = -(pi_target * jnp.log(jnp.maximum(1.0 - pi_sims, eps)) * pos_wght
                     + neg_target * jnp.log(jnp.maximum(pi_sims, eps)))

        if use_wght:
            w = wgt_ref[i].astype(f32)
            w_col = jnp.broadcast_to(w, (N, N))
            w_row = dg_hi(ones, w)
            loss = loss * (w_col + w_row)         # w[i] + w[j]

        # ---- masking + reductions ------------------------------------------
        pair_mask = dg_lo(m, m)                   # 1.0 for valid x valid pairs
        loss_m = loss * pair_mask
        gt = loss_m > sigma
        loss_scalar = (jnp.sum(jnp.where(gt, loss_m, 0.0))
                       / (jnp.sum(gt.astype(f32)) + 1.0))

        n_valid = jnp.sum(m)
        denom = jnp.maximum(n_valid * n_valid, 1.0)   # == N_real**2 (>=1 real imgs)
        pi_pred_m = pi_pred * pair_mask
        s_all = jnp.sum(pi_pred_m)
        s_pos = jnp.sum(pi_pred_m * pi_target)
        eval1 = s_pos / denom
        eval0 = (s_all - s_pos) / denom
        return loss_scalar, eval0, eval1

    def body(i, acc):
        loss_scalar, eval0, eval1 = one_image(i)
        sel = col_idx == i
        upd = jnp.where(sel & (row_idx == 0), loss_scalar,
              jnp.where(sel & (row_idx == 1), eval0,
              jnp.where(sel & (row_idx == 2), eval1, 0.0)))
        return acc + upd

    acc = lax.fori_loop(0, b_tile, body, jnp.zeros((8, 128), f32), unroll=True)
    out_ref[0] = acc.astype(out_ref.dtype)


def pi_loss_pallas(smpl_pred, smpl_tgt, smpl_msk, smpl_wgt, *,
                   margin, pos_wght, sigma, loss_type, use_wght):
    nb, N, Cp = smpl_pred.shape
    Ct = smpl_tgt.shape[-1]

    # Batch tile: amortize per-grid-step overhead (~0.35us) over several images,
    # while keeping >= 2 grid steps so both v7x TensorCores get work.
    b_tile = int(min(8, max(1, -(-nb // 2))))
    grid_b = -(-nb // b_tile)
    nb_pad = grid_b * b_tile
    if nb_pad != nb:
        pad = nb_pad - nb
        smpl_pred = jnp.concatenate(
            [smpl_pred, jnp.ones((pad, N, Cp), smpl_pred.dtype)], axis=0)
        pad_t = jnp.zeros((pad, N, Ct), smpl_tgt.dtype).at[:, :, 0].set(1.0)
        smpl_tgt = jnp.concatenate([smpl_tgt, pad_t], axis=0)
        smpl_msk = jnp.concatenate(
            [smpl_msk, jnp.zeros((pad, N, 1), smpl_msk.dtype)], axis=0)
        smpl_wgt = jnp.concatenate(
            [smpl_wgt, jnp.zeros((pad, N, 1), smpl_wgt.dtype)], axis=0)

    kernel = functools.partial(
        _pi_loss_kernel, b_tile=b_tile, margin=float(margin),
        pos_wght=float(pos_wght), sigma=float(sigma),
        loss_type=loss_type, use_wght=bool(use_wght))

    in_specs = [pl.BlockSpec((b_tile, N, Cp), lambda g: (g, 0, 0)),
                pl.BlockSpec((b_tile, N, Ct), lambda g: (g, 0, 0)),
                pl.BlockSpec((b_tile, N, 1), lambda g: (g, 0, 0))]
    args = [smpl_pred, smpl_tgt, smpl_msk]
    if use_wght:
        in_specs.append(pl.BlockSpec((b_tile, N, 1), lambda g: (g, 0, 0)))
        args.append(smpl_wgt)

    out = pl.pallas_call(
        kernel,
        out_shape=jax.ShapeDtypeStruct((grid_b, 8, 128), jnp.float32),
        grid=(grid_b,),
        in_specs=in_specs,
        out_specs=pl.BlockSpec((1, 8, 128), lambda g: (g, 0, 0)),
        compiler_params=pltpu.CompilerParams(dimension_semantics=("parallel",)),
    )(*args)

    loss_b = out[:, 0, :b_tile].reshape(-1)[:nb]
    e0_b = out[:, 1, :b_tile].reshape(-1)[:nb]
    e1_b = out[:, 2, :b_tile].reshape(-1)[:nb]
    return loss_b, e0_b, e1_b


# ---------------------------------------------------------------------------
# Module wrapper (glue: sampling + layout; loss math in the Pallas kernel)
# ---------------------------------------------------------------------------
class PermuInvLossPallas:
    def __init__(self, class_weights=None, margin=1.0, pi_pairs=4096,
                 avg_num_obj=8, smpl_wght_en=0.0, pos_wght=3.0,
                 loss_type='l1', FG_stCH=1, max_samples=N_MAX, seed=0):
        self.class_weights = class_weights
        self.margin = margin
        self.pi_pairs = pi_pairs
        self.avg_num_obj = avg_num_obj
        self.smpl_wght_en = smpl_wght_en
        self.pos_wght = pos_wght
        self.loss_type = loss_type
        self.fg_stCH = FG_stCH
        self.max_samples = max_samples
        self.seed = seed

    # TODO(synk): data-dependent sampling (randperm / nonzero / ragged gather)
    # has no clean static-shape Pallas equivalent; it stays host-side (it is
    # under torch.no_grad in the original and is pure data preparation).
    def sampling_over_objects(self, targets_onehot, target_classes, BG, rng):
        cnts = targets_onehot.sum(axis=0)
        num_obj = int((cnts > 0).sum()) if BG else int((cnts[self.fg_stCH:] > 0).sum())
        if num_obj == 0:
            return None, None
        avg = self.pi_pairs // num_obj
        eff_idx, smpl_wght = [], []
        for k in range(cnts.shape[0]):
            if cnts[k] == 0 or ((not BG) and k < self.fg_stCH):
                continue
            idx = np.nonzero(targets_onehot[:, k])[0]
            perm = rng.permutation(idx.shape[0])
            cur_sel = idx[perm][:avg]
            obj_wght = (self.pi_pairs / (cur_sel.shape[0] + 1.0)) ** (1.0 / 3.0)
            if target_classes is not None and self.class_weights is not None:
                obj_wght += float(self.class_weights[int(target_classes[k])])
            eff_idx.append(cur_sel)
            smpl_wght.append(np.ones((cur_sel.shape[0], 1), np.float32) * obj_wght)
        if len(eff_idx) == 0:
            return None, None
        return np.concatenate(eff_idx, axis=0), np.concatenate(smpl_wght, axis=0)

    def _prepare_samples(self, preds, targets, target_ids=None, weights=None, BG=False):
        preds_np = np.asarray(preds, dtype=np.float32)
        targets_np = np.asarray(targets, dtype=np.float32)
        bs, ch, ht, wd = preds_np.shape
        preds_1D = preds_np.reshape(bs, ch, ht * wd).transpose(0, 2, 1)
        targets_1D = targets_np.reshape(bs, -1, ht * wd).transpose(0, 2, 1)
        ch_t = targets_1D.shape[-1]
        weights_1D = (np.asarray(weights, np.float32).reshape(bs, -1, 1)
                      if weights is not None else None)
        use_wght = (weights is not None) or (self.smpl_wght_en > 0.0)
        rng = np.random.default_rng(self.seed)
        sp_l, st_l, mk_l, wg_l = [], [], [], []
        for b in range(bs):
            tcls = None if target_ids is None else np.asarray(target_ids)[b]
            smpl_idx, smpl_w = self.sampling_over_objects(targets_1D[b], tcls, BG, rng)
            if smpl_idx is None:
                continue
            n = smpl_idx.shape[0]
            assert n <= self.max_samples
            sp = np.ones((self.max_samples, ch), np.float32)
            sp[:n] = preds_1D[b][smpl_idx]
            st = np.zeros((self.max_samples, ch_t), np.float32)
            st[:, 0] = 1.0                      # pad rows: valid one-hot (masked anyway)
            st[:n] = targets_1D[b][smpl_idx]
            mk = np.zeros((self.max_samples, 1), np.float32)
            mk[:n] = 1.0
            wg = np.zeros((self.max_samples, 1), np.float32)
            if weights is not None:
                wg[:n] = weights_1D[b][smpl_idx, :]
            elif self.smpl_wght_en > 0.0:
                wg[:n] = smpl_w
            sp_l.append(sp); st_l.append(st); mk_l.append(mk); wg_l.append(wg)
        if len(sp_l) == 0:
            return None
        return (np.stack(sp_l), np.stack(st_l), np.stack(mk_l), np.stack(wg_l), use_wght)

    def forward(self, preds, targets, target_ids=None, weights=None, BG=False, sigma=0.01):
        prep = self._prepare_samples(preds, targets, target_ids, weights, BG)
        if prep is None:
            return None
        sp, st, mk, wg, use_wght = prep
        loss_b, e0_b, e1_b = pi_loss_pallas(
            jnp.asarray(sp), jnp.asarray(st), jnp.asarray(mk), jnp.asarray(wg),
            margin=self.margin, pos_wght=self.pos_wght, sigma=sigma,
            loss_type=self.loss_type, use_wght=use_wght)
        return {'loss': jnp.mean(loss_b),
                'eval_pi0': jnp.mean(e0_b),
                'eval_pi1': jnp.mean(e1_b)}


# ---------------------------------------------------------------------------
# Pure-numpy reference (mirrors the PyTorch math on the same samples)
# ---------------------------------------------------------------------------
def numpy_reference(sp, st, mk, wg, use_wght, margin, pos_wght, sigma, loss_type='l1'):
    losses, e0s, e1s = [], [], []
    for b in range(sp.shape[0]):
        n = int(mk[b].sum())
        p, t = sp[b, :n], st[b, :n]
        if p.shape[1] == 1:
            pi_pred = np.minimum(np.abs(p - p.T), 5.0)
        else:
            nrm = np.sqrt((p ** 2).sum(1))
            pi_pred = 1.0 - (p @ p.T) / np.outer(nrm, nrm)
        tnrm = np.sqrt((t ** 2).sum(1))
        pi_tgt = (((t @ t.T) / np.outer(tnrm, tnrm)) < 0.5).astype(np.float32)
        if loss_type == 'l1':
            theta = 0.1
            lf, lb = 1.0 / (2 * theta), (1.0 / (2 * theta)) * theta ** 2
            asl1 = lambda y: np.where(y < theta, y * y * lf, y - theta + lb)
            loss = (asl1(np.maximum(margin - pi_pred, 0.0)) * pi_tgt * pos_wght
                    + asl1(pi_pred) * (1.0 - pi_tgt))
        else:
            sims = 2.0 * (margin - 1.0 / (1.0 + np.exp(-pi_pred)))
            eps = 1e-6
            loss = -(pi_tgt * np.log(np.maximum(1.0 - sims, eps)) * pos_wght
                     + (1.0 - pi_tgt) * np.log(np.maximum(sims, eps)))
        if use_wght:
            w = wg[b, :n]
            loss = loss * (w + w.T)
        flag = (loss > sigma).astype(np.float32)
        losses.append((loss * flag).sum() / (flag.sum() + 1.0))
        e0s.append((pi_pred * (pi_tgt == 0)).mean())
        e1s.append((pi_pred * (pi_tgt == 1)).mean())
    return {'loss': np.mean(losses), 'eval_pi0': np.mean(e0s), 'eval_pi1': np.mean(e1s)}


if __name__ == "__main__":
    key = jax.random.PRNGKey(0)
    bs, ht, wd = 2, 16, 16
    ch_pred = 1      # preds [bs, 1, ht, wd], as in the module docstring
    ch_tgt = 4       # targets: channel 0 = BG, channels 1..3 = FG instances

    k1, k2 = jax.random.split(key)
    labels = jax.random.randint(k1, (bs, ht, wd), 0, ch_tgt)
    targets = jax.nn.one_hot(labels, ch_tgt, axis=1).astype(jnp.float32)   # NCHW
    preds = jax.nn.relu(jax.random.normal(k2, (bs, ch_pred, ht, wd), jnp.float32) + 1.0)

    module = PermuInvLossPallas(margin=1.0, pi_pairs=96, pos_wght=3.0,
                                loss_type='l1', FG_stCH=1, max_samples=N_MAX, seed=0)

    out = module.forward(preds, targets, target_ids=None, weights=None, BG=False, sigma=0.01)
    jax.block_until_ready(out['loss'])

    # Cross-check against a plain numpy implementation on the same samples.
    sp, st, mk, wg, use_wght = module._prepare_samples(preds, targets, None, None, False)
    ref = numpy_reference(sp, st, mk, wg, use_wght, margin=1.0, pos_wght=3.0,
                          sigma=0.01, loss_type='l1')
    for name in ('loss', 'eval_pi0', 'eval_pi1'):
        got, want = float(out[name]), float(ref[name])
        assert np.isfinite(got), f"{name} not finite"
        assert np.allclose(got, want, rtol=5e-3, atol=1e-3), f"{name}: {got} vs {want}"

    print("KERNEL_OK")
</pallas_src>

<mosaic_0001>
module attributes {stable_mosaic.version = 11 : i64} {
  func.func @_pi_loss_kernel(%arg0: i32, %arg1: memref<1x128x1xf32, #tpu.memory_space<vmem>>, %arg2: memref<1x128x4xf32, #tpu.memory_space<vmem>>, %arg3: memref<1x128x1xf32, #tpu.memory_space<vmem>>, %arg4: memref<1x8x128xf32, #tpu.memory_space<vmem>>) attributes {dimension_semantics = [#tpu.dimension_semantics<parallel>], iteration_bounds = array<i64: 2>, scalar_prefetch = 0 : i64, scratch_operands = 0 : i64, tpu.core_type = #tpu.core_type<tc>, window_params = [{transform_indices = @transform_0, window_bounds = array<i64: 1, 128, 1>}, {transform_indices = @transform_1, window_bounds = array<i64: 1, 128, 4>}, {transform_indices = @transform_2, window_bounds = array<i64: 1, 128, 1>}, {transform_indices = @transform_3, window_bounds = array<i64: 1, 8, 128>}]} {
    %0 = tpu.iota {dimensions = array<i32: 0>} : vector<8x128xi32>
    %1 = tpu.iota {dimensions = array<i32: 1>} : vector<8x128xi32>
    %cst = arith.constant 0.000000e+00 : f32
    %2 = vector.broadcast %cst : f32 to vector<8x128xf32>
    %c0_i32 = arith.constant 0 : i32
    %3 = arith.index_cast %c0_i32 : i32 to index
    %c0 = arith.constant 0 : index
    %c0_0 = arith.constant 0 : index
    %4 = vector.load %arg1[%3, %c0, %c0_0] : memref<1x128x1xf32, #tpu.memory_space<vmem>>, vector<1x128x1xf32>
    %5 = vector.shape_cast %4 : vector<1x128x1xf32> to vector<128x1xf32>
    %6 = arith.index_cast %c0_i32 : i32 to index
    %c0_1 = arith.constant 0 : index
    %c0_2 = arith.constant 0 : index
    %7 = vector.load %arg2[%6, %c0_1, %c0_2] : memref<1x128x4xf32, #tpu.memory_space<vmem>>, vector<1x128x4xf32>
    %8 = vector.shape_cast %7 : vector<1x128x4xf32> to vector<128x4xf32>
    %9 = arith.index_cast %c0_i32 : i32 to index
    %c0_3 = arith.constant 0 : index
    %c0_4 = arith.constant 0 : index
    %10 = vector.load %arg3[%9, %c0_3, %c0_4] : memref<1x128x1xf32, #tpu.memory_space<vmem>>, vector<1x128x1xf32>
    %11 = vector.shape_cast %10 : vector<1x128x1xf32> to vector<128x1xf32>
    %cst_5 = arith.constant 1.000000e+00 : f32
    %12 = vector.broadcast %cst_5 : f32 to vector<128x1xf32>
    %13 = vector.shape_cast %5 : vector<128x1xf32> to vector<128x1xf32>
    %14 = vector.broadcast %13 : vector<128x1xf32> to vector<128x128xf32>
    %cst_6 = arith.constant dense<0.000000e+00> : vector<128x128xf32>
    %15 = tpu.matmul %12, %5, %cst_6 {dimension_numbers = #tpu.dot_dimension_numbers<[1], [1], [0], [0], [0, 0, 1, 0], [], []>, precision = #tpu.contract_precision<fp32>} : vector<128x1xf32>, vector<128x1xf32>, vector<128x128xf32> -> vector<128x128xf32>
    %16 = arith.subf %14, %15 : vector<128x128xf32>
    %17 = math.absf %16 : vector<128x128xf32>
    %cst_7 = arith.constant 5.000000e+00 : f32
    %18 = vector.broadcast %cst_7 : f32 to vector<128x128xf32>
    %19 = arith.minimumf %17, %18 : vector<128x128xf32>
    %cst_8 = arith.constant dense<0.000000e+00> : vector<128x128xf32>
    %20 = tpu.matmul %8, %8, %cst_8 {dimension_numbers = #tpu.dot_dimension_numbers<[1], [1], [0], [0], [0, 0, 1, 0], [], []>} : vector<128x4xf32>, vector<128x4xf32>, vector<128x128xf32> -> vector<128x128xf32>
    %cst_9 = arith.constant 5.000000e-01 : f32
    %21 = vector.broadcast %cst_9 : f32 to vector<128x128xf32>
    %22 = arith.cmpf olt, %20, %21 : vector<128x128xf32>
    %23 = arith.extui %22 : vector<128x128xi1> to vector<128x128xi32>
    %24 = arith.sitofp %23 : vector<128x128xi32> to vector<128x128xf32>
    %cst_10 = arith.constant 1.000000e+00 : f32
    %25 = vector.broadcast %cst_10 : f32 to vector<128x128xf32>
    %26 = arith.subf %25, %24 : vector<128x128xf32>
    %cst_11 = arith.constant 1.000000e+00 : f32
    %27 = vector.broadcast %cst_11 : f32 to vector<128x128xf32>
    %28 = arith.subf %27, %19 : vector<128x128xf32>
    %cst_12 = arith.constant 0.000000e+00 : f32
    %29 = vector.broadcast %cst_12 : f32 to vector<128x128xf32>
    %30 = arith.maximumf %28, %29 : vector<128x128xf32>
    %cst_13 = arith.constant 1.000000e-01 : f32
    %31 = vector.broadcast %cst_13 : f32 to vector<128x128xf32>
    %32 = arith.cmpf olt, %30, %31 : vector<128x128xf32>
    %33 = arith.extui %32 : vector<128x128xi1> to vector<128x128xi32>
    %34 = arith.sitofp %33 : vector<128x128xi32> to vector<128x128xf32>
    %35 = arith.mulf %34, %30 : vector<128x128xf32>
    %36 = arith.mulf %35, %30 : vector<128x128xf32>
    %cst_14 = arith.constant 5.000000e+00 : f32
    %37 = vector.broadcast %cst_14 : f32 to vector<128x128xf32>
    %38 = arith.mulf %36, %37 : vector<128x128xf32>
    %cst_15 = arith.constant 1.000000e+00 : f32
    %39 = vector.broadcast %cst_15 : f32 to vector<128x128xf32>
    %40 = arith.subf %39, %34 : vector<128x128xf32>
    %cst_16 = arith.constant 1.000000e-01 : f32
    %41 = vector.broadcast %cst_16 : f32 to vector<128x128xf32>
    %42 = arith.subf %30, %41 : vector<128x128xf32>
    %cst_17 = arith.constant 5.000000e-02 : f32
    %43 = vector.broadcast %cst_17 : f32 to vector<128x128xf32>
    %44 = arith.addf %42, %43 : vector<128x128xf32>
    %45 = arith.mulf %40, %44 : vector<128x128xf32>
    %46 = arith.addf %38, %45 : vector<128x128xf32>
    %47 = arith.mulf %46, %24 : vector<128x128xf32>
    %cst_18 = arith.constant 3.000000e+00 : f32
    %48 = vector.broadcast %cst_18 : f32 to vector<128x128xf32>
    %49 = arith.mulf %47, %48 : vector<128x128xf32>
    %cst_19 = arith.constant 1.000000e-01 : f32
    %50 = vector.broadcast %cst_19 : f32 to vector<128x128xf32>
    %51 = arith.cmpf olt, %19, %50 : vector<128x128xf32>
    %52 = arith.extui %51 : vector<128x128xi1> to vector<128x128xi32>
    %53 = arith.sitofp %52 : vector<128x128xi32> to vector<128x128xf32>
    %54 = arith.mulf %53, %19 : vector<128x128xf32>
    %55 = arith.mulf %54, %19 : vector<128x128xf32>
    %cst_20 = arith.constant 5.000000e+00 : f32
    %56 = vector.broadcast %cst_20 : f32 to vector<128x128xf32>
    %57 = arith.mulf %55, %56 : vector<128x128xf32>
    %cst_21 = arith.constant 1.000000e+00 : f32
    %58 = vector.broadcast %cst_21 : f32 to vector<128x128xf32>
    %59 = arith.subf %58, %53 : vector<128x128xf32>
    %cst_22 = arith.constant 1.000000e-01 : f32
    %60 = vector.broadcast %cst_22 : f32 to vector<128x128xf32>
    %61 = arith.subf %19, %60 : vector<128x128xf32>
    %cst_23 = arith.constant 5.000000e-02 : f32
    %62 = vector.broadcast %cst_23 : f32 to vector<128x128xf32>
    %63 = arith.addf %61, %62 : vector<128x128xf32>
    %64 = arith.mulf %59, %63 : vector<128x128xf32>
    %65 = arith.addf %57, %64 : vector<128x128xf32>
    %66 = arith.mulf %65, %26 : vector<128x128xf32>
    %67 = arith.addf %49, %66 : vector<128x128xf32>
    %cst_24 = arith.constant dense<0.000000e+00> : vector<128x128xf32>
    %68 = tpu.matmul %11, %11, %cst_24 {dimension_numbers = #tpu.dot_dimension_numbers<[1], [1], [0], [0], [0, 0, 1, 0], [], []>} : vector<128x1xf32>, vector<128x1xf32>, vector<128x128xf32> -> vector<128x128xf32>
    %69 = arith.mulf %67, %68 : vector<128x128xf32>
    %cst_25 = arith.constant 0.00999999977 : f32
    %70 = vector.broadcast %cst_25 : f32 to vector<128x128xf32>
    %71 = arith.cmpf ogt, %69, %70 : vector<128x128xf32>
    %cst_26 = arith.constant 0.000000e+00 : f32
    %72 = vector.broadcast %cst_26 : f32 to vector<128x128xf32>
    %73 = arith.select %71, %69, %72 : vector<128x128xi1>, vector<128x128xf32>
    %74 = vector.shape_cast %73 : vector<128x128xf32> to vector<1x128x128xf32>
    %cst_27 = arith.constant dense<0.000000e+00> : vector<1xf32>
    %75 = vector.multi_reduction <add>, %74, %cst_27 [1, 2] : vector<1x128x128xf32> to vector<1xf32>
    %76 = vector.shape_cast %75 : vector<1xf32> to vector<1x1x1xf32>
    %77 = vector.extract %76[0, 0, 0] : f32 from vector<1x1x1xf32>
    %78 = arith.extui %71 : vector<128x128xi1> to vector<128x128xi32>
    %79 = arith.sitofp %78 : vector<128x128xi32> to vector<128x128xf32>
    %80 = vector.shape_cast %79 : vector<128x128xf32> to vector<1x128x128xf32>
    %cst_28 = arith.constant dense<0.000000e+00> : vector<1xf32>
    %81 = vector.multi_reduction <add>, %80, %cst_28 [1, 2] : vector<1x128x128xf32> to vector<1xf32>
    %82 = vector.shape_cast %81 : vector<1xf32> to vector<1x1x1xf32>
    %83 = vector.extract %82[0, 0, 0] : f32 from vector<1x1x1xf32>
    %cst_29 = arith.constant 1.000000e+00 : f32
    %84 = arith.addf %83, %cst_29 : f32
    %85 = arith.divf %77, %84 : f32
    %86 = vector.shape_cast %11 : vector<128x1xf32> to vector<1x128x1xf32>
    %cst_30 = arith.constant dense<0.000000e+00> : vector<1xf32>
    %87 = vector.multi_reduction <add>, %86, %cst_30 [1, 2] : vector<1x128x1xf32> to vector<1xf32>
    %88 = vector.shape_cast %87 : vector<1xf32> to vector<1x1x1xf32>
    %89 = vector.extract %88[0, 0, 0] : f32 from vector<1x1x1xf32>
    %90 = arith.mulf %89, %89 : f32
    %cst_31 = arith.constant 1.000000e+00 : f32
    %91 = arith.maximumf %90, %cst_31 : f32
    %92 = arith.mulf %19, %68 : vector<128x128xf32>
    %93 = vector.shape_cast %92 : vector<128x128xf32> to vector<1x128x128xf32>
    %cst_32 = arith.constant dense<0.000000e+00> : vector<1xf32>
    %94 = vector.multi_reduction <add>, %93, %cst_32 [1, 2] : vector<1x128x128xf32> to vector<1xf32>
    %95 = vector.shape_cast %94 : vector<1xf32> to vector<1x1x1xf32>
    %96 = vector.extract %95[0, 0, 0] : f32 from vector<1x1x1xf32>
    %97 = arith.mulf %92, %24 : vector<128x128xf32>
    %98 = vector.shape_cast %97 : vector<128x128xf32> to vector<1x128x128xf32>
    %cst_33 = arith.constant dense<0.000000e+00> : vector<1xf32>
    %99 = vector.multi_reduction <add>, %98, %cst_33 [1, 2] : vector<1x128x128xf32> to vector<1xf32>
    %100 = vector.shape_cast %99 : vector<1xf32> to vector<1x1x1xf32>
    %101 = vector.extract %100[0, 0, 0] : f32 from vector<1x1x1xf32>
    %102 = arith.divf %101, %91 : f32
    %103 = arith.subf %96, %101 : f32
    %104 = arith.divf %103, %91 : f32
    %105 = vector.broadcast %c0_i32 : i32 to vector<8x128xi32>
    %106 = arith.cmpi eq, %1, %105 : vector<8x128xi32>
    %c0_i32_34 = arith.constant 0 : i32
    %107 = vector.broadcast %c0_i32_34 : i32 to vector<8x128xi32>
    %108 = arith.cmpi eq, %0, %107 : vector<8x128xi32>
    %109 = arith.andi %106, %108 : vector<8x128xi1>
    %c1_i32 = arith.constant 1 : i32
    %110 = vector.broadcast %c1_i32 : i32 to vector<8x128xi32>
    %111 = arith.cmpi eq, %0, %110 : vector<8x128xi32>
    %112 = arith.andi %106, %111 : vector<8x128xi1>
    %c2_i32 = arith.constant 2 : i32
    %113 = vector.broadcast %c2_i32 : i32 to vector<8x128xi32>
    %114 = arith.cmpi eq, %0, %113 : vector<8x128xi32>
    %115 = arith.andi %106, %114 : vector<8x128xi1>
    %cst_35 = arith.constant 0.000000e+00 : f32
    %116 = vector.broadcast %102 : f32 to vector<8x128xf32>
    %117 = vector.broadcast %cst_35 : f32 to vector<8x128xf32>
    %118 = arith.select %115, %116, %117 : vector<8x128xi1>, vector<8x128xf32>
    %119 = vector.broadcast %104 : f32 to vector<8x128xf32>
    %120 = arith.select %112, %119, %118 : vector<8x128xi1>, vector<8x128xf32>
    %121 = vector.broadcast %85 : f32 to vector<8x128xf32>
    %122 = arith.select %109, %121, %120 : vector<8x128xi1>, vector<8x128xf32>
    %123 = arith.addf %2, %122 : vector<8x128xf32>
    %c1_i32_36 = arith.constant 1 : i32
    %c0_37 = arith.constant 0 : index
    %c0_38 = arith.constant 0 : index
    %c0_39 = arith.constant 0 : index
    %124 = vector.load %arg4[%c0_37, %c0_38, %c0_39] : memref<1x8x128xf32, #tpu.memory_space<vmem>>, vector<1x8x128xf32>
    %125 = vector.shape_cast %124 : vector<1x8x128xf32> to vector<8x128xf32>
    %126 = vector.shape_cast %123 : vector<8x128xf32> to vector<1x8x128xf32>
    tpu.vector_store %arg4[%c0_37, %c0_38, %c0_39], %126 {strides = array<i32>} : memref<1x8x128xf32, #tpu.memory_space<vmem>>, vector<1x8x128xf32>,
    return
  }
  func.func @transform_0(%arg0: i32) -> (i32, i32, i32) {
    %c0_i32 = arith.constant 0 : i32
    %c0_i32_0 = arith.constant 0 : i32
    %c0_i32_1 = arith.constant 0 : i32
    return %arg0, %c0_i32, %c0_i32_0 : i32, i32, i32
  }
  func.func @transform_1(%arg0: i32) -> (i32, i32, i32) {
    %c0_i32 = arith.constant 0 : i32
    %c0_i32_0 = arith.constant 0 : i32
    %c0_i32_1 = arith.constant 0 : i32
    return %arg0, %c0_i32, %c0_i32_0 : i32, i32, i32
  }
  func.func @transform_2(%arg0: i32) -> (i32, i32, i32) {
    %c0_i32 = arith.constant 0 : i32
    %c0_i32_0 = arith.constant 0 : i32
    %c0_i32_1 = arith.constant 0 : i32
    return %arg0, %c0_i32, %c0_i32_0 : i32, i32, i32
  }
  func.func @transform_3(%arg0: i32) -> (i32, i32, i32) {
    %c0_i32 = arith.constant 0 : i32
    %c0_i32_0 = arith.constant 0 : i32
    %c0_i32_1 = arith.constant 0 : i32
    return %arg0, %c0_i32, %c0_i32_0 : i32, i32, i32
  }
}

</mosaic_0001>

<llo_original>
// kernel: tpu_custom_call.1
$region0: #{tpu_custom_call.1}
  #allocation0 [shape = 'u32[]', space=smem, size = 0x4, offset = 0x4, fixed_abs, tag = 'smem constant byte address 0x4 - core index']
  #allocation1 [shape = 'u32[144,128]{1,0:T(1,128)}', space=vmem, size = 0x12000, scoped, tag = 'internal scratch']
  %s0 = inlined_call_operand.vmem [shape: f32[2,128,1], index: 0, kind: input, shape index: {}]
  %s1 = inlined_call_operand.vmem [shape: f32[2,128,4], index: 1, kind: input, shape index: {}]
  %s2 = inlined_call_operand.vmem [shape: f32[2,128,1], index: 2, kind: input, shape index: {}]
  %s3 = inlined_call_operand.hbm [shape: f32[2,8,128], index: 3, kind: output, shape index: {}]
  %s4 = sld [smem:[#allocation0]]
  $region45: #{tpu_custom_call.1} parent=0
    _
  %s6 = ssub.s32 1, %s4
  %s7 = scalar_select 0, %s6, %s4
  $region1: #{tpu_custom_call.1} parent=0
    #allocation2 [shape = 'u8[8192]{0}', space=vmem, size = 0x2000, scoped, tag = 'output window, operand 0']
    #allocation3 [shape = 's32[2]{0}', space=sflag, size = 0x8, scoped, tag = 'scoped memory for tpu_custom_call.1']
    %8 = vsyncpa [#allocation3], 0
    %s9 = scalar_lea.sflag [#allocation3], 1
    %10 = vsyncpa %s9, 0
    loop: start=0, step=1, limit=4
    $region2: #{tpu_custom_call.1} parent=1 // loop_pre_header
      _
    $region3: #{tpu_custom_call.1} parent=1 // loop_header
      %s12 = sphi 0, %s16
      %p13 = scmp.ge.s32.totalorder %s12, 4
      %s22 = sphi 0, %s24
      %s25 = sphi 0, %s22
      %s26 = sphi 0, %s25
      %s42 = sphi 0, %s26
      %s48 = sphi 0, %s50
      %s51 = sphi 0, %s48
      %s52 = sphi 0, %s51
      %s68 = sphi 0, %s52
      %s74 = sphi 0, %s76
      %s77 = sphi 0, %s74
      %s78 = sphi 0, %s77
      %s94 = sphi 0, %s78
      %s100 = sphi 0, %s102
      %s103 = sphi 0, %s100
      %s104 = sphi 0, %s103
      %s120 = sphi 0, %s104
    $region4: #{tpu_custom_call.1} parent=1 // loop_header_branch
      %15 = sbr.rel (%p13) target = $region8
    $region5: #{tpu_custom_call.1} parent=1 // loop_body
      %s17 = ssub.s32 %s12, 1
      %s18 = ssub.s32 %s12, 2
      %s19 = sadd.s32 %s12, 1
      %s20 = ssub.s32 %s12, %s19
      %p21 = scmp.eq.s32.totalorder %s20, 0
      %s23 = sadd.s32 %s22, 1
      %s24 = scalar_select %p21, %s22, %s23
      %p27 = pneg %p21
      %p28 = scmp.eq.s32.totalorder %s12, 1
      %p29 = por %p27, %p28
      %p30 = scmp.ne.s32.totalorder %s22, %s25
      %p31 = scmp.eq.s32.totalorder %s12, 0
      %p32 = por %p30, %p31
      %p33 = scmp.ne.s32.totalorder %s22, %s25
      %p34 = scmp.eq.s32.totalorder %s17, 1
      %p35 = por %p33, %p34
      %p36 = scmp.ne.s32.totalorder %s25, %s26
      %p37 = scmp.eq.s32.totalorder %s17, 0
      %p38 = por %p36, %p37
      %p39 = scmp.ne.s32.totalorder %s25, %s26
      %p40 = scmp.eq.s32.totalorder %s18, 1
      %p41 = por %p39, %p40
      %p43 = scmp.ne.s32.totalorder %s26, %s42
      %p44 = scmp.eq.s32.totalorder %s18, 0
      %p45 = por %p43, %p44
      %s46 = ssub.s32 %s12, %s19
      %p47 = scmp.eq.s32.totalorder %s46, 0
      %s49 = sadd.s32 %s48, 1
      %s50 = scalar_select %p47, %s48, %s49
      %p53 = pneg %p47
      %p54 = scmp.eq.s32.totalorder %s12, 1
      %p55 = por %p53, %p54
      %p56 = scmp.ne.s32.totalorder %s48, %s51
      %p57 = scmp.eq.s32.totalorder %s12, 0
      %p58 = por %p56, %p57
      %p59 = scmp.ne.s32.totalorder %s48, %s51
      %p60 = scmp.eq.s32.totalorder %s17, 1
      %p61 = por %p59, %p60
      %p62 = scmp.ne.s32.totalorder %s51, %s52
      %p63 = scmp.eq.s32.totalorder %s17, 0
      %p64 = por %p62, %p63
      %p65 = scmp.ne.s32.totalorder %s51, %s52
      %p66 = scmp.eq.s32.totalorder %s18, 1
      %p67 = por %p65, %p66
      %p69 = scmp.ne.s32.totalorder %s52, %s68
      %p70 = scmp.eq.s32.totalorder %s18, 0
      %p71 = por %p69, %p70
      %s72 = ssub.s32 %s12, %s19
      %p73 = scmp.eq.s32.totalorder %s72, 0
      %s75 = sadd.s32 %s74, 1
      %s76 = scalar_select %p73, %s74, %s75
      %p79 = pneg %p73
      %p80 = scmp.eq.s32.totalorder %s12, 1
      %p81 = por %p79, %p80
      %p82 = scmp.ne.s32.totalorder %s74, %s77
      %p83 = scmp.eq.s32.totalorder %s12, 0
      %p84 = por %p82, %p83
      %p85 = scmp.ne.s32.totalorder %s74, %s77
      %p86 = scmp.eq.s32.totalorder %s17, 1
      %p87 = por %p85, %p86
      %p88 = scmp.ne.s32.totalorder %s77, %s78
      %p89 = scmp.eq.s32.totalorder %s17, 0
      %p90 = por %p88, %p89
      %p91 = scmp.ne.s32.totalorder %s77, %s78
      %p92 = scmp.eq.s32.totalorder %s18, 1
      %p93 = por %p91, %p92
      %p95 = scmp.ne.s32.totalorder %s78, %s94
      %p96 = scmp.eq.s32.totalorder %s18, 0
      %p97 = por %p95, %p96
      %s98 = ssub.s32 %s12, %s19
      %p99 = scmp.eq.s32.totalorder %s98, 0
      %s101 = sadd.s32 %s100, 1
      %s102 = scalar_select %p99, %s100, %s101
      %p105 = pneg %p99
      %p106 = scmp.eq.s32.totalorder %s12, 1
      %p107 = por %p105, %p106
      %p108 = scmp.ne.s32.totalorder %s100, %s103
      %p109 = scmp.eq.s32.totalorder %s12, 0
      %p110 = por %p108, %p109
      %p111 = scmp.ne.s32.totalorder %s100, %s103
      %p112 = scmp.eq.s32.totalorder %s17, 1
      %p113 = por %p111, %p112
      %p114 = scmp.ne.s32.totalorder %s103, %s104
      %p115 = scmp.eq.s32.totalorder %s17, 0
      %p116 = por %p114, %p115
      %p117 = scmp.ne.s32.totalorder %s103, %s104
      %p118 = scmp.eq.s32.totalorder %s18, 1
      %p119 = por %p117, %p118
      %p121 = scmp.ne.s32.totalorder %s104, %s120
      %p122 = scmp.eq.s32.totalorder %s18, 0
      %p123 = por %p121, %p122
      %p124 = scmp.le.s32.totalorder 1, %s12
      %p125 = scmp.lt.s32.totalorder %s12, 3
      %p126 = pnand %p124, %p125
      %p127 = pneg %p126
      // Predicated region
      $region9: #{tpu_custom_call.1} parent=5 // pred_check
        _
      $region10: #{tpu_custom_call.1} parent=5 // pred_check_branch
        %129 = sbr.rel (%p126) target = $region12
      $region11: #{tpu_custom_call.1} parent=5 // pred_region
        %s130 = ssub.s32 %s12, 1
      $region12: #{tpu_custom_call.1} parent=5 // pred_fallthru
        _
      %p131 = scmp.lt.s32.totalorder %s12, 2
      // Predicated region
      $region13: #{tpu_custom_call.1} parent=5 // pred_check
        %p132 = pneg %p131
      $region14: #{tpu_custom_call.1} parent=5 // pred_check_branch
        %134 = sbr.rel (%p132) target = $region16
      $region15: #{tpu_custom_call.1} parent=5 // pred_region
        // Predicated region
        $region17: #{tpu_custom_call.1} parent=15 // pred_check
          %p135 = pneg %p32
        $region18: #{tpu_custom_call.1} parent=15 // pred_check_branch
          %137 = sbr.rel (%p135) target = $region20
        $region19: #{tpu_custom_call.1} parent=15 // pred_region
          %p138 = scmp.lt.s32.totalorder %s12, 1
          %s139 = scalar_select %p138, %s12, 1
          %s140 = smul.addr %s139, 16
          %s141 = smul.addr %s140, 8
          %s142 = scalar_lea.vmem %s0, %s141
        $region20: #{tpu_custom_call.1} parent=15 // pred_fallthru
          _
        // Predicated region
        $region21: #{tpu_custom_call.1} parent=15 // pred_check
          %p143 = pneg %p58
        $region22: #{tpu_custom_call.1} parent=15 // pred_check_branch
          %145 = sbr.rel (%p143) target = $region24
        $region23: #{tpu_custom_call.1} parent=15 // pred_region
          %p146 = scmp.lt.s32.totalorder %s12, 1
          %s147 = scalar_select %p146, %s12, 1
          %s148 = smul.addr %s147, 16
          %s149 = smul.addr %s148, 8
          %s150 = scalar_lea.vmem %s1, %s149
        $region24: #{tpu_custom_call.1} parent=15 // pred_fallthru
          _
        // Predicated region
        $region25: #{tpu_custom_call.1} parent=15 // pred_check
          %p151 = pneg %p84
        $region26: #{tpu_custom_call.1} parent=15 // pred_check_branch
          %153 = sbr.rel (%p151) target = $region28
        $region27: #{tpu_custom_call.1} parent=15 // pred_region
          %p154 = scmp.lt.s32.totalorder %s12, 1
          %s155 = scalar_select %p154, %s12, 1
          %s156 = smul.addr %s155, 16
          %s157 = smul.addr %s156, 8
          %s158 = scalar_lea.vmem %s2, %s157
        $region28: #{tpu_custom_call.1} parent=15 // pred_fallthru
          _
      $region16: #{tpu_custom_call.1} parent=5 // pred_fallthru
        _
      %p159 = scmp.le.s32.totalorder 1, %s12
      %p160 = scmp.lt.s32.totalorder %s12, 3
      %p161 = pnand %p159, %p160
      %p162 = pneg %p161
      // Predicated region
      $region29: #{tpu_custom_call.1} parent=5 // pred_check
        _
      $region30: #{tpu_custom_call.1} parent=5 // pred_check_branch
        %164 = sbr.rel (%p161) target = $region32
      $region31: #{tpu_custom_call.1} parent=5 // pred_region
        %s165 = ssub.s32 %s12, 1
        %p166 = scmp.lt.s32.totalorder %s17, 1
        %s167 = scalar_select %p166, %s17, 1
        %s168 = smul.addr %s167, 16
        %s169 = smul.addr %s168, 8
        %s170 = scalar_lea.vmem %s0, %s169
        %p171 = pneg %p38
        %p172 = pneg %p35
        %p173 = scmp.lt.s32.totalorder %s17, 1
        %s174 = scalar_select %p173, %s17, 1
        %s175 = smul.addr %s174, 16
        %s176 = smul.addr %s175, 8
        %s177 = scalar_lea.vmem %s1, %s176
        %p178 = pneg %p64
        %p179 = pneg %p61
        %p180 = scmp.lt.s32.totalorder %s17, 1
        %s181 = scalar_select %p180, %s17, 1
        %s182 = smul.addr %s181, 16
        %s183 = smul.addr %s182, 8
        %s184 = scalar_lea.vmem %s2, %s183
        %p185 = pneg %p90
        %p186 = pneg %p87
        %p187 = pneg %p116
        %p188 = pneg %p113
        %s189 = sand.u32 %s103, 1
        %s190 = scalar_lea.sflag [#allocation3], %s189
        %s191 = sand.u32 %s103, 1
        %s192 = smul.addr %s191, 8
        %s193 = scalar_lea.vmem [#allocation2], %s192
        %p194 = scmp.lt.s32.totalorder %s17, 1
        %s195 = scalar_select %p194, %s17, 1
        %s196 = smul.addr %s195, 16
        %s197 = smul.addr %s196, 8
        %s198 = scalar_lea.vmem %s0, %s197
        %p199 = scmp.lt.s32.totalorder %s17, 1
        %s200 = scalar_select %p199, %s17, 1
        %s201 = smul.addr %s200, 16
        %s202 = smul.addr %s201, 8
        %s203 = scalar_lea.vmem %s1, %s202
        %p204 = scmp.lt.s32.totalorder %s17, 1
        %s205 = scalar_select %p204, %s17, 1
        %s206 = smul.addr %s205, 16
        %s207 = smul.addr %s206, 8
        %s208 = scalar_lea.vmem %s2, %s207
        %v209 = vlaneseq
        %v210 = vshrl.u32 %v209, 7
        %v211 = vlaneseq
        %v212 = vand.u32 %v211, 127
        %v213 = vld [vmem:[%s198] sm:$0xff]
        %v214 = vld [vmem:[%s198 + $0x8] sm:$0xff]
        %v215 = vld [vmem:[%s198 + $0x10] sm:$0xff]
        %v216 = vld [vmem:[%s198 + $0x18] sm:$0xff]
        %v217 = vld [vmem:[%s198 + $0x20] sm:$0xff]
        %v218 = vld [vmem:[%s198 + $0x28] sm:$0xff]
        %v219 = vld [vmem:[%s198 + $0x30] sm:$0xff]
        %v220 = vld [vmem:[%s198 + $0x38] sm:$0xff]
        %v221 = vld [vmem:[%s198 + $0x40] sm:$0xff]
        %v222 = vld [vmem:[%s198 + $0x48] sm:$0xff]
        %v223 = vld [vmem:[%s198 + $0x50] sm:$0xff]
        %v224 = vld [vmem:[%s198 + $0x58] sm:$0xff]
        %v225 = vld [vmem:[%s198 + $0x60] sm:$0xff]
        %v226 = vld [vmem:[%s198 + $0x68] sm:$0xff]
        %v227 = vld [vmem:[%s198 + $0x70] sm:$0xff]
        %v228 = vld [vmem:[%s198 + $0x78] sm:$0xff]
        %v229 = vld [vmem:[%s203] sm:$0xff]
        %v230 = vld [vmem:[%s203 + $0x8] sm:$0xff]
        %v231 = vld [vmem:[%s203 + $0x10] sm:$0xff]
        %v232 = vld [vmem:[%s203 + $0x18] sm:$0xff]
        %v233 = vld [vmem:[%s203 + $0x20] sm:$0xff]
        %v234 = vld [vmem:[%s203 + $0x28] sm:$0xff]
        %v235 = vld [vmem:[%s203 + $0x30] sm:$0xff]
        %v236 = vld [vmem:[%s203 + $0x38] sm:$0xff]
        %v237 = vld [vmem:[%s203 + $0x40] sm:$0xff]
        %v238 = vld [vmem:[%s203 + $0x48] sm:$0xff]
        %v239 = vld [vmem:[%s203 + $0x50] sm:$0xff]
        %v240 = vld [vmem:[%s203 + $0x58] sm:$0xff]
        %v241 = vld [vmem:[%s203 + $0x60] sm:$0xff]
        %v242 = vld [vmem:[%s203 + $0x68] sm:$0xff]
        %v243 = vld [vmem:[%s203 + $0x70] sm:$0xff]
        %v244 = vld [vmem:[%s203 + $0x78] sm:$0xff]
        %v245 = vld [vmem:[%s208] sm:$0xff]
        %v246 = vld [vmem:[%s208 + $0x8] sm:$0xff]
        %v247 = vld [vmem:[%s208 + $0x10] sm:$0xff]
        %v248 = vld [vmem:[%s208 + $0x18] sm:$0xff]
        %v249 = vld [vmem:[%s208 + $0x20] sm:$0xff]
        %v250 = vld [vmem:[%s208 + $0x28] sm:$0xff]
        %v251 = vld [vmem:[%s208 + $0x30] sm:$0xff]
        %v252 = vld [vmem:[%s208 + $0x38] sm:$0xff]
        %v253 = vld [vmem:[%s208 + $0x40] sm:$0xff]
        %v254 = vld [vmem:[%s208 + $0x48] sm:$0xff]
        %v255 = vld [vmem:[%s208 + $0x50] sm:$0xff]
        %v256 = vld [vmem:[%s208 + $0x58] sm:$0xff]
        %v257 = vld [vmem:[%s208 + $0x60] sm:$0xff]
        %v258 = vld [vmem:[%s208 + $0x68] sm:$0xff]
        %v259 = vld [vmem:[%s208 + $0x70] sm:$0xff]
        %v260 = vld [vmem:[%s208 + $0x78] sm:$0xff]
        %262 = vset.pattern.permute.xlu0 0
        %263 = vperm.xlu0 %262, %v213
        %v264 = vpop.permute.xlu0 %263
        %267 = vset.pattern.permute.xlu0 0
        %268 = vperm.xlu0 %267, %v214
        %v269 = vpop.permute.xlu0 %268
        %272 = vset.pattern.permute.xlu0 0
        %273 = vperm.xlu0 %272, %v215
        %v274 = vpop.permute.xlu0 %273
        %277 = vset.pattern.permute.xlu0 0
        %278 = vperm.xlu0 %277, %v216
        %v279 = vpop.permute.xlu0 %278
        %282 = vset.pattern.permute.xlu0 0
        %283 = vperm.xlu0 %282, %v217
        %v284 = vpop.permute.xlu0 %283
        %287 = vset.pattern.permute.xlu0 0
        %288 = vperm.xlu0 %287, %v218
        %v289 = vpop.permute.xlu0 %288
        %292 = vset.pattern.permute.xlu0 0
        %293 = vperm.xlu0 %292, %v219
        %v294 = vpop.permute.xlu0 %293
        %297 = vset.pattern.permute.xlu0 0
        %298 = vperm.xlu0 %297, %v220
        %v299 = vpop.permute.xlu0 %298
        %302 = vset.pattern.permute.xlu0 0
        %303 = vperm.xlu0 %302, %v221
        %v304 = vpop.permute.xlu0 %303
        %307 = vset.pattern.permute.xlu0 0
        %308 = vperm.xlu0 %307, %v222
        %v309 = vpop.permute.xlu0 %308
        %312 = vset.pattern.permute.xlu0 0
        %313 = vperm.xlu0 %312, %v223
        %v314 = vpop.permute.xlu0 %313
        %317 = vset.pattern.permute.xlu0 0
        %318 = vperm.xlu0 %317, %v224
        %v319 = vpop.permute.xlu0 %318
        %322 = vset.pattern.permute.xlu0 0
        %323 = vperm.xlu0 %322, %v225
        %v324 = vpop.permute.xlu0 %323
        %327 = vset.pattern.permute.xlu0 0
        %328 = vperm.xlu0 %327, %v226
        %v329 = vpop.permute.xlu0 %328
        %332 = vset.pattern.permute.xlu0 0
        %333 = vperm.xlu0 %332, %v227
        %v334 = vpop.permute.xlu0 %333
        %337 = vset.pattern.permute.xlu0 0
        %338 = vperm.xlu0 %337, %v228
        %v339 = vpop.permute.xlu0 %338
        %vm341 = vcmask 7168
        %v343 = vsel %vm341, 1.0, 0
        %v345 = vsel %vm341, %v213, 0
        %v347 = vsel %vm341, %v214, 0
        %v349 = vsel %vm341, %v215, 0
        %v351 = vsel %vm341, %v216, 0
        %v353 = vsel %vm341, %v217, 0
        %v355 = vsel %vm341, %v218, 0
        %v357 = vsel %vm341, %v219, 0
        %v359 = vsel %vm341, %v220, 0
        %v361 = vsel %vm341, %v221, 0
        %v363 = vsel %vm341, %v222, 0
        %v365 = vsel %vm341, %v223, 0
        %v367 = vsel %vm341, %v224, 0
        %v369 = vsel %vm341, %v225, 0
        %v371 = vsel %vm341, %v226, 0
        %v373 = vsel %vm341, %v227, 0
        %v375 = vsel %vm341, %v228, 0
        %377 = vmatprep.subr.mxu0 0.0
        %v378 = vand.u32 %v345, 4294901760
        %379 = vmatpush1.xpose.msra.mxu0 %v378
        %380 = vmatprep.subr.mxu0 0.0
        %v381 = vand.u32 %v347, 4294901760
        %382 = vmatpush1.xpose.msra.mxu0 %v381
        %383 = vmatprep.subr.mxu0 0.0
        %v384 = vand.u32 %v349, 4294901760
        %385 = vmatpush1.xpose.msra.mxu0 %v384
        %386 = vmatprep.subr.mxu0 0.0
        %v387 = vand.u32 %v351, 4294901760
        %388 = vmatpush1.xpose.msra.mxu0 %v387
        %389 = vmatprep.subr.mxu0 0.0
        %v390 = vand.u32 %v353, 4294901760
        %391 = vmatpush1.xpose.msra.mxu0 %v390
        %392 = vmatprep.subr.mxu0 0.0
        %v393 = vand.u32 %v355, 4294901760
        %394 = vmatpush1.xpose.msra.mxu0 %v393
        %395 = vmatprep.subr.mxu0 0.0
        %v396 = vand.u32 %v357, 4294901760
        %397 = vmatpush1.xpose.msra.mxu0 %v396
        %398 = vmatprep.subr.mxu0 0.0
        %v399 = vand.u32 %v359, 4294901760
        %400 = vmatpush1.xpose.msra.mxu0 %v399
        %401 = vmatprep.subr.mxu0 0.0
        %v402 = vand.u32 %v361, 4294901760
        %403 = vmatpush1.xpose.msra.mxu0 %v402
        %404 = vmatprep.subr.mxu0 0.0
        %v405 = vand.u32 %v363, 4294901760
        %406 = vmatpush1.xpose.msra.mxu0 %v405
        %407 = vmatprep.subr.mxu0 0.0
        %v408 = vand.u32 %v365, 4294901760
        %409 = vmatpush1.xpose.msra.mxu0 %v408
        %410 = vmatprep.subr.mxu0 0.0
        %v411 = vand.u32 %v367, 4294901760
        %412 = vmatpush1.xpose.msra.mxu0 %v411
        %413 = vmatprep.subr.mxu0 0.0
        %v414 = vand.u32 %v369, 4294901760
        %415 = vmatpush1.xpose.msra.mxu0 %v414
        %416 = vmatprep.subr.mxu0 0.0
        %v417 = vand.u32 %v371, 4294901760
        %418 = vmatpush1.xpose.msra.mxu0 %v417
        %419 = vmatprep.subr.mxu0 0.0
        %v420 = vand.u32 %v373, 4294901760
        %421 = vmatpush1.xpose.msra.mxu0 %v420
        %422 = vmatprep.subr.mxu0 0.0
        %v423 = vand.u32 %v375, 4294901760
        %424 = vmatpush1.xpose.msra.mxu0 %v423
        %425 = vmatprep.subr.mxu0 0.0
        %426 = vmatpush1.xpose.msra.mxu0 0.0
        %427 = vmatprep.subr.mxu0 0.0
        %428 = vmatpush1.xpose.msra.mxu0 0.0
        %429 = vmatprep.subr.mxu0 0.0
        %430 = vmatpush1.xpose.msra.mxu0 0.0
        %431 = vmatprep.subr.mxu0 0.0
        %432 = vmatpush1.xpose.msra.mxu0 0.0
        %433 = vmatprep.subr.mxu0 0.0
        %434 = vmatpush1.xpose.msra.mxu0 0.0
        %435 = vmatprep.subr.mxu0 0.0
        %436 = vmatpush1.xpose.msra.mxu0 0.0
        %437 = vmatprep.subr.mxu0 0.0
        %438 = vmatpush1.xpose.msra.mxu0 0.0
        %439 = vmatprep.subr.mxu0 0.0
        %440 = vmatpush1.xpose.msra.mxu0 0.0
        %441 = vmatprep.subr.mxu0 0.0
        %442 = vmatpush1.xpose.msra.mxu0 0.0
        %443 = vmatprep.subr.mxu0 0.0
        %444 = vmatpush1.xpose.msra.mxu0 0.0
        %445 = vmatprep.subr.mxu0 0.0
        %446 = vmatpush1.xpose.msra.mxu0 0.0
        %447 = vmatprep.subr.mxu0 0.0
        %448 = vmatpush1.xpose.msra.mxu0 0.0
        %449 = vmatprep.subr.mxu0 0.0
        %450 = vmatpush1.xpose.msra.mxu0 0.0
        %451 = vmatprep.subr.mxu0 0.0
        %452 = vmatpush1.xpose.msra.mxu0 0.0
        %453 = vmatprep.subr.mxu0 0.0
        %454 = vmatpush1.xpose.msra.mxu0 0.0
        %455 = vmatprep.subr.mxu0 0.0
        %456 = vmatpush1.xpose.msra.mxu0 0.0
        %457 = vmatprep.mubr.f32.mxu0 0.0
        %v458 = vand.u32 %v343, 4294901760
        %v459 = vsub.f32 %v343, %v458
        %v460 = vand.u32 %v459, 4294901760
        %v461 = vsub.f32 %v459, %v460
        %v462 = vand.u32 %v461, 4294901760
        %463 = vmatmul.mubr.f32.gmra.mrb[0].mxu0 %v462
        %v464 = vpop.f32.mrb[0].mxu0
        %v465 = vadd.f32 0.0, %v464
        %v466 = vpop.f32.mrb[0].mxu0
        %467 = vmatprep.mubr.f32.mxu0 0.0
        %v468 = vand.u32 %v343, 4294901760
        %v469 = vsub.f32 %v343, %v468
        %v470 = vand.u32 %v469, 4294901760
        %v471 = vsub.f32 %v469, %v470
        %v472 = vand.u32 %v471, 4294901760
        %473 = vmatmul.mubr.f32.gmra.mrb[0].mxu0 %v472
        %v474 = vpop.f32.mrb[0].mxu0
        %v475 = vadd.f32 0.0, %v474
        %v476 = vpop.f32.mrb[0].mxu0
        %477 = vmatprep.mubr.f32.mxu0 0.0
        %v478 = vand.u32 %v343, 4294901760
        %v479 = vsub.f32 %v343, %v478
        %v480 = vand.u32 %v479, 4294901760
        %v481 = vsub.f32 %v479, %v480
        %v482 = vand.u32 %v481, 4294901760
        %483 = vmatmul.mubr.f32.gmra.mrb[0].mxu0 %v482
        %v484 = vpop.f32.mrb[0].mxu0
        %v485 = vadd.f32 0.0, %v484
        %v486 = vpop.f32.mrb[0].mxu0
        %487 = vmatprep.mubr.f32.mxu0 0.0
        %v488 = vand.u32 %v343, 4294901760
        %v489 = vsub.f32 %v343, %v488
        %v490 = vand.u32 %v489, 4294901760
        %v491 = vsub.f32 %v489, %v490
        %v492 = vand.u32 %v491, 4294901760
        %493 = vmatmul.mubr.f32.gmra.mrb[0].mxu0 %v492
        %v494 = vpop.f32.mrb[0].mxu0
        %v495 = vadd.f32 0.0, %v494
        %v496 = vpop.f32.mrb[0].mxu0
        %497 = vmatprep.mubr.f32.mxu0 0.0
        %v498 = vand.u32 %v343, 4294901760
        %v499 = vsub.f32 %v343, %v498
        %v500 = vand.u32 %v499, 4294901760
        %v501 = vsub.f32 %v499, %v500
        %v502 = vand.u32 %v501, 4294901760
        %503 = vmatmul.mubr.f32.gmra.mrb[0].mxu0 %v502
        %v504 = vpop.f32.mrb[0].mxu0
        %v505 = vadd.f32 0.0, %v504
        %v506 = vpop.f32.mrb[0].mxu0
        %507 = vmatprep.mubr.f32.mxu0 0.0
        %v508 = vand.u32 %v343, 4294901760
        %v509 = vsub.f32 %v343, %v508
        %v510 = vand.u32 %v509, 4294901760
        %v511 = vsub.f32 %v509, %v510
        %v512 = vand.u32 %v511, 4294901760
        %513 = vmatmul.mubr.f32.gmra.mrb[0].mxu0 %v512
        %v514 = vpop.f32.mrb[0].mxu0
        %v515 = vadd.f32 0.0, %v514
        %v516 = vpop.f32.mrb[0].mxu0
        %517 = vmatprep.mubr.f32.mxu0 0.0
        %v518 = vand.u32 %v343, 4294901760
        %v519 = vsub.f32 %v343, %v518
        %v520 = vand.u32 %v519, 4294901760
        %v521 = vsub.f32 %v519, %v520
        %v522 = vand.u32 %v521, 4294901760
        %523 = vmatmul.mubr.f32.gmra.mrb[0].mxu0 %v522
        %v524 = vpop.f32.mrb[0].mxu0
        %v525 = vadd.f32 0.0, %v524
        %v526 = vpop.f32.mrb[0].mxu0
        %527 = vmatprep.mubr.f32.mxu0 0.0
        %v528 = vand.u32 %v343, 4294901760
        %v529 = vsub.f32 %v343, %v528
        %v530 = vand.u32 %v529, 4294901760
        %v531 = vsub.f32 %v529, %v530
        %v532 = vand.u32 %v531, 4294901760
        %533 = vmatmul.mubr.f32.gmra.mrb[0].mxu0 %v532
        %v534 = vpop.f32.mrb[0].mxu0
        %v535 = vadd.f32 0.0, %v534
        %v536 = vpop.f32.mrb[0].mxu0
        %537 = vmatprep.mubr.f32.mxu0 0.0
        %v538 = vand.u32 %v343, 4294901760
        %v539 = vsub.f32 %v343, %v538
        %v540 = vand.u32 %v539, 4294901760
        %v541 = vsub.f32 %v539, %v540
        %v542 = vand.u32 %v541, 4294901760
        %543 = vmatmul.mubr.f32.gmra.mrb[0].mxu0 %v542
        %v544 = vpop.f32.mrb[0].mxu0
        %v545 = vadd.f32 0.0, %v544
        %v546 = vpop.f32.mrb[0].mxu0
        %547 = vmatprep.mubr.f32.mxu0 0.0
        %v548 = vand.u32 %v343, 4294901760
        %v549 = vsub.f32 %v343, %v548
        %v550 = vand.u32 %v549, 4294901760
        %v551 = vsub.f32 %v549, %v550
        %v552 = vand.u32 %v551, 4294901760
        %553 = vmatmul.mubr.f32.gmra.mrb[0].mxu0 %v552
        %v554 = vpop.f32.mrb[0].mxu0
        %v555 = vadd.f32 0.0, %v554
        %v556 = vpop.f32.mrb[0].mxu0
        %557 = vmatprep.mubr.f32.mxu0 0.0
        %v558 = vand.u32 %v343, 4294901760
        %v559 = vsub.f32 %v343, %v558
        %v560 = vand.u32 %v559, 4294901760
        %v561 = vsub.f32 %v559, %v560
        %v562 = vand.u32 %v561, 4294901760
        %563 = vmatmul.mubr.f32.gmra.mrb[0].mxu0 %v562
        %v564 = vpop.f32.mrb[0].mxu0
        %v565 = vadd.f32 0.0, %v564
        %v566 = vpop.f32.mrb[0].mxu0
        %567 = vmatprep.mubr.f32.mxu0 0.0
        %v568 = vand.u32 %v343, 4294901760
        %v569 = vsub.f32 %v343, %v568
        %v570 = vand.u32 %v569, 4294901760
        %v571 = vsub.f32 %v569, %v570
        %v572 = vand.u32 %v571, 4294901760
        %573 = vmatmul.mubr.f32.gmra.mrb[0].mxu0 %v572
        %v574 = vpop.f32.mrb[0].mxu0
        %v575 = vadd.f32 0.0, %v574
        %v576 = vpop.f32.mrb[0].mxu0
        %577 = vmatprep.mubr.f32.mxu0 0.0
        %v578 = vand.u32 %v343, 4294901760
        %v579 = vsub.f32 %v343, %v578
        %v580 = vand.u32 %v579, 4294901760
        %v581 = vsub.f32 %v579, %v580
        %v582 = vand.u32 %v581, 4294901760
        %583 = vmatmul.mubr.f32.gmra.mrb[0].mxu0 %v582
        %v584 = vpop.f32.mrb[0].mxu0
        %v585 = vadd.f32 0.0, %v584
        %v586 = vpop.f32.mrb[0].mxu0
        %587 = vmatprep.mubr.f32.mxu0 0.0
        %v588 = vand.u32 %v343, 4294901760
        %v589 = vsub.f32 %v343, %v588
        %v590 = vand.u32 %v589, 4294901760
        %v591 = vsub.f32 %v589, %v590
        %v592 = vand.u32 %v591, 4294901760
        %593 = vmatmul.mubr.f32.gmra.mrb[0].mxu0 %v592
        %v594 = vpop.f32.mrb[0].mxu0
        %v595 = vadd.f32 0.0, %v594
        %v596 = vpop.f32.mrb[0].mxu0
        %597 = vmatprep.mubr.f32.mxu0 0.0
        %v598 = vand.u32 %v343, 4294901760
        %v599 = vsub.f32 %v343, %v598
        %v600 = vand.u32 %v599, 4294901760
        %v601 = vsub.f32 %v599, %v600
        %v602 = vand.u32 %v601, 4294901760
        %603 = vmatmul.mubr.f32.gmra.mrb[0].mxu0 %v602
        %v604 = vpop.f32.mrb[0].mxu0
        %v605 = vadd.f32 0.0, %v604
        %v606 = vpop.f32.mrb[0].mxu0
        %607 = vmatprep.mubr.f32.mxu0 0.0
        %v608 = vand.u32 %v343, 4294901760
        %v609 = vsub.f32 %v343, %v608
        %v610 = vand.u32 %v609, 4294901760
        %v611 = vsub.f32 %v609, %v610
        %v612 = vand.u32 %v611, 4294901760
        %613 = vmatmul.mubr.f32.gmra.mrb[0].mxu0 %v612
        %v614 = vpop.f32.mrb[0].mxu0
        %v615 = vadd.f32 0.0, %v614
        %v616 = vpop.f32.mrb[0].mxu0
        %617 = vdwg.mxu0
        %618 = vmatprep.subr.mxu0 0.0
        %v619 = vand.u32 %v345, 4294901760
        %v620 = vsub.f32 %v345, %v619
        %v621 = vand.u32 %v620, 4294901760
        %v622 = vsub.f32 %v620, %v621
        %v623 = vand.u32 %v622, 4294901760
        %624 = vmatpush1.xpose.msra.mxu0 %v623
        %625 = vmatprep.subr.mxu0 0.0
        %v626 = vand.u32 %v347, 4294901760
        %v627 = vsub.f32 %v347, %v626
        %v628 = vand.u32 %v627, 4294901760
        %v629 = vsub.f32 %v627, %v628
        %v630 = vand.u32 %v629, 4294901760
        %631 = vmatpush1.xpose.msra.mxu0 %v630
        %632 = vmatprep.subr.mxu0 0.0
        %v633 = vand.u32 %v349, 4294901760
        %v634 = vsub.f32 %v349, %v633
        %v635 = vand.u32 %v634, 4294901760
        %v636 = vsub.f32 %v634, %v635
        %v637 = vand.u32 %v636, 4294901760
        %638 = vmatpush1.xpose.msra.mxu0 %v637
        %639 = vmatprep.subr.mxu0 0.0
        %v640 = vand.u32 %v351, 4294901760
        %v641 = vsub.f32 %v351, %v640
        %v642 = vand.u32 %v641, 4294901760
        %v643 = vsub.f32 %v641, %v642
        %v644 = vand.u32 %v643, 4294901760
        %645 = vmatpush1.xpose.msra.mxu0 %v644
        %646 = vmatprep.subr.mxu0 0.0
        %v647 = vand.u32 %v353, 4294901760
        %v648 = vsub.f32 %v353, %v647
        %v649 = vand.u32 %v648, 4294901760
        %v650 = vsub.f32 %v648, %v649
        %v651 = vand.u32 %v650, 4294901760
        %652 = vmatpush1.xpose.msra.mxu0 %v651
        %653 = vmatprep.subr.mxu0 0.0
        %v654 = vand.u32 %v355, 4294901760
        %v655 = vsub.f32 %v355, %v654
        %v656 = vand.u32 %v655, 4294901760
        %v657 = vsub.f32 %v655, %v656
        %v658 = vand.u32 %v657, 4294901760
        %659 = vmatpush1.xpose.msra.mxu0 %v658
        %660 = vmatprep.subr.mxu0 0.0
        %v661 = vand.u32 %v357, 4294901760
        %v662 = vsub.f32 %v357, %v661
        %v663 = vand.u32 %v662, 4294901760
        %v664 = vsub.f32 %v662, %v663
        %v665 = vand.u32 %v664, 4294901760
        %666 = vmatpush1.xpose.msra.mxu0 %v665
        %667 = vmatprep.subr.mxu0 0.0
        %v668 = vand.u32 %v359, 4294901760
        %v669 = vsub.f32 %v359, %v668
        %v670 = vand.u32 %v669, 4294901760
        %v671 = vsub.f32 %v669, %v670
        %v672 = vand.u32 %v671, 4294901760
        %673 = vmatpush1.xpose.msra.mxu0 %v672
        %674 = vmatprep.subr.mxu0 0.0
        %v675 = vand.u32 %v361, 4294901760
        %v676 = vsub.f32 %v361, %v675
        %v677 = vand.u32 %v676, 4294901760
        %v678 = vsub.f32 %v676, %v677
        %v679 = vand.u32 %v678, 4294901760
        %680 = vmatpush1.xpose.msra.mxu0 %v679
        %681 = vmatprep.subr.mxu0 0.0
        %v682 = vand.u32 %v363, 4294901760
        %v683 = vsub.f32 %v363, %v682
        %v684 = vand.u32 %v683, 4294901760
        %v685 = vsub.f32 %v683, %v684
        %v686 = vand.u32 %v685, 4294901760
        %687 = vmatpush1.xpose.msra.mxu0 %v686
        %688 = vmatprep.subr.mxu0 0.0
        %v689 = vand.u32 %v365, 4294901760
        %v690 = vsub.f32 %v365, %v689
        %v691 = vand.u32 %v690, 4294901760
        %v692 = vsub.f32 %v690, %v691
        %v693 = vand.u32 %v692, 4294901760
        %694 = vmatpush1.xpose.msra.mxu0 %v693
        %695 = vmatprep.subr.mxu0 0.0
        %v696 = vand.u32 %v367, 4294901760
        %v697 = vsub.f32 %v367, %v696
        %v698 = vand.u32 %v697, 4294901760
        %v699 = vsub.f32 %v697, %v698
        %v700 = vand.u32 %v699, 4294901760
        %701 = vmatpush1.xpose.msra.mxu0 %v700
        %702 = vmatprep.subr.mxu0 0.0
        %v703 = vand.u32 %v369, 4294901760
        %v704 = vsub.f32 %v369, %v703
        %v705 = vand.u32 %v704, 4294901760
        %v706 = vsub.f32 %v704, %v705
        %v707 = vand.u32 %v706, 4294901760
        %708 = vmatpush1.xpose.msra.mxu0 %v707
        %709 = vmatprep.subr.mxu0 0.0
        %v710 = vand.u32 %v371, 4294901760
        %v711 = vsub.f32 %v371, %v710
        %v712 = vand.u32 %v711, 4294901760
        %v713 = vsub.f32 %v711, %v712
        %v714 = vand.u32 %v713, 4294901760
        %715 = vmatpush1.xpose.msra.mxu0 %v714
        %716 = vmatprep.subr.mxu0 0.0
        %v717 = vand.u32 %v373, 4294901760
        %v718 = vsub.f32 %v373, %v717
        %v719 = vand.u32 %v718, 4294901760
        %v720 = vsub.f32 %v718, %v719
        %v721 = vand.u32 %v720, 4294901760
        %722 = vmatpush1.xpose.msra.mxu0 %v721
        %723 = vmatprep.subr.mxu0 0.0
        %v724 = vand.u32 %v375, 4294901760
        %v725 = vsub.f32 %v375, %v724
        %v726 = vand.u32 %v725, 4294901760
        %v727 = vsub.f32 %v725, %v726
        %v728 = vand.u32 %v727, 4294901760
        %729 = vmatpush1.xpose.msra.mxu0 %v728
        %730 = vmatprep.subr.mxu0 0.0
        %731 = vmatpush1.xpose.msra.mxu0 0.0
        %732 = vmatprep.subr.mxu0 0.0
        %733 = vmatpush1.xpose.msra.mxu0 0.0
        %734 = vmatprep.subr.mxu0 0.0
        %735 = vmatpush1.xpose.msra.mxu0 0.0
        %736 = vmatprep.subr.mxu0 0.0
        %737 = vmatpush1.xpose.msra.mxu0 0.0
        %738 = vmatprep.subr.mxu0 0.0
        %739 = vmatpush1.xpose.msra.mxu0 0.0
        %740 = vmatprep.subr.mxu0 0.0
        %741 = vmatpush1.xpose.msra.mxu0 0.0
        %742 = vmatprep.subr.mxu0 0.0
        %743 = vmatpush1.xpose.msra.mxu0 0.0
        %744 = vmatprep.subr.mxu0 0.0
        %745 = vmatpush1.xpose.msra.mxu0 0.0
        %746 = vmatprep.subr.mxu0 0.0
        %747 = vmatpush1.xpose.msra.mxu0 0.0
        %748 = vmatprep.subr.mxu0 0.0
        %749 = vmatpush1.xpose.msra.mxu0 0.0
        %750 = vmatprep.subr.mxu0 0.0
        %751 = vmatpush1.xpose.msra.mxu0 0.0
        %752 = vmatprep.subr.mxu0 0.0
        %753 = vmatpush1.xpose.msra.mxu0 0.0
        %754 = vmatprep.subr.mxu0 0.0
        %755 = vmatpush1.xpose.msra.mxu0 0.0
        %756 = vmatprep.subr.mxu0 0.0
        %757 = vmatpush1.xpose.msra.mxu0 0.0
        %758 = vmatprep.subr.mxu0 0.0
        %759 = vmatpush1.xpose.msra.mxu0 0.0
        %760 = vmatprep.subr.mxu0 0.0
        %761 = vmatpush1.xpose.msra.mxu0 0.0
        %762 = vmatprep.mubr.f32.mxu0 0.0
        %v763 = vand.u32 %v343, 4294901760
        %764 = vmatmul.mubr.f32.gmra.mrb[0].mxu0 %v763
        %v765 = vpop.f32.mrb[0].mxu0
        %v766 = vadd.f32 %v465, %v765
        %v767 = vpop.f32.mrb[0].mxu0
        %768 = vmatprep.mubr.f32.mxu0 0.0
        %v769 = vand.u32 %v343, 4294901760
        %770 = vmatmul.mubr.f32.gmra.mrb[0].mxu0 %v769
        %v771 = vpop.f32.mrb[0].mxu0
        %v772 = vadd.f32 %v475, %v771
        %v773 = vpop.f32.mrb[0].mxu0
        %774 = vmatprep.mubr.f32.mxu0 0.0
        %v775 = vand.u32 %v343, 4294901760
        %776 = vmatmul.mubr.f32.gmra.mrb[0].mxu0 %v775
        %v777 = vpop.f32.mrb[0].mxu0
        %v778 = vadd.f32 %v485, %v777
        %v779 = vpop.f32.mrb[0].mxu0
        %780 = vmatprep.mubr.f32.mxu0 0.0
        %v781 = vand.u32 %v343, 4294901760
        %782 = vmatmul.mubr.f32.gmra.mrb[0].mxu0 %v781
        %v783 = vpop.f32.mrb[0].mxu0
        %v784 = vadd.f32 %v495, %v783
        %v785 = vpop.f32.mrb[0].mxu0
        %786 = vmatprep.mubr.f32.mxu0 0.0
        %v787 = vand.u32 %v343, 4294901760
        %788 = vmatmul.mubr.f32.gmra.mrb[0].mxu0 %v787
        %v789 = vpop.f32.mrb[0].mxu0
        %v790 = vadd.f32 %v505, %v789
        %v791 = vpop.f32.mrb[0].mxu0
        %792 = vmatprep.mubr.f32.mxu0 0.0
        %v793 = vand.u32 %v343, 4294901760
        %794 = vmatmul.mubr.f32.gmra.mrb[0].mxu0 %v793
        %v795 = vpop.f32.mrb[0].mxu0
        %v796 = vadd.f32 %v515, %v795
        %v797 = vpop.f32.mrb[0].mxu0
        %798 = vmatprep.mubr.f32.mxu0 0.0
        %v799 = vand.u32 %v343, 4294901760
        %800 = vmatmul.mubr.f32.gmra.mrb[0].mxu0 %v799
        %v801 = vpop.f32.mrb[0].mxu0
        %v802 = vadd.f32 %v525, %v801
        %v803 = vpop.f32.mrb[0].mxu0
        %804 = vmatprep.mubr.f32.mxu0 0.0
        %v805 = vand.u32 %v343, 4294901760
        %806 = vmatmul.mubr.f32.gmra.mrb[0].mxu0 %v805
        %v807 = vpop.f32.mrb[0].mxu0
        %v808 = vadd.f32 %v535, %v807
        %v809 = vpop.f32.mrb[0].mxu0
        %810 = vmatprep.mubr.f32.mxu0 0.0
        %v811 = vand.u32 %v343, 4294901760
        %812 = vmatmul.mubr.f32.gmra.mrb[0].mxu0 %v811
        %v813 = vpop.f32.mrb[0].mxu0
        %v814 = vadd.f32 %v545, %v813
        %v815 = vpop.f32.mrb[0].mxu0
        %816 = vmatprep.mubr.f32.mxu0 0.0
        %v817 = vand.u32 %v343, 4294901760
        %818 = vmatmul.mubr.f32.gmra.mrb[0].mxu0 %v817
        %v819 = vpop.f32.mrb[0].mxu0
        %v820 = vadd.f32 %v555, %v819
        %v821 = vpop.f32.mrb[0].mxu0
        %822 = vmatprep.mubr.f32.mxu0 0.0
        %v823 = vand.u32 %v343, 4294901760
        %824 = vmatmul.mubr.f32.gmra.mrb[0].mxu0 %v823
        %v825 = vpop.f32.mrb[0].mxu0
        %v826 = vadd.f32 %v565, %v825
        %v827 = vpop.f32.mrb[0].mxu0
        %828 = vmatprep.mubr.f32.mxu0 0.0
        %v829 = vand.u32 %v343, 4294901760
        %830 = vmatmul.mubr.f32.gmra.mrb[0].mxu0 %v829
        %v831 = vpop.f32.mrb[0].mxu0
        %v832 = vadd.f32 %v575, %v831
        %v833 = vpop.f32.mrb[0].mxu0
        %834 = vmatprep.mubr.f32.mxu0 0.0
        %v835 = vand.u32 %v343, 4294901760
        %836 = vmatmul.mubr.f32.gmra.mrb[0].mxu0 %v835
        %v837 = vpop.f32.mrb[0].mxu0
        %v838 = vadd.f32 %v585, %v837
        %v839 = vpop.f32.mrb[0].mxu0
        %840 = vmatprep.mubr.f32.mxu0 0.0
        %v841 = vand.u32 %v343, 4294901760
        %842 = vmatmul.mubr.f32.gmra.mrb[0].mxu0 %v841
        %v843 = vpop.f32.mrb[0].mxu0
        %v844 = vadd.f32 %v595, %v843
        %v845 = vpop.f32.mrb[0].mxu0
        %846 = vmatprep.mubr.f32.mxu0 0.0
        %v847 = vand.u32 %v343, 4294901760
        %848 = vmatmul.mubr.f32.gmra.mrb[0].mxu0 %v847
        %v849 = vpop.f32.mrb[0].mxu0
        %v850 = vadd.f32 %v605, %v849
        %v851 = vpop.f32.mrb[0].mxu0
        %852 = vmatprep.mubr.f32.mxu0 0.0
        %v853 = vand.u32 %v343, 4294901760
        %854 = vmatmul.mubr.f32.gmra.mrb[0].mxu0 %v853
        %v855 = vpop.f32.mrb[0].mxu0
        %v856 = vadd.f32 %v615, %v855
        %v857 = vpop.f32.mrb[0].mxu0
        %858 = vdwg.mxu0
        %859 = vmatprep.subr.mxu0 0.0
        %v860 = vand.u32 %v345, 4294901760
        %v861 = vsub.f32 %v345, %v860
        %862 = vmatpush1.xpose.msra.mxu0 %v861
        %863 = vmatprep.subr.mxu0 0.0
        %v864 = vand.u32 %v347, 4294901760
        %v865 = vsub.f32 %v347, %v864
        %866 = vmatpush1.xpose.msra.mxu0 %v865
        %867 = vmatprep.subr.mxu0 0.0
        %v868 = vand.u32 %v349, 4294901760
        %v869 = vsub.f32 %v349, %v868
        %870 = vmatpush1.xpose.msra.mxu0 %v869
        %871 = vmatprep.subr.mxu0 0.0
        %v872 = vand.u32 %v351, 4294901760
        %v873 = vsub.f32 %v351, %v872
        %874 = vmatpush1.xpose.msra.mxu0 %v873
        %875 = vmatprep.subr.mxu0 0.0
        %v876 = vand.u32 %v353, 4294901760
        %v877 = vsub.f32 %v353, %v876
        %878 = vmatpush1.xpose.msra.mxu0 %v877
        %879 = vmatprep.subr.mxu0 0.0
        %v880 = vand.u32 %v355, 4294901760
        %v881 = vsub.f32 %v355, %v880
        %882 = vmatpush1.xpose.msra.mxu0 %v881
        %883 = vmatprep.subr.mxu0 0.0
        %v884 = vand.u32 %v357, 4294901760
        %v885 = vsub.f32 %v357, %v884
        %886 = vmatpush1.xpose.msra.mxu0 %v885
        %887 = vmatprep.subr.mxu0 0.0
        %v888 = vand.u32 %v359, 4294901760
        %v889 = vsub.f32 %v359, %v888
        %890 = vmatpush1.xpose.msra.mxu0 %v889
        %891 = vmatprep.subr.mxu0 0.0
        %v892 = vand.u32 %v361, 4294901760
        %v893 = vsub.f32 %v361, %v892
        %894 = vmatpush1.xpose.msra.mxu0 %v893
        %895 = vmatprep.subr.mxu0 0.0
        %v896 = vand.u32 %v363, 4294901760
        %v897 = vsub.f32 %v363, %v896
        %898 = vmatpush1.xpose.msra.mxu0 %v897
        %899 = vmatprep.subr.mxu0 0.0
        %v900 = vand.u32 %v365, 4294901760
        %v901 = vsub.f32 %v365, %v900
        %902 = vmatpush1.xpose.msra.mxu0 %v901
        %903 = vmatprep.subr.mxu0 0.0
        %v904 = vand.u32 %v367, 4294901760
        %v905 = vsub.f32 %v367, %v904
        %906 = vmatpush1.xpose.msra.mxu0 %v905
        %907 = vmatprep.subr.mxu0 0.0
        %v908 = vand.u32 %v369, 4294901760
        %v909 = vsub.f32 %v369, %v908
        %910 = vmatpush1.xpose.msra.mxu0 %v909
        %911 = vmatprep.subr.mxu0 0.0
        %v912 = vand.u32 %v371, 4294901760
        %v913 = vsub.f32 %v371, %v912
        %914 = vmatpush1.xpose.msra.mxu0 %v913
        %915 = vmatprep.subr.mxu0 0.0
        %v916 = vand.u32 %v373, 4294901760
        %v917 = vsub.f32 %v373, %v916
        %918 = vmatpush1.xpose.msra.mxu0 %v917
        %919 = vmatprep.subr.mxu0 0.0
        %v920 = vand.u32 %v375, 4294901760
        %v921 = vsub.f32 %v375, %v920
        %922 = vmatpush1.xpose.msra.mxu0 %v921
        %923 = vmatprep.subr.mxu0 0.0
        %924 = vmatpush1.xpose.msra.mxu0 0.0
        %925 = vmatprep.subr.mxu0 0.0
        %926 = vmatpush1.xpose.msra.mxu0 0.0
        %927 = vmatprep.subr.mxu0 0.0
        %928 = vmatpush1.xpose.msra.mxu0 0.0
        %929 = vmatprep.subr.mxu0 0.0
        %930 = vmatpush1.xpose.msra.mxu0 0.0
        %931 = vmatprep.subr.mxu0 0.0
        %932 = vmatpush1.xpose.msra.mxu0 0.0
        %933 = vmatprep.subr.mxu0 0.0
        %934 = vmatpush1.xpose.msra.mxu0 0.0
        %935 = vmatprep.subr.mxu0 0.0
        %936 = vmatpush1.xpose.msra.mxu0 0.0
        %937 = vmatprep.subr.mxu0 0.0
        %938 = vmatpush1.xpose.msra.mxu0 0.0
        %939 = vmatprep.subr.mxu0 0.0
        %940 = vmatpush1.xpose.msra.mxu0 0.0
        %941 = vmatprep.subr.mxu0 0.0
        %942 = vmatpush1.xpose.msra.mxu0 0.0
        %943 = vmatprep.subr.mxu0 0.0
        %944 = vmatpush1.xpose.msra.mxu0 0.0
        %945 = vmatprep.subr.mxu0 0.0
        %946 = vmatpush1.xpose.msra.mxu0 0.0
        %947 = vmatprep.subr.mxu0 0.0
        %948 = vmatpush1.xpose.msra.mxu0 0.0
        %949 = vmatprep.subr.mxu0 0.0
        %950 = vmatpush1.xpose.msra.mxu0 0.0
        %951 = vmatprep.subr.mxu0 0.0
        %952 = vmatpush1.xpose.msra.mxu0 0.0
        %953 = vmatprep.subr.mxu0 0.0
        %954 = vmatpush1.xpose.msra.mxu0 0.0
        %955 = vmatprep.mubr.f32.mxu0 0.0
        %v956 = vand.u32 %v343, 4294901760
        %v957 = vsub.f32 %v343, %v956
        %958 = vmatmul.mubr.f32.gmra.mrb[0].mxu0 %v957
        %v959 = vpop.f32.mrb[0].mxu0
        %v960 = vadd.f32 %v766, %v959
        %v961 = vpop.f32.mrb[0].mxu0
        %962 = vmatprep.mubr.f32.mxu0 0.0
        %v963 = vand.u32 %v343, 4294901760
        %v964 = vsub.f32 %v343, %v963
        %965 = vmatmul.mubr.f32.gmra.mrb[0].mxu0 %v964
        %v966 = vpop.f32.mrb[0].mxu0
        %v967 = vadd.f32 %v772, %v966
        %v968 = vpop.f32.mrb[0].mxu0
        %969 = vmatprep.mubr.f32.mxu0 0.0
        %v970 = vand.u32 %v343, 4294901760
        %v971 = vsub.f32 %v343, %v970
        %972 = vmatmul.mubr.f32.gmra.mrb[0].mxu0 %v971
        %v973 = vpop.f32.mrb[0].mxu0
        %v974 = vadd.f32 %v778, %v973
        %v975 = vpop.f32.mrb[0].mxu0
        %976 = vmatprep.mubr.f32.mxu0 0.0
        %v977 = vand.u32 %v343, 4294901760
        %v978 = vsub.f32 %v343, %v977
        %979 = vmatmul.mubr.f32.gmra.mrb[0].mxu0 %v978
        %v980 = vpop.f32.mrb[0].mxu0
        %v981 = vadd.f32 %v784, %v980
        %v982 = vpop.f32.mrb[0].mxu0
        %983 = vmatprep.mubr.f32.mxu0 0.0
        %v984 = vand.u32 %v343, 4294901760
        %v985 = vsub.f32 %v343, %v984
        %986 = vmatmul.mubr.f32.gmra.mrb[0].mxu0 %v985
        %v987 = vpop.f32.mrb[0].mxu0
        %v988 = vadd.f32 %v790, %v987
        %v989 = vpop.f32.mrb[0].mxu0
        %990 = vmatprep.mubr.f32.mxu0 0.0
        %v991 = vand.u32 %v343, 4294901760
        %v992 = vsub.f32 %v343, %v991
        %993 = vmatmul.mubr.f32.gmra.mrb[0].mxu0 %v992
        %v994 = vpop.f32.mrb[0].mxu0
        %v995 = vadd.f32 %v796, %v994
        %v996 = vpop.f32.mrb[0].mxu0
        %997 = vmatprep.mubr.f32.mxu0 0.0
        %v998 = vand.u32 %v343, 4294901760
        %v999 = vsub.f32 %v343, %v998
        %1000 = vmatmul.mubr.f32.gmra.mrb[0].mxu0 %v999
        %v1001 = vpop.f32.mrb[0].mxu0
        %v1002 = vadd.f32 %v802, %v1001
        %v1003 = vpop.f32.mrb[0].mxu0
        %1004 = vmatprep.mubr.f32.mxu0 0.0
        %v1005 = vand.u32 %v343, 4294901760
        %v1006 = vsub.f32 %v343, %v1005
        %1007 = vmatmul.mubr.f32.gmra.mrb[0].mxu0 %v1006
        %v1008 = vpop.f32.mrb[0].mxu0
        %v1009 = vadd.f32 %v808, %v1008
        %v1010 = vpop.f32.mrb[0].mxu0
        %1011 = vmatprep.mubr.f32.mxu0 0.0
        %v1012 = vand.u32 %v343, 4294901760
        %v1013 = vsub.f32 %v343, %v1012
        %1014 = vmatmul.mubr.f32.gmra.mrb[0].mxu0 %v1013
        %v1015 = vpop.f32.mrb[0].mxu0
        %v1016 = vadd.f32 %v814, %v1015
        %v1017 = vpop.f32.mrb[0].mxu0
        %1018 = vmatprep.mubr.f32.mxu0 0.0
        %v1019 = vand.u32 %v343, 4294901760
        %v1020 = vsub.f32 %v343, %v1019
        %1021 = vmatmul.mubr.f32.gmra.mrb[0].mxu0 %v1020
        %v1022 = vpop.f32.mrb[0].mxu0
        %v1023 = vadd.f32 %v820, %v1022
        %v1024 = vpop.f32.mrb[0].mxu0
        %1025 = vmatprep.mubr.f32.mxu0 0.0
        %v1026 = vand.u32 %v343, 4294901760
        %v1027 = vsub.f32 %v343, %v1026
        %1028 = vmatmul.mubr.f32.gmra.mrb[0].mxu0 %v1027
        %v1029 = vpop.f32.mrb[0].mxu0
        %v1030 = vadd.f32 %v826, %v1029
        %v1031 = vpop.f32.mrb[0].mxu0
        %1032 = vmatprep.mubr.f32.mxu0 0.0
        %v1033 = vand.u32 %v343, 4294901760
        %v1034 = vsub.f32 %v343, %v1033
        %1035 = vmatmul.mubr.f32.gmra.mrb[0].mxu0 %v1034
        %v1036 = vpop.f32.mrb[0].mxu0
        %v1037 = vadd.f32 %v832, %v1036
        %v1038 = vpop.f32.mrb[0].mxu0
        %1039 = vmatprep.mubr.f32.mxu0 0.0
        %v1040 = vand.u32 %v343, 4294901760
        %v1041 = vsub.f32 %v343, %v1040
        %1042 = vmatmul.mubr.f32.gmra.mrb[0].mxu0 %v1041
        %v1043 = vpop.f32.mrb[0].mxu0
        %v1044 = vadd.f32 %v838, %v1043
        %v1045 = vpop.f32.mrb[0].mxu0
        %1046 = vmatprep.mubr.f32.mxu0 0.0
        %v1047 = vand.u32 %v343, 4294901760
        %v1048 = vsub.f32 %v343, %v1047
        %1049 = vmatmul.mubr.f32.gmra.mrb[0].mxu0 %v1048
        %v1050 = vpop.f32.mrb[0].mxu0
        %v1051 = vadd.f32 %v844, %v1050
        %v1052 = vpop.f32.mrb[0].mxu0
        %1053 = vmatprep.mubr.f32.mxu0 0.0
        %v1054 = vand.u32 %v343, 4294901760
        %v1055 = vsub.f32 %v343, %v1054
        %1056 = vmatmul.mubr.f32.gmra.mrb[0].mxu0 %v1055
        %v1057 = vpop.f32.mrb[0].mxu0
        %v1058 = vadd.f32 %v850, %v1057
        %v1059 = vpop.f32.mrb[0].mxu0
        %1060 = vmatprep.mubr.f32.mxu0 0.0
        %v1061 = vand.u32 %v343, 4294901760
        %v1062 = vsub.f32 %v343, %v1061
        %1063 = vmatmul.mubr.f32.gmra.mrb[0].mxu0 %v1062
        %v1064 = vpop.f32.mrb[0].mxu0
        %v1065 = vadd.f32 %v856, %v1064
        %v1066 = vpop.f32.mrb[0].mxu0
        %1067 = vdwg.mxu0
        %1068 = vmatprep.subr.mxu0 0.0
        %v1069 = vand.u32 %v345, 4294901760
        %1070 = vmatpush1.xpose.msra.mxu0 %v1069
        %1071 = vmatprep.subr.mxu0 0.0
        %v1072 = vand.u32 %v347, 4294901760
        %1073 = vmatpush1.xpose.msra.mxu0 %v1072
        %1074 = vmatprep.subr.mxu0 0.0
        %v1075 = vand.u32 %v349, 4294901760
        %1076 = vmatpush1.xpose.msra.mxu0 %v1075
        %1077 = vmatprep.subr.mxu0 0.0
        %v1078 = vand.u32 %v351, 4294901760
        %1079 = vmatpush1.xpose.msra.mxu0 %v1078
        %1080 = vmatprep.subr.mxu0 0.0
        %v1081 = vand.u32 %v353, 4294901760
        %1082 = vmatpush1.xpose.msra.mxu0 %v1081
        %1083 = vmatprep.subr.mxu0 0.0
        %v1084 = vand.u32 %v355, 4294901760
        %1085 = vmatpush1.xpose.msra.mxu0 %v1084
        %1086 = vmatprep.subr.mxu0 0.0
        %v1087 = vand.u32 %v357, 4294901760
        %1088 = vmatpush1.xpose.msra.mxu0 %v1087
        %1089 = vmatprep.subr.mxu0 0.0
        %v1090 = vand.u32 %v359, 4294901760
        %1091 = vmatpush1.xpose.msra.mxu0 %v1090
        %1092 = vmatprep.subr.mxu0 0.0
        %v1093 = vand.u32 %v361, 4294901760
        %1094 = vmatpush1.xpose.msra.mxu0 %v1093
        %1095 = vmatprep.subr.mxu0 0.0
        %v1096 = vand.u32 %v363, 4294901760
        %1097 = vmatpush1.xpose.msra.mxu0 %v1096
        %1098 = vmatprep.subr.mxu0 0.0
        %v1099 = vand.u32 %v365, 4294901760
        %1100 = vmatpush1.xpose.msra.mxu0 %v1099
        %1101 = vmatprep.subr.mxu0 0.0
        %v1102 = vand.u32 %v367, 4294901760
        %1103 = vmatpush1.xpose.msra.mxu0 %v1102
        %1104 = vmatprep.subr.mxu0 0.0
        %v1105 = vand.u32 %v369, 4294901760
        %1106 = vmatpush1.xpose.msra.mxu0 %v1105
        %1107 = vmatprep.subr.mxu0 0.0
        %v1108 = vand.u32 %v371, 4294901760
        %1109 = vmatpush1.xpose.msra.mxu0 %v1108
        %1110 = vmatprep.subr.mxu0 0.0
        %v1111 = vand.u32 %v373, 4294901760
        %1112 = vmatpush1.xpose.msra.mxu0 %v1111
        %1113 = vmatprep.subr.mxu0 0.0
        %v1114 = vand.u32 %v375, 4294901760
        %1115 = vmatpush1.xpose.msra.mxu0 %v1114
        %1116 = vmatprep.subr.mxu0 0.0
        %1117 = vmatpush1.xpose.msra.mxu0 0.0
        %1118 = vmatprep.subr.mxu0 0.0
        %1119 = vmatpush1.xpose.msra.mxu0 0.0
        %1120 = vmatprep.subr.mxu0 0.0
        %1121 = vmatpush1.xpose.msra.mxu0 0.0
        %1122 = vmatprep.subr.mxu0 0.0
        %1123 = vmatpush1.xpose.msra.mxu0 0.0
        %1124 = vmatprep.subr.mxu0 0.0
        %1125 = vmatpush1.xpose.msra.mxu0 0.0
        %1126 = vmatprep.subr.mxu0 0.0
        %1127 = vmatpush1.xpose.msra.mxu0 0.0
        %1128 = vmatprep.subr.mxu0 0.0
        %1129 = vmatpush1.xpose.msra.mxu0 0.0
        %1130 = vmatprep.subr.mxu0 0.0
        %1131 = vmatpush1.xpose.msra.mxu0 0.0
        %1132 = vmatprep.subr.mxu0 0.0
        %1133 = vmatpush1.xpose.msra.mxu0 0.0
        %1134 = vmatprep.subr.mxu0 0.0
        %1135 = vmatpush1.xpose.msra.mxu0 0.0
        %1136 = vmatprep.subr.mxu0 0.0
        %1137 = vmatpush1.xpose.msra.mxu0 0.0
        %1138 = vmatprep.subr.mxu0 0.0
        %1139 = vmatpush1.xpose.msra.mxu0 0.0
        %1140 = vmatprep.subr.mxu0 0.0
        %1141 = vmatpush1.xpose.msra.mxu0 0.0
        %1142 = vmatprep.subr.mxu0 0.0
        %1143 = vmatpush1.xpose.msra.mxu0 0.0
        %1144 = vmatprep.subr.mxu0 0.0
        %1145 = vmatpush1.xpose.msra.mxu0 0.0
        %1146 = vmatprep.subr.mxu0 0.0
        %1147 = vmatpush1.xpose.msra.mxu0 0.0
        %1148 = vmatprep.mubr.f32.mxu0 0.0
        %v1149 = vand.u32 %v343, 4294901760
        %v1150 = vsub.f32 %v343, %v1149
        %v1151 = vand.u32 %v1150, 4294901760
        %1152 = vmatmul.mubr.f32.gmra.mrb[0].mxu0 %v1151
        %v1153 = vpop.f32.mrb[0].mxu0
        %v1154 = vadd.f32 %v960, %v1153
        %v1155 = vpop.f32.mrb[0].mxu0
        %1156 = vmatprep.mubr.f32.mxu0 0.0
        %v1157 = vand.u32 %v343, 4294901760
        %v1158 = vsub.f32 %v343, %v1157
        %v1159 = vand.u32 %v1158, 4294901760
        %1160 = vmatmul.mubr.f32.gmra.mrb[0].mxu0 %v1159
        %v1161 = vpop.f32.mrb[0].mxu0
        %v1162 = vadd.f32 %v967, %v1161
        %v1163 = vpop.f32.mrb[0].mxu0
        %1164 = vmatprep.mubr.f32.mxu0 0.0
        %v1165 = vand.u32 %v343, 4294901760
        %v1166 = vsub.f32 %v343, %v1165
        %v1167 = vand.u32 %v1166, 4294901760
        %1168 = vmatmul.mubr.f32.gmra.mrb[0].mxu0 %v1167
        %v1169 = vpop.f32.mrb[0].mxu0
        %v1170 = vadd.f32 %v974, %v1169
        %v1171 = vpop.f32.mrb[0].mxu0
        %1172 = vmatprep.mubr.f32.mxu0 0.0
        %v1173 = vand.u32 %v343, 4294901760
        %v1174 = vsub.f32 %v343, %v1173
        %v1175 = vand.u32 %v1174, 4294901760
        %1176 = vmatmul.mubr.f32.gmra.mrb[0].mxu0 %v1175
        %v1177 = vpop.f32.mrb[0].mxu0
        %v1178 = vadd.f32 %v981, %v1177
        %v1179 = vpop.f32.mrb[0].mxu0
        %1180 = vmatprep.mubr.f32.mxu0 0.0
        %v1181 = vand.u32 %v343, 4294901760
        %v1182 = vsub.f32 %v343, %v1181
        %v1183 = vand.u32 %v1182, 4294901760
        %1184 = vmatmul.mubr.f32.gmra.mrb[0].mxu0 %v1183
        %v1185 = vpop.f32.mrb[0].mxu0
        %v1186 = vadd.f32 %v988, %v1185
        %v1187 = vpop.f32.mrb[0].mxu0
        %1188 = vmatprep.mubr.f32.mxu0 0.0
        %v1189 = vand.u32 %v343, 4294901760
        %v1190 = vsub.f32 %v343, %v1189
        %v1191 = vand.u32 %v1190, 4294901760
        %1192 = vmatmul.mubr.f32.gmra.mrb[0].mxu0 %v1191
        %v1193 = vpop.f32.mrb[0].mxu0
        %v1194 = vadd.f32 %v995, %v1193
        %v1195 = vpop.f32.mrb[0].mxu0
        %1196 = vmatprep.mubr.f32.mxu0 0.0
        %v1197 = vand.u32 %v343, 4294901760
        %v1198 = vsub.f32 %v343, %v1197
        %v1199 = vand.u32 %v1198, 4294901760
        %1200 = vmatmul.mubr.f32.gmra.mrb[0].mxu0 %v1199
        %v1201 = vpop.f32.mrb[0].mxu0
        %v1202 = vadd.f32 %v1002, %v1201
        %v1203 = vpop.f32.mrb[0].mxu0
        %1204 = vmatprep.mubr.f32.mxu0 0.0
        %v1205 = vand.u32 %v343, 4294901760
        %v1206 = vsub.f32 %v343, %v1205
        %v1207 = vand.u32 %v1206, 4294901760
        %1208 = vmatmul.mubr.f32.gmra.mrb[0].mxu0 %v1207
        %v1209 = vpop.f32.mrb[0].mxu0
        %v1210 = vadd.f32 %v1009, %v1209
        %v1211 = vpop.f32.mrb[0].mxu0
        %1212 = vmatprep.mubr.f32.mxu0 0.0
        %v1213 = vand.u32 %v343, 4294901760
        %v1214 = vsub.f32 %v343, %v1213
        %v1215 = vand.u32 %v1214, 4294901760
        %1216 = vmatmul.mubr.f32.gmra.mrb[0].mxu0 %v1215
        %v1217 = vpop.f32.mrb[0].mxu0
        %v1218 = vadd.f32 %v1016, %v1217
        %v1219 = vpop.f32.mrb[0].mxu0
        %1220 = vmatprep.mubr.f32.mxu0 0.0
        %v1221 = vand.u32 %v343, 4294901760
        %v1222 = vsub.f32 %v343, %v1221
        %v1223 = vand.u32 %v1222, 4294901760
        %1224 = vmatmul.mubr.f32.gmra.mrb[0].mxu0 %v1223
        %v1225 = vpop.f32.mrb[0].mxu0
        %v1226 = vadd.f32 %v1023, %v1225
        %v1227 = vpop.f32.mrb[0].mxu0
        %1228 = vmatprep.mubr.f32.mxu0 0.0
        %v1229 = vand.u32 %v343, 4294901760
        %v1230 = vsub.f32 %v343, %v1229
        %v1231 = vand.u32 %v1230, 4294901760
        %1232 = vmatmul.mubr.f32.gmra.mrb[0].mxu0 %v1231
        %v1233 = vpop.f32.mrb[0].mxu0
        %v1234 = vadd.f32 %v1030, %v1233
        %v1235 = vpop.f32.mrb[0].mxu0
        %1236 = vmatprep.mubr.f32.mxu0 0.0
        %v1237 = vand.u32 %v343, 4294901760
        %v1238 = vsub.f32 %v343, %v1237
        %v1239 = vand.u32 %v1238, 4294901760
        %1240 = vmatmul.mubr.f32.gmra.mrb[0].mxu0 %v1239
        %v1241 = vpop.f32.mrb[0].mxu0
        %v1242 = vadd.f32 %v1037, %v1241
        %v1243 = vpop.f32.mrb[0].mxu0
        %1244 = vmatprep.mubr.f32.mxu0 0.0
        %v1245 = vand.u32 %v343, 4294901760
        %v1246 = vsub.f32 %v343, %v1245
        %v1247 = vand.u32 %v1246, 4294901760
        %1248 = vmatmul.mubr.f32.gmra.mrb[0].mxu0 %v1247
        %v1249 = vpop.f32.mrb[0].mxu0
        %v1250 = vadd.f32 %v1044, %v1249
        %v1251 = vpop.f32.mrb[0].mxu0
        %1252 = vmatprep.mubr.f32.mxu0 0.0
        %v1253 = vand.u32 %v343, 4294901760
        %v1254 = vsub.f32 %v343, %v1253
        %v1255 = vand.u32 %v1254, 4294901760
        %1256 = vmatmul.mubr.f32.gmra.mrb[0].mxu0 %v1255
        %v1257 = vpop.f32.mrb[0].mxu0
        %v1258 = vadd.f32 %v1051, %v1257
        %v1259 = vpop.f32.mrb[0].mxu0
        %1260 = vmatprep.mubr.f32.mxu0 0.0
        %v1261 = vand.u32 %v343, 4294901760
        %v1262 = vsub.f32 %v343, %v1261
        %v1263 = vand.u32 %v1262, 4294901760
        %1264 = vmatmul.mubr.f32.gmra.mrb[0].mxu0 %v1263
        %v1265 = vpop.f32.mrb[0].mxu0
        %v1266 = vadd.f32 %v1058, %v1265
        %v1267 = vpop.f32.mrb[0].mxu0
        %1268 = vmatprep.mubr.f32.mxu0 0.0
        %v1269 = vand.u32 %v343, 4294901760
        %v1270 = vsub.f32 %v343, %v1269
        %v1271 = vand.u32 %v1270, 4294901760
        %1272 = vmatmul.mubr.f32.gmra.mrb[0].mxu0 %v1271
        %v1273 = vpop.f32.mrb[0].mxu0
        %v1274 = vadd.f32 %v1065, %v1273
        %v1275 = vpop.f32.mrb[0].mxu0
        %1276 = vdwg.mxu0
        %1277 = vmatprep.subr.mxu0 0.0
        %v1278 = vand.u32 %v345, 4294901760
        %v1279 = vsub.f32 %v345, %v1278
        %v1280 = vand.u32 %v1279, 4294901760
        %1281 = vmatpush1.xpose.msra.mxu0 %v1280
        %1282 = vmatprep.subr.mxu0 0.0
        %v1283 = vand.u32 %v347, 4294901760
        %v1284 = vsub.f32 %v347, %v1283
        %v1285 = vand.u32 %v1284, 4294901760
        %1286 = vmatpush1.xpose.msra.mxu0 %v1285
        %1287 = vmatprep.subr.mxu0 0.0
        %v1288 = vand.u32 %v349, 4294901760
        %v1289 = vsub.f32 %v349, %v1288
        %v1290 = vand.u32 %v1289, 4294901760
        %1291 = vmatpush1.xpose.msra.mxu0 %v1290
        %1292 = vmatprep.subr.mxu0 0.0
        %v1293 = vand.u32 %v351, 4294901760
        %v1294 = vsub.f32 %v351, %v1293
        %v1295 = vand.u32 %v1294, 4294901760
        %1296 = vmatpush1.xpose.msra.mxu0 %v1295
        %1297 = vmatprep.subr.mxu0 0.0
        %v1298 = vand.u32 %v353, 4294901760
        %v1299 = vsub.f32 %v353, %v1298
        %v1300 = vand.u32 %v1299, 4294901760
        %1301 = vmatpush1.xpose.msra.mxu0 %v1300
        %1302 = vmatprep.subr.mxu0 0.0
        %v1303 = vand.u32 %v355, 4294901760
        %v1304 = vsub.f32 %v355, %v1303
        %v1305 = vand.u32 %v1304, 4294901760
        %1306 = vmatpush1.xpose.msra.mxu0 %v1305
        %1307 = vmatprep.subr.mxu0 0.0
        %v1308 = vand.u32 %v357, 4294901760
        %v1309 = vsub.f32 %v357, %v1308
        %v1310 = vand.u32 %v1309, 4294901760
        %1311 = vmatpush1.xpose.msra.mxu0 %v1310
        %1312 = vmatprep.subr.mxu0 0.0
        %v1313 = vand.u32 %v359, 4294901760
        %v1314 = vsub.f32 %v359, %v1313
        %v1315 = vand.u32 %v1314, 4294901760
        %1316 = vmatpush1.xpose.msra.mxu0 %v1315
        %1317 = vmatprep.subr.mxu0 0.0
        %v1318 = vand.u32 %v361, 4294901760
        %v1319 = vsub.f32 %v361, %v1318
        %v1320 = vand.u32 %v1319, 4294901760
        %1321 = vmatpush1.xpose.msra.mxu0 %v1320
        %1322 = vmatprep.subr.mxu0 0.0
        %v1323 = vand.u32 %v363, 4294901760
        %v1324 = vsub.f32 %v363, %v1323
        %v1325 = vand.u32 %v1324, 4294901760
        %1326 = vmatpush1.xpose.msra.mxu0 %v1325
        %1327 = vmatprep.subr.mxu0 0.0
        %v1328 = vand.u32 %v365, 4294901760
        %v1329 = vsub.f32 %v365, %v1328
        %v1330 = vand.u32 %v1329, 4294901760
        %1331 = vmatpush1.xpose.msra.mxu0 %v1330
        %1332 = vmatprep.subr.mxu0 0.0
        %v1333 = vand.u32 %v367, 4294901760
        %v1334 = vsub.f32 %v367, %v1333
        %v1335 = vand.u32 %v1334, 4294901760
        %1336 = vmatpush1.xpose.msra.mxu0 %v1335
        %1337 = vmatprep.subr.mxu0 0.0
        %v1338 = vand.u32 %v369, 4294901760
        %v1339 = vsub.f32 %v369, %v1338
        %v1340 = vand.u32 %v1339, 4294901760
        %1341 = vmatpush1.xpose.msra.mxu0 %v1340
        %1342 = vmatprep.subr.mxu0 0.0
        %v1343 = vand.u32 %v371, 4294901760
        %v1344 = vsub.f32 %v371, %v1343
        %v1345 = vand.u32 %v1344, 4294901760
        %1346 = vmatpush1.xpose.msra.mxu0 %v1345
        %1347 = vmatprep.subr.mxu0 0.0
        %v1348 = vand.u32 %v373, 4294901760
        %v1349 = vsub.f32 %v373, %v1348
        %v1350 = vand.u32 %v1349, 4294901760
        %1351 = vmatpush1.xpose.msra.mxu0 %v1350
        %1352 = vmatprep.subr.mxu0 0.0
        %v1353 = vand.u32 %v375, 4294901760
        %v1354 = vsub.f32 %v375, %v1353
        %v1355 = vand.u32 %v1354, 4294901760
        %1356 = vmatpush1.xpose.msra.mxu0 %v1355
        %1357 = vmatprep.subr.mxu0 0.0
        %1358 = vmatpush1.xpose.msra.mxu0 0.0
        %1359 = vmatprep.subr.mxu0 0.0
        %1360 = vmatpush1.xpose.msra.mxu0 0.0
        %1361 = vmatprep.subr.mxu0 0.0
        %1362 = vmatpush1.xpose.msra.mxu0 0.0
        %1363 = vmatprep.subr.mxu0 0.0
        %1364 = vmatpush1.xpose.msra.mxu0 0.0
        %1365 = vmatprep.subr.mxu0 0.0
        %1366 = vmatpush1.xpose.msra.mxu0 0.0
        %1367 = vmatprep.subr.mxu0 0.0
        %1368 = vmatpush1.xpose.msra.mxu0 0.0
        %1369 = vmatprep.subr.mxu0 0.0
        %1370 = vmatpush1.xpose.msra.mxu0 0.0
        %1371 = vmatprep.subr.mxu0 0.0
        %1372 = vmatpush1.xpose.msra.mxu0 0.0
        %1373 = vmatprep.subr.mxu0 0.0
        %1374 = vmatpush1.xpose.msra.mxu0 0.0
        %1375 = vmatprep.subr.mxu0 0.0
        %1376 = vmatpush1.xpose.msra.mxu0 0.0
        %1377 = vmatprep.subr.mxu0 0.0
        %1378 = vmatpush1.xpose.msra.mxu0 0.0
        %1379 = vmatprep.subr.mxu0 0.0
        %1380 = vmatpush1.xpose.msra.mxu0 0.0
        %1381 = vmatprep.subr.mxu0 0.0
        %1382 = vmatpush1.xpose.msra.mxu0 0.0
        %1383 = vmatprep.subr.mxu0 0.0
        %1384 = vmatpush1.xpose.msra.mxu0 0.0
        %1385 = vmatprep.subr.mxu0 0.0
        %1386 = vmatpush1.xpose.msra.mxu0 0.0
        %1387 = vmatprep.subr.mxu0 0.0
        %1388 = vmatpush1.xpose.msra.mxu0 0.0
        %1389 = vmatprep.mubr.f32.mxu0 0.0
        %v1390 = vand.u32 %v343, 4294901760
        %1391 = vmatmul.mubr.f32.gmra.mrb[0].mxu0 %v1390
        %v1392 = vpop.f32.mrb[0].mxu0
        %v1393 = vadd.f32 %v1154, %v1392
        %v1394 = vpop.f32.mrb[0].mxu0
        %1395 = vmatprep.mubr.f32.mxu0 0.0
        %v1396 = vand.u32 %v343, 4294901760
        %1397 = vmatmul.mubr.f32.gmra.mrb[0].mxu0 %v1396
        %v1398 = vpop.f32.mrb[0].mxu0
        %v1399 = vadd.f32 %v1162, %v1398
        %v1400 = vpop.f32.mrb[0].mxu0
        %1401 = vmatprep.mubr.f32.mxu0 0.0
        %v1402 = vand.u32 %v343, 4294901760
        %1403 = vmatmul.mubr.f32.gmra.mrb[0].mxu0 %v1402
        %v1404 = vpop.f32.mrb[0].mxu0
        %v1405 = vadd.f32 %v1170, %v1404
        %v1406 = vpop.f32.mrb[0].mxu0
        %1407 = vmatprep.mubr.f32.mxu0 0.0
        %v1408 = vand.u32 %v343, 4294901760
        %1409 = vmatmul.mubr.f32.gmra.mrb[0].mxu0 %v1408
        %v1410 = vpop.f32.mrb[0].mxu0
        %v1411 = vadd.f32 %v1178, %v1410
        %v1412 = vpop.f32.mrb[0].mxu0
        %1413 = vmatprep.mubr.f32.mxu0 0.0
        %v1414 = vand.u32 %v343, 4294901760
        %1415 = vmatmul.mubr.f32.gmra.mrb[0].mxu0 %v1414
        %v1416 = vpop.f32.mrb[0].mxu0
        %v1417 = vadd.f32 %v1186, %v1416
        %v1418 = vpop.f32.mrb[0].mxu0
        %1419 = vmatprep.mubr.f32.mxu0 0.0
        %v1420 = vand.u32 %v343, 4294901760
        %1421 = vmatmul.mubr.f32.gmra.mrb[0].mxu0 %v1420
        %v1422 = vpop.f32.mrb[0].mxu0
        %v1423 = vadd.f32 %v1194, %v1422
        %v1424 = vpop.f32.mrb[0].mxu0
        %1425 = vmatprep.mubr.f32.mxu0 0.0
        %v1426 = vand.u32 %v343, 4294901760
        %1427 = vmatmul.mubr.f32.gmra.mrb[0].mxu0 %v1426
        %v1428 = vpop.f32.mrb[0].mxu0
        %v1429 = vadd.f32 %v1202, %v1428
        %v1430 = vpop.f32.mrb[0].mxu0
        %1431 = vmatprep.mubr.f32.mxu0 0.0
        %v1432 = vand.u32 %v343, 4294901760
        %1433 = vmatmul.mubr.f32.gmra.mrb[0].mxu0 %v1432
        %v1434 = vpop.f32.mrb[0].mxu0
        %v1435 = vadd.f32 %v1210, %v1434
        %v1436 = vpop.f32.mrb[0].mxu0
        %1437 = vmatprep.mubr.f32.mxu0 0.0
        %v1438 = vand.u32 %v343, 4294901760
        %1439 = vmatmul.mubr.f32.gmra.mrb[0].mxu0 %v1438
        %v1440 = vpop.f32.mrb[0].mxu0
        %v1441 = vadd.f32 %v1218, %v1440
        %v1442 = vpop.f32.mrb[0].mxu0
        %1443 = vmatprep.mubr.f32.mxu0 0.0
        %v1444 = vand.u32 %v343, 4294901760
        %1445 = vmatmul.mubr.f32.gmra.mrb[0].mxu0 %v1444
        %v1446 = vpop.f32.mrb[0].mxu0
        %v1447 = vadd.f32 %v1226, %v1446
        %v1448 = vpop.f32.mrb[0].mxu0
        %1449 = vmatprep.mubr.f32.mxu0 0.0
        %v1450 = vand.u32 %v343, 4294901760
        %1451 = vmatmul.mubr.f32.gmra.mrb[0].mxu0 %v1450
        %v1452 = vpop.f32.mrb[0].mxu0
        %v1453 = vadd.f32 %v1234, %v1452
        %v1454 = vpop.f32.mrb[0].mxu0
        %1455 = vmatprep.mubr.f32.mxu0 0.0
        %v1456 = vand.u32 %v343, 4294901760
        %1457 = vmatmul.mubr.f32.gmra.mrb[0].mxu0 %v1456
        %v1458 = vpop.f32.mrb[0].mxu0
        %v1459 = vadd.f32 %v1242, %v1458
        %v1460 = vpop.f32.mrb[0].mxu0
        %1461 = vmatprep.mubr.f32.mxu0 0.0
        %v1462 = vand.u32 %v343, 4294901760
        %1463 = vmatmul.mubr.f32.gmra.mrb[0].mxu0 %v1462
        %v1464 = vpop.f32.mrb[0].mxu0
        %v1465 = vadd.f32 %v1250, %v1464
        %v1466 = vpop.f32.mrb[0].mxu0
        %1467 = vmatprep.mubr.f32.mxu0 0.0
        %v1468 = vand.u32 %v343, 4294901760
        %1469 = vmatmul.mubr.f32.gmra.mrb[0].mxu0 %v1468
        %v1470 = vpop.f32.mrb[0].mxu0
        %v1471 = vadd.f32 %v1258, %v1470
        %v1472 = vpop.f32.mrb[0].mxu0
        %1473 = vmatprep.mubr.f32.mxu0 0.0
        %v1474 = vand.u32 %v343, 4294901760
        %1475 = vmatmul.mubr.f32.gmra.mrb[0].mxu0 %v1474
        %v1476 = vpop.f32.mrb[0].mxu0
        %v1477 = vadd.f32 %v1266, %v1476
        %v1478 = vpop.f32.mrb[0].mxu0
        %1479 = vmatprep.mubr.f32.mxu0 0.0
        %v1480 = vand.u32 %v343, 4294901760
        %1481 = vmatmul.mubr.f32.gmra.mrb[0].mxu0 %v1480
        %v1482 = vpop.f32.mrb[0].mxu0
        %v1483 = vadd.f32 %v1274, %v1482
        %v1484 = vpop.f32.mrb[0].mxu0
        %1485 = vdwg.mxu0
        %1486 = vmatprep.subr.mxu0 0.0
        %v1487 = vand.u32 %v345, 4294901760
        %1488 = vmatpush1.xpose.msra.mxu0 %v1487
        %1489 = vmatprep.subr.mxu0 0.0
        %v1490 = vand.u32 %v347, 4294901760
        %1491 = vmatpush1.xpose.msra.mxu0 %v1490
        %1492 = vmatprep.subr.mxu0 0.0
        %v1493 = vand.u32 %v349, 4294901760
        %1494 = vmatpush1.xpose.msra.mxu0 %v1493
        %1495 = vmatprep.subr.mxu0 0.0
        %v1496 = vand.u32 %v351, 4294901760
        %1497 = vmatpush1.xpose.msra.mxu0 %v1496
        %1498 = vmatprep.subr.mxu0 0.0
        %v1499 = vand.u32 %v353, 4294901760
        %1500 = vmatpush1.xpose.msra.mxu0 %v1499
        %1501 = vmatprep.subr.mxu0 0.0
        %v1502 = vand.u32 %v355, 4294901760
        %1503 = vmatpush1.xpose.msra.mxu0 %v1502
        %1504 = vmatprep.subr.mxu0 0.0
        %v1505 = vand.u32 %v357, 4294901760
        %1506 = vmatpush1.xpose.msra.mxu0 %v1505
        %1507 = vmatprep.subr.mxu0 0.0
        %v1508 = vand.u32 %v359, 4294901760
        %1509 = vmatpush1.xpose.msra.mxu0 %v1508
        %1510 = vmatprep.subr.mxu0 0.0
        %v1511 = vand.u32 %v361, 4294901760
        %1512 = vmatpush1.xpose.msra.mxu0 %v1511
        %1513 = vmatprep.subr.mxu0 0.0
        %v1514 = vand.u32 %v363, 4294901760
        %1515 = vmatpush1.xpose.msra.mxu0 %v1514
        %1516 = vmatprep.subr.mxu0 0.0
        %v1517 = vand.u32 %v365, 4294901760
        %1518 = vmatpush1.xpose.msra.mxu0 %v1517
        %1519 = vmatprep.subr.mxu0 0.0
        %v1520 = vand.u32 %v367, 4294901760
        %1521 = vmatpush1.xpose.msra.mxu0 %v1520
        %1522 = vmatprep.subr.mxu0 0.0
        %v1523 = vand.u32 %v369, 4294901760
        %1524 = vmatpush1.xpose.msra.mxu0 %v1523
        %1525 = vmatprep.subr.mxu0 0.0
        %v1526 = vand.u32 %v371, 4294901760
        %1527 = vmatpush1.xpose.msra.mxu0 %v1526
        %1528 = vmatprep.subr.mxu0 0.0
        %v1529 = vand.u32 %v373, 4294901760
        %1530 = vmatpush1.xpose.msra.mxu0 %v1529
        %1531 = vmatprep.subr.mxu0 0.0
        %v1532 = vand.u32 %v375, 4294901760
        %1533 = vmatpush1.xpose.msra.mxu0 %v1532
        %1534 = vmatprep.subr.mxu0 0.0
        %1535 = vmatpush1.xpose.msra.mxu0 0.0
        %1536 = vmatprep.subr.mxu0 0.0
        %1537 = vmatpush1.xpose.msra.mxu0 0.0
        %1538 = vmatprep.subr.mxu0 0.0
        %1539 = vmatpush1.xpose.msra.mxu0 0.0
        %1540 = vmatprep.subr.mxu0 0.0
        %1541 = vmatpush1.xpose.msra.mxu0 0.0
        %1542 = vmatprep.subr.mxu0 0.0
        %1543 = vmatpush1.xpose.msra.mxu0 0.0
        %1544 = vmatprep.subr.mxu0 0.0
        %1545 = vmatpush1.xpose.msra.mxu0 0.0
        %1546 = vmatprep.subr.mxu0 0.0
        %1547 = vmatpush1.xpose.msra.mxu0 0.0
        %1548 = vmatprep.subr.mxu0 0.0
        %1549 = vmatpush1.xpose.msra.mxu0 0.0
        %1550 = vmatprep.subr.mxu0 0.0
        %1551 = vmatpush1.xpose.msra.mxu0 0.0
        %1552 = vmatprep.subr.mxu0 0.0
        %1553 = vmatpush1.xpose.msra.mxu0 0.0
        %1554 = vmatprep.subr.mxu0 0.0
        %1555 = vmatpush1.xpose.msra.mxu0 0.0
        %1556 = vmatprep.subr.mxu0 0.0
        %1557 = vmatpush1.xpose.msra.mxu0 0.0
        %1558 = vmatprep.subr.mxu0 0.0
        %1559 = vmatpush1.xpose.msra.mxu0 0.0
        %1560 = vmatprep.subr.mxu0 0.0
        %1561 = vmatpush1.xpose.msra.mxu0 0.0
        %1562 = vmatprep.subr.mxu0 0.0
        %1563 = vmatpush1.xpose.msra.mxu0 0.0
        %1564 = vmatprep.subr.mxu0 0.0
        %1565 = vmatpush1.xpose.msra.mxu0 0.0
        %1566 = vmatprep.mubr.f32.mxu0 0.0
        %v1567 = vand.u32 %v343, 4294901760
        %1568 = vmatmul.mubr.f32.gmra.mrb[0].mxu0 %v1567
        %v1569 = vpop.f32.mrb[0].mxu0
        %v1570 = vadd.f32 %v1393, %v1569
        %v1571 = vpop.f32.mrb[0].mxu0
        %1572 = vmatprep.mubr.f32.mxu0 0.0
        %v1573 = vand.u32 %v343, 4294901760
        %1574 = vmatmul.mubr.f32.gmra.mrb[0].mxu0 %v1573
        %v1575 = vpop.f32.mrb[0].mxu0
        %v1576 = vadd.f32 %v1399, %v1575
        %v1577 = vpop.f32.mrb[0].mxu0
        %1578 = vmatprep.mubr.f32.mxu0 0.0
        %v1579 = vand.u32 %v343, 4294901760
        %1580 = vmatmul.mubr.f32.gmra.mrb[0].mxu0 %v1579
        %v1581 = vpop.f32.mrb[0].mxu0
        %v1582 = vadd.f32 %v1405, %v1581
        %v1583 = vpop.f32.mrb[0].mxu0
        %1584 = vmatprep.mubr.f32.mxu0 0.0
        %v1585 = vand.u32 %v343, 4294901760
        %1586 = vmatmul.mubr.f32.gmra.mrb[0].mxu0 %v1585
        %v1587 = vpop.f32.mrb[0].mxu0
        %v1588 = vadd.f32 %v1411, %v1587
        %v1589 = vpop.f32.mrb[0].mxu0
        %1590 = vmatprep.mubr.f32.mxu0 0.0
        %v1591 = vand.u32 %v343, 4294901760
        %1592 = vmatmul.mubr.f32.gmra.mrb[0].mxu0 %v1591
        %v1593 = vpop.f32.mrb[0].mxu0
        %v1594 = vadd.f32 %v1417, %v1593
        %v1595 = vpop.f32.mrb[0].mxu0
        %1596 = vmatprep.mubr.f32.mxu0 0.0
        %v1597 = vand.u32 %v343, 4294901760
        %1598 = vmatmul.mubr.f32.gmra.mrb[0].mxu0 %v1597
        %v1599 = vpop.f32.mrb[0].mxu0
        %v1600 = vadd.f32 %v1423, %v1599
        %v1601 = vpop.f32.mrb[0].mxu0
        %1602 = vmatprep.mubr.f32.mxu0 0.0
        %v1603 = vand.u32 %v343, 4294901760
        %1604 = vmatmul.mubr.f32.gmra.mrb[0].mxu0 %v1603
        %v1605 = vpop.f32.mrb[0].mxu0
        %v1606 = vadd.f32 %v1429, %v1605
        %v1607 = vpop.f32.mrb[0].mxu0
        %1608 = vmatprep.mubr.f32.mxu0 0.0
        %v1609 = vand.u32 %v343, 4294901760
        %1610 = vmatmul.mubr.f32.gmra.mrb[0].mxu0 %v1609
        %v1611 = vpop.f32.mrb[0].mxu0
        %v1612 = vadd.f32 %v1435, %v1611
        %v1613 = vpop.f32.mrb[0].mxu0
        %1614 = vmatprep.mubr.f32.mxu0 0.0
        %v1615 = vand.u32 %v343, 4294901760
        %1616 = vmatmul.mubr.f32.gmra.mrb[0].mxu0 %v1615
        %v1617 = vpop.f32.mrb[0].mxu0
        %v1618 = vadd.f32 %v1441, %v1617
        %v1619 = vpop.f32.mrb[0].mxu0
        %1620 = vmatprep.mubr.f32.mxu0 0.0
        %v1621 = vand.u32 %v343, 4294901760
        %1622 = vmatmul.mubr.f32.gmra.mrb[0].mxu0 %v1621
        %v1623 = vpop.f32.mrb[0].mxu0
        %v1624 = vadd.f32 %v1447, %v1623
        %v1625 = vpop.f32.mrb[0].mxu0
        %1626 = vmatprep.mubr.f32.mxu0 0.0
        %v1627 = vand.u32 %v343, 4294901760
        %1628 = vmatmul.mubr.f32.gmra.mrb[0].mxu0 %v1627
        %v1629 = vpop.f32.mrb[0].mxu0
        %v1630 = vadd.f32 %v1453, %v1629
        %v1631 = vpop.f32.mrb[0].mxu0
        %1632 = vmatprep.mubr.f32.mxu0 0.0
        %v1633 = vand.u32 %v343, 4294901760
        %1634 = vmatmul.mubr.f32.gmra.mrb[0].mxu0 %v1633
        %v1635 = vpop.f32.mrb[0].mxu0
        %v1636 = vadd.f32 %v1459, %v1635
        %v1637 = vpop.f32.mrb[0].mxu0
        %1638 = vmatprep.mubr.f32.mxu0 0.0
        %v1639 = vand.u32 %v343, 4294901760
        %1640 = vmatmul.mubr.f32.gmra.mrb[0].mxu0 %v1639
        %v1641 = vpop.f32.mrb[0].mxu0
        %v1642 = vadd.f32 %v1465, %v1641
        %v1643 = vpop.f32.mrb[0].mxu0
        %1644 = vmatprep.mubr.f32.mxu0 0.0
        %v1645 = vand.u32 %v343, 4294901760
        %1646 = vmatmul.mubr.f32.gmra.mrb[0].mxu0 %v1645
        %v1647 = vpop.f32.mrb[0].mxu0
        %v1648 = vadd.f32 %v1471, %v1647
        %v1649 = vpop.f32.mrb[0].mxu0
        %1650 = vmatprep.mubr.f32.mxu0 0.0
        %v1651 = vand.u32 %v343, 4294901760
        %1652 = vmatmul.mubr.f32.gmra.mrb[0].mxu0 %v1651
        %v1653 = vpop.f32.mrb[0].mxu0
        %v1654 = vadd.f32 %v1477, %v1653
        %v1655 = vpop.f32.mrb[0].mxu0
        %1656 = vmatprep.mubr.f32.mxu0 0.0
        %v1657 = vand.u32 %v343, 4294901760
        %1658 = vmatmul.mubr.f32.gmra.mrb[0].mxu0 %v1657
        %v1659 = vpop.f32.mrb[0].mxu0
        %v1660 = vadd.f32 %v1483, %v1659
        %v1661 = vpop.f32.mrb[0].mxu0
        %1662 = vdwg.mxu0
        %v1663 = vsub.f32 %v264, %v1570
        %v1664 = vsub.f32 %v269, %v1576
        %v1665 = vsub.f32 %v274, %v1582
        %v1666 = vsub.f32 %v279, %v1588
        %v1667 = vsub.f32 %v284, %v1594
        %v1668 = vsub.f32 %v289, %v1600
        %v1669 = vsub.f32 %v294, %v1606
        %v1670 = vsub.f32 %v299, %v1612
        %v1671 = vsub.f32 %v304, %v1618
        %v1672 = vsub.f32 %v309, %v1624
        %v1673 = vsub.f32 %v314, %v1630
        %v1674 = vsub.f32 %v319, %v1636
        %v1675 = vsub.f32 %v324, %v1642
        %v1676 = vsub.f32 %v329, %v1648
        %v1677 = vsub.f32 %v334, %v1654
        %v1678 = vsub.f32 %v339, %v1660
        %v1679 = vand.u32 2147483647, %v1663
        %v1680 = vand.u32 2147483647, %v1664
        %v1681 = vand.u32 2147483647, %v1665
        %v1682 = vand.u32 2147483647, %v1666
        %v1683 = vand.u32 2147483647, %v1667
        %v1684 = vand.u32 2147483647, %v1668
        %v1685 = vand.u32 2147483647, %v1669
        %v1686 = vand.u32 2147483647, %v1670
        %v1687 = vand.u32 2147483647, %v1671
        %v1688 = vand.u32 2147483647, %v1672
        %v1689 = vand.u32 2147483647, %v1673
        %v1690 = vand.u32 2147483647, %v1674
        %v1691 = vand.u32 2147483647, %v1675
        %v1692 = vand.u32 2147483647, %v1676
        %v1693 = vand.u32 2147483647, %v1677
        %v1694 = vand.u32 2147483647, %v1678
        %v1695 = vmin.f32 %v1679, 5.0
        %v1696 = vmin.f32 %v1680, 5.0
        %v1697 = vmin.f32 %v1681, 5.0
        %v1698 = vmin.f32 %v1682, 5.0
        %v1699 = vmin.f32 %v1683, 5.0
        %v1700 = vmin.f32 %v1684, 5.0
        %v1701 = vmin.f32 %v1685, 5.0
        %v1702 = vmin.f32 %v1686, 5.0
        %v1703 = vmin.f32 %v1687, 5.0
        %v1704 = vmin.f32 %v1688, 5.0
        %v1705 = vmin.f32 %v1689, 5.0
        %v1706 = vmin.f32 %v1690, 5.0
        %v1707 = vmin.f32 %v1691, 5.0
        %v1708 = vmin.f32 %v1692, 5.0
        %v1709 = vmin.f32 %v1693, 5.0
        %v1710 = vmin.f32 %v1694, 5.0
        %vm1711 = vcmask 31744
        %v1713 = vsel %vm1711, %v229, 0
        %v1716 = vsel %vm1711, %v230, 0
        %v1719 = vsel %vm1711, %v231, 0
        %v1722 = vsel %vm1711, %v232, 0
        %v1725 = vsel %vm1711, %v233, 0
        %v1728 = vsel %vm1711, %v234, 0
        %v1731 = vsel %vm1711, %v235, 0
        %v1734 = vsel %vm1711, %v236, 0
        %v1737 = vsel %vm1711, %v237, 0
        %v1740 = vsel %vm1711, %v238, 0
        %v1743 = vsel %vm1711, %v239, 0
        %v1746 = vsel %vm1711, %v240, 0
        %v1749 = vsel %vm1711, %v241, 0
        %v1752 = vsel %vm1711, %v242, 0
        %v1755 = vsel %vm1711, %v243, 0
        %v1758 = vsel %vm1711, %v244, 0
        %1760 = vmatprep.subr.mxu0 0.0
        %1761 = vmatpush1.xpose.msra.mxu0 %v1713
        %1762 = vmatprep.subr.mxu0 0.0
        %1763 = vmatpush1.xpose.msra.mxu0 %v1716
        %1764 = vmatprep.subr.mxu0 0.0
        %1765 = vmatpush1.xpose.msra.mxu0 %v1719
        %1766 = vmatprep.subr.mxu0 0.0
        %1767 = vmatpush1.xpose.msra.mxu0 %v1722
        %1768 = vmatprep.subr.mxu0 0.0
        %1769 = vmatpush1.xpose.msra.mxu0 %v1725
        %1770 = vmatprep.subr.mxu0 0.0
        %1771 = vmatpush1.xpose.msra.mxu0 %v1728
        %1772 = vmatprep.subr.mxu0 0.0
        %1773 = vmatpush1.xpose.msra.mxu0 %v1731
        %1774 = vmatprep.subr.mxu0 0.0
        %1775 = vmatpush1.xpose.msra.mxu0 %v1734
        %1776 = vmatprep.subr.mxu0 0.0
        %1777 = vmatpush1.xpose.msra.mxu0 %v1737
        %1778 = vmatprep.subr.mxu0 0.0
        %1779 = vmatpush1.xpose.msra.mxu0 %v1740
        %1780 = vmatprep.subr.mxu0 0.0
        %1781 = vmatpush1.xpose.msra.mxu0 %v1743
        %1782 = vmatprep.subr.mxu0 0.0
        %1783 = vmatpush1.xpose.msra.mxu0 %v1746
        %1784 = vmatprep.subr.mxu0 0.0
        %1785 = vmatpush1.xpose.msra.mxu0 %v1749
        %1786 = vmatprep.subr.mxu0 0.0
        %1787 = vmatpush1.xpose.msra.mxu0 %v1752
        %1788 = vmatprep.subr.mxu0 0.0
        %1789 = vmatpush1.xpose.msra.mxu0 %v1755
        %1790 = vmatprep.subr.mxu0 0.0
        %1791 = vmatpush1.xpose.msra.mxu0 %v1758
        %1792 = vmatprep.subr.mxu0 0.0
        %1793 = vmatpush1.xpose.msra.mxu0 0.0
        %1794 = vmatprep.subr.mxu0 0.0
        %1795 = vmatpush1.xpose.msra.mxu0 0.0
        %1796 = vmatprep.subr.mxu0 0.0
        %1797 = vmatpush1.xpose.msra.mxu0 0.0
        %1798 = vmatprep.subr.mxu0 0.0
        %1799 = vmatpush1.xpose.msra.mxu0 0.0
        %1800 = vmatprep.subr.mxu0 0.0
        %1801 = vmatpush1.xpose.msra.mxu0 0.0
        %1802 = vmatprep.subr.mxu0 0.0
        %1803 = vmatpush1.xpose.msra.mxu0 0.0
        %1804 = vmatprep.subr.mxu0 0.0
        %1805 = vmatpush1.xpose.msra.mxu0 0.0
        %1806 = vmatprep.subr.mxu0 0.0
        %1807 = vmatpush1.xpose.msra.mxu0 0.0
        %1808 = vmatprep.subr.mxu0 0.0
        %1809 = vmatpush1.xpose.msra.mxu0 0.0
        %1810 = vmatprep.subr.mxu0 0.0
        %1811 = vmatpush1.xpose.msra.mxu0 0.0
        %1812 = vmatprep.subr.mxu0 0.0
        %1813 = vmatpush1.xpose.msra.mxu0 0.0
        %1814 = vmatprep.subr.mxu0 0.0
        %1815 = vmatpush1.xpose.msra.mxu0 0.0
        %1816 = vmatprep.subr.mxu0 0.0
        %1817 = vmatpush1.xpose.msra.mxu0 0.0
        %1818 = vmatprep.subr.mxu0 0.0
        %1819 = vmatpush1.xpose.msra.mxu0 0.0
        %1820 = vmatprep.subr.mxu0 0.0
        %1821 = vmatpush1.xpose.msra.mxu0 0.0
        %1822 = vmatprep.subr.mxu0 0.0
        %1823 = vmatpush1.xpose.msra.mxu0 0.0
        %1824 = vmatprep.mubr.f32.mxu0 0.0
        %1825 = vmatmul.mubr.f32.gmra.mrb[0].mxu0 %v1713
        %v1826 = vpop.f32.mrb[0].mxu0
        %v1827 = vadd.f32 0.0, %v1826
        %v1828 = vpop.f32.mrb[0].mxu0
        %1829 = vmatprep.mubr.f32.mxu0 0.0
        %1830 = vmatmul.mubr.f32.gmra.mrb[0].mxu0 %v1716
        %v1831 = vpop.f32.mrb[0].mxu0
        %v1832 = vadd.f32 0.0, %v1831
        %v1833 = vpop.f32.mrb[0].mxu0
        %1834 = vmatprep.mubr.f32.mxu0 0.0
        %1835 = vmatmul.mubr.f32.gmra.mrb[0].mxu0 %v1719
        %v1836 = vpop.f32.mrb[0].mxu0
        %v1837 = vadd.f32 0.0, %v1836
        %v1838 = vpop.f32.mrb[0].mxu0
        %1839 = vmatprep.mubr.f32.mxu0 0.0
        %1840 = vmatmul.mubr.f32.gmra.mrb[0].mxu0 %v1722
        %v1841 = vpop.f32.mrb[0].mxu0
        %v1842 = vadd.f32 0.0, %v1841
        %v1843 = vpop.f32.mrb[0].mxu0
        %1844 = vmatprep.mubr.f32.mxu0 0.0
        %1845 = vmatmul.mubr.f32.gmra.mrb[0].mxu0 %v1725
        %v1846 = vpop.f32.mrb[0].mxu0
        %v1847 = vadd.f32 0.0, %v1846
        %v1848 = vpop.f32.mrb[0].mxu0
        %1849 = vmatprep.mubr.f32.mxu0 0.0
        %1850 = vmatmul.mubr.f32.gmra.mrb[0].mxu0 %v1728
        %v1851 = vpop.f32.mrb[0].mxu0
        %v1852 = vadd.f32 0.0, %v1851
        %v1853 = vpop.f32.mrb[0].mxu0
        %1854 = vmatprep.mubr.f32.mxu0 0.0
        %1855 = vmatmul.mubr.f32.gmra.mrb[0].mxu0 %v1731
        %v1856 = vpop.f32.mrb[0].mxu0
        %v1857 = vadd.f32 0.0, %v1856
        %v1858 = vpop.f32.mrb[0].mxu0
        %1859 = vmatprep.mubr.f32.mxu0 0.0
        %1860 = vmatmul.mubr.f32.gmra.mrb[0].mxu0 %v1734
        %v1861 = vpop.f32.mrb[0].mxu0
        %v1862 = vadd.f32 0.0, %v1861
        %v1863 = vpop.f32.mrb[0].mxu0
        %1864 = vmatprep.mubr.f32.mxu0 0.0
        %1865 = vmatmul.mubr.f32.gmra.mrb[0].mxu0 %v1737
        %v1866 = vpop.f32.mrb[0].mxu0
        %v1867 = vadd.f32 0.0, %v1866
        %v1868 = vpop.f32.mrb[0].mxu0
        %1869 = vmatprep.mubr.f32.mxu0 0.0
        %1870 = vmatmul.mubr.f32.gmra.mrb[0].mxu0 %v1740
        %v1871 = vpop.f32.mrb[0].mxu0
        %v1872 = vadd.f32 0.0, %v1871
        %v1873 = vpop.f32.mrb[0].mxu0
        %1874 = vmatprep.mubr.f32.mxu0 0.0
        %1875 = vmatmul.mubr.f32.gmra.mrb[0].mxu0 %v1743
        %v1876 = vpop.f32.mrb[0].mxu0
        %v1877 = vadd.f32 0.0, %v1876
        %v1878 = vpop.f32.mrb[0].mxu0
        %1879 = vmatprep.mubr.f32.mxu0 0.0
        %1880 = vmatmul.mubr.f32.gmra.mrb[0].mxu0 %v1746
        %v1881 = vpop.f32.mrb[0].mxu0
        %v1882 = vadd.f32 0.0, %v1881
        %v1883 = vpop.f32.mrb[0].mxu0
        %1884 = vmatprep.mubr.f32.mxu0 0.0
        %1885 = vmatmul.mubr.f32.gmra.mrb[0].mxu0 %v1749
        %v1886 = vpop.f32.mrb[0].mxu0
        %v1887 = vadd.f32 0.0, %v1886
        %v1888 = vpop.f32.mrb[0].mxu0
        %1889 = vmatprep.mubr.f32.mxu0 0.0
        %1890 = vmatmul.mubr.f32.gmra.mrb[0].mxu0 %v1752
        %v1891 = vpop.f32.mrb[0].mxu0
        %v1892 = vadd.f32 0.0, %v1891
        %v1893 = vpop.f32.mrb[0].mxu0
        %1894 = vmatprep.mubr.f32.mxu0 0.0
        %1895 = vmatmul.mubr.f32.gmra.mrb[0].mxu0 %v1755
        %v1896 = vpop.f32.mrb[0].mxu0
        %v1897 = vadd.f32 0.0, %v1896
        %v1898 = vpop.f32.mrb[0].mxu0
        %1899 = vmatprep.mubr.f32.mxu0 0.0
        %1900 = vmatmul.mubr.f32.gmra.mrb[0].mxu0 %v1758
        %v1901 = vpop.f32.mrb[0].mxu0
        %v1902 = vadd.f32 0.0, %v1901
        %v1903 = vpop.f32.mrb[0].mxu0
        %1904 = vdwg.mxu0
        %vm1905 = vcmp.lt.f32.partialorder %v1827, 0.5
        %vm1906 = vcmp.lt.f32.partialorder %v1832, 0.5
        %vm1907 = vcmp.lt.f32.partialorder %v1837, 0.5
        %vm1908 = vcmp.lt.f32.partialorder %v1842, 0.5
        %vm1909 = vcmp.lt.f32.partialorder %v1847, 0.5
        %vm1910 = vcmp.lt.f32.partialorder %v1852, 0.5
        %vm1911 = vcmp.lt.f32.partialorder %v1857, 0.5
        %vm1912 = vcmp.lt.f32.partialorder %v1862, 0.5
        %vm1913 = vcmp.lt.f32.partialorder %v1867, 0.5
        %vm1914 = vcmp.lt.f32.partialorder %v1872, 0.5
        %vm1915 = vcmp.lt.f32.partialorder %v1877, 0.5
        %vm1916 = vcmp.lt.f32.partialorder %v1882, 0.5
        %vm1917 = vcmp.lt.f32.partialorder %v1887, 0.5
        %vm1918 = vcmp.lt.f32.partialorder %v1892, 0.5
        %vm1919 = vcmp.lt.f32.partialorder %v1897, 0.5
        %vm1920 = vcmp.lt.f32.partialorder %v1902, 0.5
        %v1921 = vsel %vm1905, 1, 0
        %v1922 = vsel %vm1906, 1, 0
        %v1923 = vsel %vm1907, 1, 0
        %v1924 = vsel %vm1908, 1, 0
        %v1925 = vsel %vm1909, 1, 0
        %v1926 = vsel %vm1910, 1, 0
        %v1927 = vsel %vm1911, 1, 0
        %v1928 = vsel %vm1912, 1, 0
        %v1929 = vsel %vm1913, 1, 0
        %v1930 = vsel %vm1914, 1, 0
        %v1931 = vsel %vm1915, 1, 0
        %v1932 = vsel %vm1916, 1, 0
        %v1933 = vsel %vm1917, 1, 0
        %v1934 = vsel %vm1918, 1, 0
        %v1935 = vsel %vm1919, 1, 0
        %v1936 = vsel %vm1920, 1, 0
        %v1937 = vcvt.s32.f32 %v1921
        %v1938 = vcvt.s32.f32 %v1922
        %v1939 = vcvt.s32.f32 %v1923
        %v1940 = vcvt.s32.f32 %v1924
        %v1941 = vcvt.s32.f32 %v1925
        %v1942 = vcvt.s32.f32 %v1926
        %v1943 = vcvt.s32.f32 %v1927
        %v1944 = vcvt.s32.f32 %v1928
        %v1945 = vcvt.s32.f32 %v1929
        %v1946 = vcvt.s32.f32 %v1930
        %v1947 = vcvt.s32.f32 %v1931
        %v1948 = vcvt.s32.f32 %v1932
        %v1949 = vcvt.s32.f32 %v1933
        %v1950 = vcvt.s32.f32 %v1934
        %v1951 = vcvt.s32.f32 %v1935
        %v1952 = vcvt.s32.f32 %v1936
        %v1953 = vsub.f32 1.0, %v1937
        %v1954 = vsub.f32 1.0, %v1938
        %v1955 = vsub.f32 1.0, %v1939
        %v1956 = vsub.f32 1.0, %v1940
        %v1957 = vsub.f32 1.0, %v1941
        %v1958 = vsub.f32 1.0, %v1942
        %v1959 = vsub.f32 1.0, %v1943
        %v1960 = vsub.f32 1.0, %v1944
        %v1961 = vsub.f32 1.0, %v1945
        %v1962 = vsub.f32 1.0, %v1946
        %v1963 = vsub.f32 1.0, %v1947
        %v1964 = vsub.f32 1.0, %v1948
        %v1965 = vsub.f32 1.0, %v1949
        %v1966 = vsub.f32 1.0, %v1950
        %v1967 = vsub.f32 1.0, %v1951
        %v1968 = vsub.f32 1.0, %v1952
        %v1969 = vsub.f32 1.0, %v1695
        %v1970 = vsub.f32 1.0, %v1696
        %v1971 = vsub.f32 1.0, %v1697
        %v1972 = vsub.f32 1.0, %v1698
        %v1973 = vsub.f32 1.0, %v1699
        %v1974 = vsub.f32 1.0, %v1700
        %v1975 = vsub.f32 1.0, %v1701
        %v1976 = vsub.f32 1.0, %v1702
        %v1977 = vsub.f32 1.0, %v1703
        %v1978 = vsub.f32 1.0, %v1704
        %v1979 = vsub.f32 1.0, %v1705
        %v1980 = vsub.f32 1.0, %v1706
        %v1981 = vsub.f32 1.0, %v1707
        %v1982 = vsub.f32 1.0, %v1708
        %v1983 = vsub.f32 1.0, %v1709
        %v1984 = vsub.f32 1.0, %v1710
        %v1985 = vmax.f32 %v1969, 0.0
        %v1986 = vmax.f32 %v1970, 0.0
        %v1987 = vmax.f32 %v1971, 0.0
        %v1988 = vmax.f32 %v1972, 0.0
        %v1989 = vmax.f32 %v1973, 0.0
        %v1990 = vmax.f32 %v1974, 0.0
        %v1991 = vmax.f32 %v1975, 0.0
        %v1992 = vmax.f32 %v1976, 0.0
        %v1993 = vmax.f32 %v1977, 0.0
        %v1994 = vmax.f32 %v1978, 0.0
        %v1995 = vmax.f32 %v1979, 0.0
        %v1996 = vmax.f32 %v1980, 0.0
        %v1997 = vmax.f32 %v1981, 0.0
        %v1998 = vmax.f32 %v1982, 0.0
        %v1999 = vmax.f32 %v1983, 0.0
        %v2000 = vmax.f32 %v1984, 0.0
        %vm2001 = vcmp.lt.f32.partialorder %v1985, 0.1
        %vm2002 = vcmp.lt.f32.partialorder %v1986, 0.1
        %vm2003 = vcmp.lt.f32.partialorder %v1987, 0.1
        %vm2004 = vcmp.lt.f32.partialorder %v1988, 0.1
        %vm2005 = vcmp.lt.f32.partialorder %v1989, 0.1
        %vm2006 = vcmp.lt.f32.partialorder %v1990, 0.1
        %vm2007 = vcmp.lt.f32.partialorder %v1991, 0.1
        %vm2008 = vcmp.lt.f32.partialorder %v1992, 0.1
        %vm2009 = vcmp.lt.f32.partialorder %v1993, 0.1
        %vm2010 = vcmp.lt.f32.partialorder %v1994, 0.1
        %vm2011 = vcmp.lt.f32.partialorder %v1995, 0.1
        %vm2012 = vcmp.lt.f32.partialorder %v1996, 0.1
        %vm2013 = vcmp.lt.f32.partialorder %v1997, 0.1
        %vm2014 = vcmp.lt.f32.partialorder %v1998, 0.1
        %vm2015 = vcmp.lt.f32.partialorder %v1999, 0.1
        %vm2016 = vcmp.lt.f32.partialorder %v2000, 0.1
        %v2017 = vsel %vm2001, 1, 0
        %v2018 = vsel %vm2002, 1, 0
        %v2019 = vsel %vm2003, 1, 0
        %v2020 = vsel %vm2004, 1, 0
        %v2021 = vsel %vm2005, 1, 0
        %v2022 = vsel %vm2006, 1, 0
        %v2023 = vsel %vm2007, 1, 0
        %v2024 = vsel %vm2008, 1, 0
        %v2025 = vsel %vm2009, 1, 0
        %v2026 = vsel %vm2010, 1, 0
        %v2027 = vsel %vm2011, 1, 0
        %v2028 = vsel %vm2012, 1, 0
        %v2029 = vsel %vm2013, 1, 0
        %v2030 = vsel %vm2014, 1, 0
        %v2031 = vsel %vm2015, 1, 0
        %v2032 = vsel %vm2016, 1, 0
        %v2033 = vcvt.s32.f32 %v2017
        %v2034 = vcvt.s32.f32 %v2018
        %v2035 = vcvt.s32.f32 %v2019
        %v2036 = vcvt.s32.f32 %v2020
        %v2037 = vcvt.s32.f32 %v2021
        %v2038 = vcvt.s32.f32 %v2022
        %v2039 = vcvt.s32.f32 %v2023
        %v2040 = vcvt.s32.f32 %v2024
        %v2041 = vcvt.s32.f32 %v2025
        %v2042 = vcvt.s32.f32 %v2026
        %v2043 = vcvt.s32.f32 %v2027
        %v2044 = vcvt.s32.f32 %v2028
        %v2045 = vcvt.s32.f32 %v2029
        %v2046 = vcvt.s32.f32 %v2030
        %v2047 = vcvt.s32.f32 %v2031
        %v2048 = vcvt.s32.f32 %v2032
        %v2049 = vmul.f32 %v2033, %v1985
        %v2050 = vmul.f32 %v2034, %v1986
        %v2051 = vmul.f32 %v2035, %v1987
        %v2052 = vmul.f32 %v2036, %v1988
        %v2053 = vmul.f32 %v2037, %v1989
        %v2054 = vmul.f32 %v2038, %v1990
        %v2055 = vmul.f32 %v2039, %v1991
        %v2056 = vmul.f32 %v2040, %v1992
        %v2057 = vmul.f32 %v2041, %v1993
        %v2058 = vmul.f32 %v2042, %v1994
        %v2059 = vmul.f32 %v2043, %v1995
        %v2060 = vmul.f32 %v2044, %v1996
        %v2061 = vmul.f32 %v2045, %v1997
        %v2062 = vmul.f32 %v2046, %v1998
        %v2063 = vmul.f32 %v2047, %v1999
        %v2064 = vmul.f32 %v2048, %v2000
        %v2065 = vmul.f32 %v2049, %v1985
        %v2066 = vmul.f32 %v2050, %v1986
        %v2067 = vmul.f32 %v2051, %v1987
        %v2068 = vmul.f32 %v2052, %v1988
        %v2069 = vmul.f32 %v2053, %v1989
        %v2070 = vmul.f32 %v2054, %v1990
        %v2071 = vmul.f32 %v2055, %v1991
        %v2072 = vmul.f32 %v2056, %v1992
        %v2073 = vmul.f32 %v2057, %v1993
        %v2074 = vmul.f32 %v2058, %v1994
        %v2075 = vmul.f32 %v2059, %v1995
        %v2076 = vmul.f32 %v2060, %v1996
        %v2077 = vmul.f32 %v2061, %v1997
        %v2078 = vmul.f32 %v2062, %v1998
        %v2079 = vmul.f32 %v2063, %v1999
        %v2080 = vmul.f32 %v2064, %v2000
        %v2081 = vmul.f32 %v2065, 5.0
        %v2082 = vmul.f32 %v2066, 5.0
        %v2083 = vmul.f32 %v2067, 5.0
        %v2084 = vmul.f32 %v2068, 5.0
        %v2085 = vmul.f32 %v2069, 5.0
        %v2086 = vmul.f32 %v2070, 5.0
        %v2087 = vmul.f32 %v2071, 5.0
        %v2088 = vmul.f32 %v2072, 5.0
        %v2089 = vmul.f32 %v2073, 5.0
        %v2090 = vmul.f32 %v2074, 5.0
        %v2091 = vmul.f32 %v2075, 5.0
        %v2092 = vmul.f32 %v2076, 5.0
        %v2093 = vmul.f32 %v2077, 5.0
        %v2094 = vmul.f32 %v2078, 5.0
        %v2095 = vmul.f32 %v2079, 5.0
        %v2096 = vmul.f32 %v2080, 5.0
        %v2097 = vsub.f32 1.0, %v2033
        %v2098 = vsub.f32 1.0, %v2034
        %v2099 = vsub.f32 1.0, %v2035
        %v2100 = vsub.f32 1.0, %v2036
        %v2101 = vsub.f32 1.0, %v2037
        %v2102 = vsub.f32 1.0, %v2038
        %v2103 = vsub.f32 1.0, %v2039
        %v2104 = vsub.f32 1.0, %v2040
        %v2105 = vsub.f32 1.0, %v2041
        %v2106 = vsub.f32 1.0, %v2042
        %v2107 = vsub.f32 1.0, %v2043
        %v2108 = vsub.f32 1.0, %v2044
        %v2109 = vsub.f32 1.0, %v2045
        %v2110 = vsub.f32 1.0, %v2046
        %v2111 = vsub.f32 1.0, %v2047
        %v2112 = vsub.f32 1.0, %v2048
        %v2113 = vsub.f32 %v1985, 0.1
        %v2114 = vsub.f32 %v1986, 0.1
        %v2115 = vsub.f32 %v1987, 0.1
        %v2116 = vsub.f32 %v1988, 0.1
        %v2117 = vsub.f32 %v1989, 0.1
        %v2118 = vsub.f32 %v1990, 0.1
        %v2119 = vsub.f32 %v1991, 0.1
        %v2120 = vsub.f32 %v1992, 0.1
        %v2121 = vsub.f32 %v1993, 0.1
        %v2122 = vsub.f32 %v1994, 0.1
        %v2123 = vsub.f32 %v1995, 0.1
        %v2124 = vsub.f32 %v1996, 0.1
        %v2125 = vsub.f32 %v1997, 0.1
        %v2126 = vsub.f32 %v1998, 0.1
        %v2127 = vsub.f32 %v1999, 0.1
        %v2128 = vsub.f32 %v2000, 0.1
        %v2129 = vadd.f32 %v2113, 0.05
        %v2130 = vadd.f32 %v2114, 0.05
        %v2131 = vadd.f32 %v2115, 0.05
        %v2132 = vadd.f32 %v2116, 0.05
        %v2133 = vadd.f32 %v2117, 0.05
        %v2134 = vadd.f32 %v2118, 0.05
        %v2135 = vadd.f32 %v2119, 0.05
        %v2136 = vadd.f32 %v2120, 0.05
        %v2137 = vadd.f32 %v2121, 0.05
        %v2138 = vadd.f32 %v2122, 0.05
        %v2139 = vadd.f32 %v2123, 0.05
        %v2140 = vadd.f32 %v2124, 0.05
        %v2141 = vadd.f32 %v2125, 0.05
        %v2142 = vadd.f32 %v2126, 0.05
        %v2143 = vadd.f32 %v2127, 0.05
        %v2144 = vadd.f32 %v2128, 0.05
        %v2145 = vmul.f32 %v2097, %v2129
        %v2146 = vmul.f32 %v2098, %v2130
        %v2147 = vmul.f32 %v2099, %v2131
        %v2148 = vmul.f32 %v2100, %v2132
        %v2149 = vmul.f32 %v2101, %v2133
        %v2150 = vmul.f32 %v2102, %v2134
        %v2151 = vmul.f32 %v2103, %v2135
        %v2152 = vmul.f32 %v2104, %v2136
        %v2153 = vmul.f32 %v2105, %v2137
        %v2154 = vmul.f32 %v2106, %v2138
        %v2155 = vmul.f32 %v2107, %v2139
        %v2156 = vmul.f32 %v2108, %v2140
        %v2157 = vmul.f32 %v2109, %v2141
        %v2158 = vmul.f32 %v2110, %v2142
        %v2159 = vmul.f32 %v2111, %v2143
        %v2160 = vmul.f32 %v2112, %v2144
        %v2161 = vadd.f32 %v2081, %v2145
        %v2162 = vadd.f32 %v2082, %v2146
        %v2163 = vadd.f32 %v2083, %v2147
        %v2164 = vadd.f32 %v2084, %v2148
        %v2165 = vadd.f32 %v2085, %v2149
        %v2166 = vadd.f32 %v2086, %v2150
        %v2167 = vadd.f32 %v2087, %v2151
        %v2168 = vadd.f32 %v2088, %v2152
        %v2169 = vadd.f32 %v2089, %v2153
        %v2170 = vadd.f32 %v2090, %v2154
        %v2171 = vadd.f32 %v2091, %v2155
        %v2172 = vadd.f32 %v2092, %v2156
        %v2173 = vadd.f32 %v2093, %v2157
        %v2174 = vadd.f32 %v2094, %v2158
        %v2175 = vadd.f32 %v2095, %v2159
        %v2176 = vadd.f32 %v2096, %v2160
        %v2177 = vmul.f32 %v2161, %v1937
        %v2178 = vmul.f32 %v2162, %v1938
        %v2179 = vmul.f32 %v2163, %v1939
        %v2180 = vmul.f32 %v2164, %v1940
        %v2181 = vmul.f32 %v2165, %v1941
        %v2182 = vmul.f32 %v2166, %v1942
        %v2183 = vmul.f32 %v2167, %v1943
        %v2184 = vmul.f32 %v2168, %v1944
        %v2185 = vmul.f32 %v2169, %v1945
        %v2186 = vmul.f32 %v2170, %v1946
        %v2187 = vmul.f32 %v2171, %v1947
        %v2188 = vmul.f32 %v2172, %v1948
        %v2189 = vmul.f32 %v2173, %v1949
        %v2190 = vmul.f32 %v2174, %v1950
        %v2191 = vmul.f32 %v2175, %v1951
        %v2192 = vmul.f32 %v2176, %v1952
        %v2193 = vmul.f32 %v2177, 3.0
        %v2194 = vmul.f32 %v2178, 3.0
        %v2195 = vmul.f32 %v2179, 3.0
        %v2196 = vmul.f32 %v2180, 3.0
        %v2197 = vmul.f32 %v2181, 3.0
        %v2198 = vmul.f32 %v2182, 3.0
        %v2199 = vmul.f32 %v2183, 3.0
        %v2200 = vmul.f32 %v2184, 3.0
        %v2201 = vmul.f32 %v2185, 3.0
        %v2202 = vmul.f32 %v2186, 3.0
        %v2203 = vmul.f32 %v2187, 3.0
        %v2204 = vmul.f32 %v2188, 3.0
        %v2205 = vmul.f32 %v2189, 3.0
        %v2206 = vmul.f32 %v2190, 3.0
        %v2207 = vmul.f32 %v2191, 3.0
        %v2208 = vmul.f32 %v2192, 3.0
        %vm2209 = vcmp.lt.f32.partialorder %v1695, 0.1
        %vm2210 = vcmp.lt.f32.partialorder %v1696, 0.1
        %vm2211 = vcmp.lt.f32.partialorder %v1697, 0.1
        %vm2212 = vcmp.lt.f32.partialorder %v1698, 0.1
        %vm2213 = vcmp.lt.f32.partialorder %v1699, 0.1
        %vm2214 = vcmp.lt.f32.partialorder %v1700, 0.1
        %vm2215 = vcmp.lt.f32.partialorder %v1701, 0.1
        %vm2216 = vcmp.lt.f32.partialorder %v1702, 0.1
        %vm2217 = vcmp.lt.f32.partialorder %v1703, 0.1
        %vm2218 = vcmp.lt.f32.partialorder %v1704, 0.1
        %vm2219 = vcmp.lt.f32.partialorder %v1705, 0.1
        %vm2220 = vcmp.lt.f32.partialorder %v1706, 0.1
        %vm2221 = vcmp.lt.f32.partialorder %v1707, 0.1
        %vm2222 = vcmp.lt.f32.partialorder %v1708, 0.1
        %vm2223 = vcmp.lt.f32.partialorder %v1709, 0.1
        %vm2224 = vcmp.lt.f32.partialorder %v1710, 0.1
        %v2225 = vsel %vm2209, 1, 0
        %v2226 = vsel %vm2210, 1, 0
        %v2227 = vsel %vm2211, 1, 0
        %v2228 = vsel %vm2212, 1, 0
        %v2229 = vsel %vm2213, 1, 0
        %v2230 = vsel %vm2214, 1, 0
        %v2231 = vsel %vm2215, 1, 0
        %v2232 = vsel %vm2216, 1, 0
        %v2233 = vsel %vm2217, 1, 0
        %v2234 = vsel %vm2218, 1, 0
        %v2235 = vsel %vm2219, 1, 0
        %v2236 = vsel %vm2220, 1, 0
        %v2237 = vsel %vm2221, 1, 0
        %v2238 = vsel %vm2222, 1, 0
        %v2239 = vsel %vm2223, 1, 0
        %v2240 = vsel %vm2224, 1, 0
        %v2241 = vcvt.s32.f32 %v2225
        %v2242 = vcvt.s32.f32 %v2226
        %v2243 = vcvt.s32.f32 %v2227
        %v2244 = vcvt.s32.f32 %v2228
        %v2245 = vcvt.s32.f32 %v2229
        %v2246 = vcvt.s32.f32 %v2230
        %v2247 = vcvt.s32.f32 %v2231
        %v2248 = vcvt.s32.f32 %v2232
        %v2249 = vcvt.s32.f32 %v2233
        %v2250 = vcvt.s32.f32 %v2234
        %v2251 = vcvt.s32.f32 %v2235
        %v2252 = vcvt.s32.f32 %v2236
        %v2253 = vcvt.s32.f32 %v2237
        %v2254 = vcvt.s32.f32 %v2238
        %v2255 = vcvt.s32.f32 %v2239
        %v2256 = vcvt.s32.f32 %v2240
        %v2257 = vmul.f32 %v2241, %v1695
        %v2258 = vmul.f32 %v2242, %v1696
        %v2259 = vmul.f32 %v2243, %v1697
        %v2260 = vmul.f32 %v2244, %v1698
        %v2261 = vmul.f32 %v2245, %v1699
        %v2262 = vmul.f32 %v2246, %v1700
        %v2263 = vmul.f32 %v2247, %v1701
        %v2264 = vmul.f32 %v2248, %v1702
        %v2265 = vmul.f32 %v2249, %v1703
        %v2266 = vmul.f32 %v2250, %v1704
        %v2267 = vmul.f32 %v2251, %v1705
        %v2268 = vmul.f32 %v2252, %v1706
        %v2269 = vmul.f32 %v2253, %v1707
        %v2270 = vmul.f32 %v2254, %v1708
        %v2271 = vmul.f32 %v2255, %v1709
        %v2272 = vmul.f32 %v2256, %v1710
        %v2273 = vmul.f32 %v2257, %v1695
        %v2274 = vmul.f32 %v2258, %v1696
        %v2275 = vmul.f32 %v2259, %v1697
        %v2276 = vmul.f32 %v2260, %v1698
        %v2277 = vmul.f32 %v2261, %v1699
        %v2278 = vmul.f32 %v2262, %v1700
        %v2279 = vmul.f32 %v2263, %v1701
        %v2280 = vmul.f32 %v2264, %v1702
        %v2281 = vmul.f32 %v2265, %v1703
        %v2282 = vmul.f32 %v2266, %v1704
        %v2283 = vmul.f32 %v2267, %v1705
        %v2284 = vmul.f32 %v2268, %v1706
        %v2285 = vmul.f32 %v2269, %v1707
        %v2286 = vmul.f32 %v2270, %v1708
        %v2287 = vmul.f32 %v2271, %v1709
        %v2288 = vmul.f32 %v2272, %v1710
        %v2289 = vmul.f32 %v2273, 5.0
        %v2290 = vmul.f32 %v2274, 5.0
        %v2291 = vmul.f32 %v2275, 5.0
        %v2292 = vmul.f32 %v2276, 5.0
        %v2293 = vmul.f32 %v2277, 5.0
        %v2294 = vmul.f32 %v2278, 5.0
        %v2295 = vmul.f32 %v2279, 5.0
        %v2296 = vmul.f32 %v2280, 5.0
        %v2297 = vmul.f32 %v2281, 5.0
        %v2298 = vmul.f32 %v2282, 5.0
        %v2299 = vmul.f32 %v2283, 5.0
        %v2300 = vmul.f32 %v2284, 5.0
        %v2301 = vmul.f32 %v2285, 5.0
        %v2302 = vmul.f32 %v2286, 5.0
        %v2303 = vmul.f32 %v2287, 5.0
        %v2304 = vmul.f32 %v2288, 5.0
        %v2305 = vsub.f32 1.0, %v2241
        %v2306 = vsub.f32 1.0, %v2242
        %v2307 = vsub.f32 1.0, %v2243
        %v2308 = vsub.f32 1.0, %v2244
        %v2309 = vsub.f32 1.0, %v2245
        %v2310 = vsub.f32 1.0, %v2246
        %v2311 = vsub.f32 1.0, %v2247
        %v2312 = vsub.f32 1.0, %v2248
        %v2313 = vsub.f32 1.0, %v2249
        %v2314 = vsub.f32 1.0, %v2250
        %v2315 = vsub.f32 1.0, %v2251
        %v2316 = vsub.f32 1.0, %v2252
        %v2317 = vsub.f32 1.0, %v2253
        %v2318 = vsub.f32 1.0, %v2254
        %v2319 = vsub.f32 1.0, %v2255
        %v2320 = vsub.f32 1.0, %v2256
        %v2321 = vsub.f32 %v1695, 0.1
        %v2322 = vsub.f32 %v1696, 0.1
        %v2323 = vsub.f32 %v1697, 0.1
        %v2324 = vsub.f32 %v1698, 0.1
        %v2325 = vsub.f32 %v1699, 0.1
        %v2326 = vsub.f32 %v1700, 0.1
        %v2327 = vsub.f32 %v1701, 0.1
        %v2328 = vsub.f32 %v1702, 0.1
        %v2329 = vsub.f32 %v1703, 0.1
        %v2330 = vsub.f32 %v1704, 0.1
        %v2331 = vsub.f32 %v1705, 0.1
        %v2332 = vsub.f32 %v1706, 0.1
        %v2333 = vsub.f32 %v1707, 0.1
        %v2334 = vsub.f32 %v1708, 0.1
        %v2335 = vsub.f32 %v1709, 0.1
        %v2336 = vsub.f32 %v1710, 0.1
        %v2337 = vadd.f32 %v2321, 0.05
        %v2338 = vadd.f32 %v2322, 0.05
        %v2339 = vadd.f32 %v2323, 0.05
        %v2340 = vadd.f32 %v2324, 0.05
        %v2341 = vadd.f32 %v2325, 0.05
        %v2342 = vadd.f32 %v2326, 0.05
        %v2343 = vadd.f32 %v2327, 0.05
        %v2344 = vadd.f32 %v2328, 0.05
        %v2345 = vadd.f32 %v2329, 0.05
        %v2346 = vadd.f32 %v2330, 0.05
        %v2347 = vadd.f32 %v2331, 0.05
        %v2348 = vadd.f32 %v2332, 0.05
        %v2349 = vadd.f32 %v2333, 0.05
        %v2350 = vadd.f32 %v2334, 0.05
        %v2351 = vadd.f32 %v2335, 0.05
        %v2352 = vadd.f32 %v2336, 0.05
        %v2353 = vmul.f32 %v2305, %v2337
        %v2354 = vmul.f32 %v2306, %v2338
        %v2355 = vmul.f32 %v2307, %v2339
        %v2356 = vmul.f32 %v2308, %v2340
        %v2357 = vmul.f32 %v2309, %v2341
        %v2358 = vmul.f32 %v2310, %v2342
        %v2359 = vmul.f32 %v2311, %v2343
        %v2360 = vmul.f32 %v2312, %v2344
        %v2361 = vmul.f32 %v2313, %v2345
        %v2362 = vmul.f32 %v2314, %v2346
        %v2363 = vmul.f32 %v2315, %v2347
        %v2364 = vmul.f32 %v2316, %v2348
        %v2365 = vmul.f32 %v2317, %v2349
        %v2366 = vmul.f32 %v2318, %v2350
        %v2367 = vmul.f32 %v2319, %v2351
        %v2368 = vmul.f32 %v2320, %v2352
        %v2369 = vadd.f32 %v2289, %v2353
        %v2370 = vadd.f32 %v2290, %v2354
        %v2371 = vadd.f32 %v2291, %v2355
        %v2372 = vadd.f32 %v2292, %v2356
        %v2373 = vadd.f32 %v2293, %v2357
        %v2374 = vadd.f32 %v2294, %v2358
        %v2375 = vadd.f32 %v2295, %v2359
        %v2376 = vadd.f32 %v2296, %v2360
        %v2377 = vadd.f32 %v2297, %v2361
        %v2378 = vadd.f32 %v2298, %v2362
        %v2379 = vadd.f32 %v2299, %v2363
        %v2380 = vadd.f32 %v2300, %v2364
        %v2381 = vadd.f32 %v2301, %v2365
        %v2382 = vadd.f32 %v2302, %v2366
        %v2383 = vadd.f32 %v2303, %v2367
        %v2384 = vadd.f32 %v2304, %v2368
        %v2385 = vmul.f32 %v2369, %v1953
        %v2386 = vmul.f32 %v2370, %v1954
        %v2387 = vmul.f32 %v2371, %v1955
        %v2388 = vmul.f32 %v2372, %v1956
        %v2389 = vmul.f32 %v2373, %v1957
        %v2390 = vmul.f32 %v2374, %v1958
        %v2391 = vmul.f32 %v2375, %v1959
        %v2392 = vmul.f32 %v2376, %v1960
        %v2393 = vmul.f32 %v2377, %v1961
        %v2394 = vmul.f32 %v2378, %v1962
        %v2395 = vmul.f32 %v2379, %v1963
        %v2396 = vmul.f32 %v2380, %v1964
        %v2397 = vmul.f32 %v2381, %v1965
        %v2398 = vmul.f32 %v2382, %v1966
        %v2399 = vmul.f32 %v2383, %v1967
        %v2400 = vmul.f32 %v2384, %v1968
        %v2401 = vadd.f32 %v2193, %v2385
        %v2402 = vadd.f32 %v2194, %v2386
        %v2403 = vadd.f32 %v2195, %v2387
        %v2404 = vadd.f32 %v2196, %v2388
        %v2405 = vadd.f32 %v2197, %v2389
        %v2406 = vadd.f32 %v2198, %v2390
        %v2407 = vadd.f32 %v2199, %v2391
        %v2408 = vadd.f32 %v2200, %v2392
        %v2409 = vadd.f32 %v2201, %v2393
        %v2410 = vadd.f32 %v2202, %v2394
        %v2411 = vadd.f32 %v2203, %v2395
        %v2412 = vadd.f32 %v2204, %v2396
        %v2413 = vadd.f32 %v2205, %v2397
        %v2414 = vadd.f32 %v2206, %v2398
        %v2415 = vadd.f32 %v2207, %v2399
        %v2416 = vadd.f32 %v2208, %v2400
        %v2418 = vsel %vm341, %v245, 0
        %v2421 = vsel %vm341, %v246, 0
        %v2424 = vsel %vm341, %v247, 0
        %v2427 = vsel %vm341, %v248, 0
        %v2430 = vsel %vm341, %v249, 0
        %v2433 = vsel %vm341, %v250, 0
        %v2436 = vsel %vm341, %v251, 0
        %v2439 = vsel %vm341, %v252, 0
        %v2442 = vsel %vm341, %v253, 0
        %v2445 = vsel %vm341, %v254, 0
        %v2448 = vsel %vm341, %v255, 0
        %v2451 = vsel %vm341, %v256, 0
        %v2454 = vsel %vm341, %v257, 0
        %v2457 = vsel %vm341, %v258, 0
        %v2460 = vsel %vm341, %v259, 0
        %v2463 = vsel %vm341, %v260, 0
        %2465 = vmatprep.subr.mxu0 0.0
        %2466 = vmatpush1.xpose.msra.mxu0 %v2418
        %2467 = vmatprep.subr.mxu0 0.0
        %2468 = vmatpush1.xpose.msra.mxu0 %v2421
        %2469 = vmatprep.subr.mxu0 0.0
        %2470 = vmatpush1.xpose.msra.mxu0 %v2424
        %2471 = vmatprep.subr.mxu0 0.0
        %2472 = vmatpush1.xpose.msra.mxu0 %v2427
        %2473 = vmatprep.subr.mxu0 0.0
        %2474 = vmatpush1.xpose.msra.mxu0 %v2430
        %2475 = vmatprep.subr.mxu0 0.0
        %2476 = vmatpush1.xpose.msra.mxu0 %v2433
        %2477 = vmatprep.subr.mxu0 0.0
        %2478 = vmatpush1.xpose.msra.mxu0 %v2436
        %2479 = vmatprep.subr.mxu0 0.0
        %2480 = vmatpush1.xpose.msra.mxu0 %v2439
        %2481 = vmatprep.subr.mxu0 0.0
        %2482 = vmatpush1.xpose.msra.mxu0 %v2442
        %2483 = vmatprep.subr.mxu0 0.0
        %2484 = vmatpush1.xpose.msra.mxu0 %v2445
        %2485 = vmatprep.subr.mxu0 0.0
        %2486 = vmatpush1.xpose.msra.mxu0 %v2448
        %2487 = vmatprep.subr.mxu0 0.0
        %2488 = vmatpush1.xpose.msra.mxu0 %v2451
        %2489 = vmatprep.subr.mxu0 0.0
        %2490 = vmatpush1.xpose.msra.mxu0 %v2454
        %2491 = vmatprep.subr.mxu0 0.0
        %2492 = vmatpush1.xpose.msra.mxu0 %v2457
        %2493 = vmatprep.subr.mxu0 0.0
        %2494 = vmatpush1.xpose.msra.mxu0 %v2460
        %2495 = vmatprep.subr.mxu0 0.0
        %2496 = vmatpush1.xpose.msra.mxu0 %v2463
        %2497 = vmatprep.subr.mxu0 0.0
        %2498 = vmatpush1.xpose.msra.mxu0 0.0
        %2499 = vmatprep.subr.mxu0 0.0
        %2500 = vmatpush1.xpose.msra.mxu0 0.0
        %2501 = vmatprep.subr.mxu0 0.0
        %2502 = vmatpush1.xpose.msra.mxu0 0.0
        %2503 = vmatprep.subr.mxu0 0.0
        %2504 = vmatpush1.xpose.msra.mxu0 0.0
        %2505 = vmatprep.subr.mxu0 0.0
        %2506 = vmatpush1.xpose.msra.mxu0 0.0
        %2507 = vmatprep.subr.mxu0 0.0
        %2508 = vmatpush1.xpose.msra.mxu0 0.0
        %2509 = vmatprep.subr.mxu0 0.0
        %2510 = vmatpush1.xpose.msra.mxu0 0.0
        %2511 = vmatprep.subr.mxu0 0.0
        %2512 = vmatpush1.xpose.msra.mxu0 0.0
        %2513 = vmatprep.subr.mxu0 0.0
        %2514 = vmatpush1.xpose.msra.mxu0 0.0
        %2515 = vmatprep.subr.mxu0 0.0
        %2516 = vmatpush1.xpose.msra.mxu0 0.0
        %2517 = vmatprep.subr.mxu0 0.0
        %2518 = vmatpush1.xpose.msra.mxu0 0.0
        %2519 = vmatprep.subr.mxu0 0.0
        %2520 = vmatpush1.xpose.msra.mxu0 0.0
        %2521 = vmatprep.subr.mxu0 0.0
        %2522 = vmatpush1.xpose.msra.mxu0 0.0
        %2523 = vmatprep.subr.mxu0 0.0
        %2524 = vmatpush1.xpose.msra.mxu0 0.0
        %2525 = vmatprep.subr.mxu0 0.0
        %2526 = vmatpush1.xpose.msra.mxu0 0.0
        %2527 = vmatprep.subr.mxu0 0.0
        %2528 = vmatpush1.xpose.msra.mxu0 0.0
        %2529 = vmatprep.mubr.f32.mxu0 0.0
        %2530 = vmatmul.mubr.f32.gmra.mrb[0].mxu0 %v2418
        %v2531 = vpop.f32.mrb[0].mxu0
        %v2532 = vadd.f32 0.0, %v2531
        %v2533 = vpop.f32.mrb[0].mxu0
        %2534 = vmatprep.mubr.f32.mxu0 0.0
        %2535 = vmatmul.mubr.f32.gmra.mrb[0].mxu0 %v2421
        %v2536 = vpop.f32.mrb[0].mxu0
        %v2537 = vadd.f32 0.0, %v2536
        %v2538 = vpop.f32.mrb[0].mxu0
        %2539 = vmatprep.mubr.f32.mxu0 0.0
        %2540 = vmatmul.mubr.f32.gmra.mrb[0].mxu0 %v2424
        %v2541 = vpop.f32.mrb[0].mxu0
        %v2542 = vadd.f32 0.0, %v2541
        %v2543 = vpop.f32.mrb[0].mxu0
        %2544 = vmatprep.mubr.f32.mxu0 0.0
        %2545 = vmatmul.mubr.f32.gmra.mrb[0].mxu0 %v2427
        %v2546 = vpop.f32.mrb[0].mxu0
        %v2547 = vadd.f32 0.0, %v2546
        %v2548 = vpop.f32.mrb[0].mxu0
        %2549 = vmatprep.mubr.f32.mxu0 0.0
        %2550 = vmatmul.mubr.f32.gmra.mrb[0].mxu0 %v2430
        %v2551 = vpop.f32.mrb[0].mxu0
        %v2552 = vadd.f32 0.0, %v2551
        %v2553 = vpop.f32.mrb[0].mxu0
        %2554 = vmatprep.mubr.f32.mxu0 0.0
        %2555 = vmatmul.mubr.f32.gmra.mrb[0].mxu0 %v2433
        %v2556 = vpop.f32.mrb[0].mxu0
        %v2557 = vadd.f32 0.0, %v2556
        %v2558 = vpop.f32.mrb[0].mxu0
        %2559 = vmatprep.mubr.f32.mxu0 0.0
        %2560 = vmatmul.mubr.f32.gmra.mrb[0].mxu0 %v2436
        %v2561 = vpop.f32.mrb[0].mxu0
        %v2562 = vadd.f32 0.0, %v2561
        %v2563 = vpop.f32.mrb[0].mxu0
        %2564 = vmatprep.mubr.f32.mxu0 0.0
        %2565 = vmatmul.mubr.f32.gmra.mrb[0].mxu0 %v2439
        %v2566 = vpop.f32.mrb[0].mxu0
        %v2567 = vadd.f32 0.0, %v2566
        %v2568 = vpop.f32.mrb[0].mxu0
        %2569 = vmatprep.mubr.f32.mxu0 0.0
        %2570 = vmatmul.mubr.f32.gmra.mrb[0].mxu0 %v2442
        %v2571 = vpop.f32.mrb[0].mxu0
        %v2572 = vadd.f32 0.0, %v2571
        %v2573 = vpop.f32.mrb[0].mxu0
        %2574 = vmatprep.mubr.f32.mxu0 0.0
        %2575 = vmatmul.mubr.f32.gmra.mrb[0].mxu0 %v2445
        %v2576 = vpop.f32.mrb[0].mxu0
        %v2577 = vadd.f32 0.0, %v2576
        %v2578 = vpop.f32.mrb[0].mxu0
        %2579 = vmatprep.mubr.f32.mxu0 0.0
        %2580 = vmatmul.mubr.f32.gmra.mrb[0].mxu0 %v2448
        %v2581 = vpop.f32.mrb[0].mxu0
        %v2582 = vadd.f32 0.0, %v2581
        %v2583 = vpop.f32.mrb[0].mxu0
        %2584 = vmatprep.mubr.f32.mxu0 0.0
        %2585 = vmatmul.mubr.f32.gmra.mrb[0].mxu0 %v2451
        %v2586 = vpop.f32.mrb[0].mxu0
        %v2587 = vadd.f32 0.0, %v2586
        %v2588 = vpop.f32.mrb[0].mxu0
        %2589 = vmatprep.mubr.f32.mxu0 0.0
        %2590 = vmatmul.mubr.f32.gmra.mrb[0].mxu0 %v2454
        %v2591 = vpop.f32.mrb[0].mxu0
        %v2592 = vadd.f32 0.0, %v2591
        %v2593 = vpop.f32.mrb[0].mxu0
        %2594 = vmatprep.mubr.f32.mxu0 0.0
        %2595 = vmatmul.mubr.f32.gmra.mrb[0].mxu0 %v2457
        %v2596 = vpop.f32.mrb[0].mxu0
        %v2597 = vadd.f32 0.0, %v2596
        %v2598 = vpop.f32.mrb[0].mxu0
        %2599 = vmatprep.mubr.f32.mxu0 0.0
        %2600 = vmatmul.mubr.f32.gmra.mrb[0].mxu0 %v2460
        %v2601 = vpop.f32.mrb[0].mxu0
        %v2602 = vadd.f32 0.0, %v2601
        %v2603 = vpop.f32.mrb[0].mxu0
        %2604 = vmatprep.mubr.f32.mxu0 0.0
        %2605 = vmatmul.mubr.f32.gmra.mrb[0].mxu0 %v2463
        %v2606 = vpop.f32.mrb[0].mxu0
        %v2607 = vadd.f32 0.0, %v2606
        %v2608 = vpop.f32.mrb[0].mxu0
        %2609 = vdwg.mxu0
        %v2610 = vmul.f32 %v2401, %v2532
        %v2611 = vmul.f32 %v2402, %v2537
        %v2612 = vmul.f32 %v2403, %v2542
        %v2613 = vmul.f32 %v2404, %v2547
        %v2614 = vmul.f32 %v2405, %v2552
        %v2615 = vmul.f32 %v2406, %v2557
        %v2616 = vmul.f32 %v2407, %v2562
        %v2617 = vmul.f32 %v2408, %v2567
        %v2618 = vmul.f32 %v2409, %v2572
        %v2619 = vmul.f32 %v2410, %v2577
        %v2620 = vmul.f32 %v2411, %v2582
        %v2621 = vmul.f32 %v2412, %v2587
        %v2622 = vmul.f32 %v2413, %v2592
        %v2623 = vmul.f32 %v2414, %v2597
        %v2624 = vmul.f32 %v2415, %v2602
        %v2625 = vmul.f32 %v2416, %v2607
        %vm2626 = vcmp.gt.f32.partialorder %v2610, 0.01
        %vm2627 = vcmp.gt.f32.partialorder %v2611, 0.01
        %vm2628 = vcmp.gt.f32.partialorder %v2612, 0.01
        %vm2629 = vcmp.gt.f32.partialorder %v2613, 0.01
        %vm2630 = vcmp.gt.f32.partialorder %v2614, 0.01
        %vm2631 = vcmp.gt.f32.partialorder %v2615, 0.01
        %vm2632 = vcmp.gt.f32.partialorder %v2616, 0.01
        %vm2633 = vcmp.gt.f32.partialorder %v2617, 0.01
        %vm2634 = vcmp.gt.f32.partialorder %v2618, 0.01
        %vm2635 = vcmp.gt.f32.partialorder %v2619, 0.01
        %vm2636 = vcmp.gt.f32.partialorder %v2620, 0.01
        %vm2637 = vcmp.gt.f32.partialorder %v2621, 0.01
        %vm2638 = vcmp.gt.f32.partialorder %v2622, 0.01
        %vm2639 = vcmp.gt.f32.partialorder %v2623, 0.01
        %vm2640 = vcmp.gt.f32.partialorder %v2624, 0.01
        %vm2641 = vcmp.gt.f32.partialorder %v2625, 0.01
        %v2642 = vsel %vm2626, %v2610, 0.0
        %v2643 = vsel %vm2627, %v2611, 0.0
        %v2644 = vsel %vm2628, %v2612, 0.0
        %v2645 = vsel %vm2629, %v2613, 0.0
        %v2646 = vsel %vm2630, %v2614, 0.0
        %v2647 = vsel %vm2631, %v2615, 0.0
        %v2648 = vsel %vm2632, %v2616, 0.0
        %v2649 = vsel %vm2633, %v2617, 0.0
        %v2650 = vsel %vm2634, %v2618, 0.0
        %v2651 = vsel %vm2635, %v2619, 0.0
        %v2652 = vsel %vm2636, %v2620, 0.0
        %v2653 = vsel %vm2637, %v2621, 0.0
        %v2654 = vsel %vm2638, %v2622, 0.0
        %v2655 = vsel %vm2639, %v2623, 0.0
        %v2656 = vsel %vm2640, %v2624, 0.0
        %v2657 = vsel %vm2641, %v2625, 0.0
        %v2658 = vadd.f32 %v2642, %v2643
        %v2659 = vadd.f32 %v2658, %v2644
        %v2660 = vadd.f32 %v2659, %v2645
        %v2661 = vadd.f32 %v2660, %v2646
        %v2662 = vadd.f32 %v2661, %v2647
        %v2663 = vadd.f32 %v2662, %v2648
        %v2664 = vadd.f32 %v2663, %v2649
        %v2665 = vadd.f32 %v2664, %v2650
        %v2666 = vadd.f32 %v2665, %v2651
        %v2667 = vadd.f32 %v2666, %v2652
        %v2668 = vadd.f32 %v2667, %v2653
        %v2669 = vadd.f32 %v2668, %v2654
        %v2670 = vadd.f32 %v2669, %v2655
        %v2671 = vadd.f32 %v2670, %v2656
        %v2672 = vadd.f32 %v2671, %v2657
        %2673 = vadd.xlane.f32.xlu0 %v2672
        %v2674 = vpop.xlane.xlu0 %2673
        %v2675 = vrot.slane %v2674, 4
        %v2676 = vadd.f32 %v2674, %v2675
        %v2677 = vrot.slane %v2676, 2
        %v2678 = vadd.f32 %v2676, %v2677
        %v2679 = vrot.slane %v2678, 1
        %v2680 = vadd.f32 %v2678, %v2679
        %s2681 = vtos %v2680
        %v2682 = vsel %vm2626, 1, 0
        %v2683 = vsel %vm2627, 1, 0
        %v2684 = vsel %vm2628, 1, 0
        %v2685 = vsel %vm2629, 1, 0
        %v2686 = vsel %vm2630, 1, 0
        %v2687 = vsel %vm2631, 1, 0
        %v2688 = vsel %vm2632, 1, 0
        %v2689 = vsel %vm2633, 1, 0
        %v2690 = vsel %vm2634, 1, 0
        %v2691 = vsel %vm2635, 1, 0
        %v2692 = vsel %vm2636, 1, 0
        %v2693 = vsel %vm2637, 1, 0
        %v2694 = vsel %vm2638, 1, 0
        %v2695 = vsel %vm2639, 1, 0
        %v2696 = vsel %vm2640, 1, 0
        %v2697 = vsel %vm2641, 1, 0
        %v2698 = vcvt.s32.f32 %v2682
        %v2699 = vcvt.s32.f32 %v2683
        %v2700 = vcvt.s32.f32 %v2684
        %v2701 = vcvt.s32.f32 %v2685
        %v2702 = vcvt.s32.f32 %v2686
        %v2703 = vcvt.s32.f32 %v2687
        %v2704 = vcvt.s32.f32 %v2688
        %v2705 = vcvt.s32.f32 %v2689
        %v2706 = vcvt.s32.f32 %v2690
        %v2707 = vcvt.s32.f32 %v2691
        %v2708 = vcvt.s32.f32 %v2692
        %v2709 = vcvt.s32.f32 %v2693
        %v2710 = vcvt.s32.f32 %v2694
        %v2711 = vcvt.s32.f32 %v2695
        %v2712 = vcvt.s32.f32 %v2696
        %v2713 = vcvt.s32.f32 %v2697
        %v2714 = vadd.f32 %v2698, %v2699
        %v2715 = vadd.f32 %v2714, %v2700
        %v2716 = vadd.f32 %v2715, %v2701
        %v2717 = vadd.f32 %v2716, %v2702
        %v2718 = vadd.f32 %v2717, %v2703
        %v2719 = vadd.f32 %v2718, %v2704
        %v2720 = vadd.f32 %v2719, %v2705
        %v2721 = vadd.f32 %v2720, %v2706
        %v2722 = vadd.f32 %v2721, %v2707
        %v2723 = vadd.f32 %v2722, %v2708
        %v2724 = vadd.f32 %v2723, %v2709
        %v2725 = vadd.f32 %v2724, %v2710
        %v2726 = vadd.f32 %v2725, %v2711
        %v2727 = vadd.f32 %v2726, %v2712
        %v2728 = vadd.f32 %v2727, %v2713
        %2729 = vadd.xlane.f32.xlu0 %v2728
        %v2730 = vpop.xlane.xlu0 %2729
        %v2731 = vrot.slane %v2730, 4
        %v2732 = vadd.f32 %v2730, %v2731
        %v2733 = vrot.slane %v2732, 2
        %v2734 = vadd.f32 %v2732, %v2733
        %v2735 = vrot.slane %v2734, 1
        %v2736 = vadd.f32 %v2734, %v2735
        %s2737 = vtos %v2736
        %s2738 = sadd.f32 %s2737, 1.0
        %v2739 = vstv %s2738
        %v2740 = vrcp.pop %v2739
        %s2741 = vtos %v2740
        %s2742 = smul.f32 %s2681, %s2741
        %v2743 = vsel %vm341, %v245, 0.0
        %v2744 = vsel %vm341, %v246, 0.0
        %v2745 = vadd.f32 %v2743, %v2744
        %v2746 = vsel %vm341, %v247, 0.0
        %v2747 = vadd.f32 %v2745, %v2746
        %v2748 = vsel %vm341, %v248, 0.0
        %v2749 = vadd.f32 %v2747, %v2748
        %v2750 = vsel %vm341, %v249, 0.0
        %v2751 = vadd.f32 %v2749, %v2750
        %v2752 = vsel %vm341, %v250, 0.0
        %v2753 = vadd.f32 %v2751, %v2752
        %v2754 = vsel %vm341, %v251, 0.0
        %v2755 = vadd.f32 %v2753, %v2754
        %v2756 = vsel %vm341, %v252, 0.0
        %v2757 = vadd.f32 %v2755, %v2756
        %v2758 = vsel %vm341, %v253, 0.0
        %v2759 = vadd.f32 %v2757, %v2758
        %v2760 = vsel %vm341, %v254, 0.0
        %v2761 = vadd.f32 %v2759, %v2760
        %v2762 = vsel %vm341, %v255, 0.0
        %v2763 = vadd.f32 %v2761, %v2762
        %v2764 = vsel %vm341, %v256, 0.0
        %v2765 = vadd.f32 %v2763, %v2764
        %v2766 = vsel %vm341, %v257, 0.0
        %v2767 = vadd.f32 %v2765, %v2766
        %v2768 = vsel %vm341, %v258, 0.0
        %v2769 = vadd.f32 %v2767, %v2768
        %v2770 = vsel %vm341, %v259, 0.0
        %v2771 = vadd.f32 %v2769, %v2770
        %v2772 = vsel %vm341, %v260, 0.0
        %v2773 = vadd.f32 %v2771, %v2772
        %2774 = vadd.xlane.f32.xlu0 %v2773
        %v2775 = vpop.xlane.xlu0 %2774
        %v2776 = vrot.slane %v2775, 4
        %v2777 = vadd.f32 %v2775, %v2776
        %v2778 = vrot.slane %v2777, 2
        %v2779 = vadd.f32 %v2777, %v2778
        %v2780 = vrot.slane %v2779, 1
        %v2781 = vadd.f32 %v2779, %v2780
        %s2782 = vtos %v2781
        %s2783 = smul.f32 %s2782, %s2782
        %s2784 = smax.f32 %s2783, 1.0
        %v2785 = vmul.f32 %v1695, %v2532
        %v2786 = vmul.f32 %v1696, %v2537
        %v2787 = vmul.f32 %v1697, %v2542
        %v2788 = vmul.f32 %v1698, %v2547
        %v2789 = vmul.f32 %v1699, %v2552
        %v2790 = vmul.f32 %v1700, %v2557
        %v2791 = vmul.f32 %v1701, %v2562
        %v2792 = vmul.f32 %v1702, %v2567
        %v2793 = vmul.f32 %v1703, %v2572
        %v2794 = vmul.f32 %v1704, %v2577
        %v2795 = vmul.f32 %v1705, %v2582
        %v2796 = vmul.f32 %v1706, %v2587
        %v2797 = vmul.f32 %v1707, %v2592
        %v2798 = vmul.f32 %v1708, %v2597
        %v2799 = vmul.f32 %v1709, %v2602
        %v2800 = vmul.f32 %v1710, %v2607
        %v2801 = vadd.f32 %v2785, %v2786
        %v2802 = vadd.f32 %v2801, %v2787
        %v2803 = vadd.f32 %v2802, %v2788
        %v2804 = vadd.f32 %v2803, %v2789
        %v2805 = vadd.f32 %v2804, %v2790
        %v2806 = vadd.f32 %v2805, %v2791
        %v2807 = vadd.f32 %v2806, %v2792
        %v2808 = vadd.f32 %v2807, %v2793
        %v2809 = vadd.f32 %v2808, %v2794
        %v2810 = vadd.f32 %v2809, %v2795
        %v2811 = vadd.f32 %v2810, %v2796
        %v2812 = vadd.f32 %v2811, %v2797
        %v2813 = vadd.f32 %v2812, %v2798
        %v2814 = vadd.f32 %v2813, %v2799
        %v2815 = vadd.f32 %v2814, %v2800
        %2816 = vadd.xlane.f32.xlu0 %v2815
        %v2817 = vpop.xlane.xlu0 %2816
        %v2818 = vrot.slane %v2817, 4
        %v2819 = vadd.f32 %v2817, %v2818
        %v2820 = vrot.slane %v2819, 2
        %v2821 = vadd.f32 %v2819, %v2820
        %v2822 = vrot.slane %v2821, 1
        %v2823 = vadd.f32 %v2821, %v2822
        %s2824 = vtos %v2823
        %v2825 = vmul.f32 %v2785, %v1937
        %v2826 = vmul.f32 %v2786, %v1938
        %v2827 = vmul.f32 %v2787, %v1939
        %v2828 = vmul.f32 %v2788, %v1940
        %v2829 = vmul.f32 %v2789, %v1941
        %v2830 = vmul.f32 %v2790, %v1942
        %v2831 = vmul.f32 %v2791, %v1943
        %v2832 = vmul.f32 %v2792, %v1944
        %v2833 = vmul.f32 %v2793, %v1945
        %v2834 = vmul.f32 %v2794, %v1946
        %v2835 = vmul.f32 %v2795, %v1947
        %v2836 = vmul.f32 %v2796, %v1948
        %v2837 = vmul.f32 %v2797, %v1949
        %v2838 = vmul.f32 %v2798, %v1950
        %v2839 = vmul.f32 %v2799, %v1951
        %v2840 = vmul.f32 %v2800, %v1952
        %v2841 = vadd.f32 %v2825, %v2826
        %v2842 = vadd.f32 %v2841, %v2827
        %v2843 = vadd.f32 %v2842, %v2828
        %v2844 = vadd.f32 %v2843, %v2829
        %v2845 = vadd.f32 %v2844, %v2830
        %v2846 = vadd.f32 %v2845, %v2831
        %v2847 = vadd.f32 %v2846, %v2832
        %v2848 = vadd.f32 %v2847, %v2833
        %v2849 = vadd.f32 %v2848, %v2834
        %v2850 = vadd.f32 %v2849, %v2835
        %v2851 = vadd.f32 %v2850, %v2836
        %v2852 = vadd.f32 %v2851, %v2837
        %v2853 = vadd.f32 %v2852, %v2838
        %v2854 = vadd.f32 %v2853, %v2839
        %v2855 = vadd.f32 %v2854, %v2840
        %2856 = vadd.xlane.f32.xlu0 %v2855
        %v2857 = vpop.xlane.xlu0 %2856
        %v2858 = vrot.slane %v2857, 4
        %v2859 = vadd.f32 %v2857, %v2858
        %v2860 = vrot.slane %v2859, 2
        %v2861 = vadd.f32 %v2859, %v2860
        %v2862 = vrot.slane %v2861, 1
        %v2863 = vadd.f32 %v2861, %v2862
        %s2864 = vtos %v2863
        %v2865 = vstv %s2784
        %v2866 = vrcp.pop %v2865
        %s2867 = vtos %v2866
        %s2868 = smul.f32 %s2864, %s2867
        %s2869 = ssub.f32 %s2824, %s2864
        %v2870 = vstv %s2784
        %v2871 = vrcp.pop %v2870
        %s2872 = vtos %v2871
        %s2873 = smul.f32 %s2869, %s2872
        %vm2874 = vcmp.eq.s32.totalorder %v212, 0
        %vm2875 = vcmp.eq.s32.totalorder %v210, 0
        %vm2876 = vmand %vm2874, %vm2875
        %vm2877 = vcmp.eq.s32.totalorder %v210, 1
        %vm2878 = vmand %vm2874, %vm2877
        %vm2879 = vcmp.eq.s32.totalorder %v210, 2
        %vm2880 = vmand %vm2874, %vm2879
        %v2881 = vstv %s2868
        %v2882 = vsel %vm2880, %v2881, 0.0
        %v2883 = vstv %s2873
        %v2884 = vsel %vm2878, %v2883, %v2882
        %v2885 = vstv %s2742
        %v2886 = vsel %vm2876, %v2885, %v2884
        %v2887 = vadd.f32 %v2886, 0.0
        %2888 = vst [vmem:[%s193] sm:$0xff] %v2887
        %s2889 = sand.u32 %s103, 1
        %s2890 = scalar_lea.sflag [#allocation3], %s2889
        %s2891 = sand.u32 %s103, 1
        %s2892 = smul.addr %s2891, 8
        %s2893 = scalar_lea.vmem [#allocation2], %s2892
        // Predicated region
        $region33: #{tpu_custom_call.1} parent=31 // pred_check
          %p2894 = pneg %p113
        $region34: #{tpu_custom_call.1} parent=31 // pred_check_branch
          %2896 = sbr.rel (%p2894) target = $region36
        $region35: #{tpu_custom_call.1} parent=31 // pred_region
          %s2898 = ssub.s32 128, 128
          %2899 = vsyncadd %s2890, %s2898
          %s2900 = smul.addr %s17, 128
          %s2901 = scalar_lea.hbm %s3, %s2900
          %s2903 = sshll.u32 %s2893, 4
          %s2904 = int_to_ptr.vmem [resolvable:$true] %s2903
          %2906 = dma.vmem_to_hbm [thread:$0]  %s2904, 128, %s2901, %s2890
        $region36: #{tpu_custom_call.1} parent=31 // pred_fallthru
          _
      $region32: #{tpu_custom_call.1} parent=5 // pred_fallthru
        _
      %p2907 = scmp.le.s32.totalorder 2, %s12
      // Predicated region
      $region37: #{tpu_custom_call.1} parent=5 // pred_check
        %p2908 = pneg %p2907
      $region38: #{tpu_custom_call.1} parent=5 // pred_check_branch
        %2910 = sbr.rel (%p2908) target = $region40
      $region39: #{tpu_custom_call.1} parent=5 // pred_region
        %s2911 = ssub.s32 %s12, 2
        // Predicated region
        $region41: #{tpu_custom_call.1} parent=39 // pred_check
          %p2912 = pneg %p119
        $region42: #{tpu_custom_call.1} parent=39 // pred_check_branch
          %2914 = sbr.rel (%p2912) target = $region44
        $region43: #{tpu_custom_call.1} parent=39 // pred_region
          %s2915 = sand.u32 %s104, 1
          %s2916 = scalar_lea.sflag [#allocation3], %s2915
          %s2917 = sand.u32 %s104, 1
          %s2918 = smul.addr %s2917, 8
          %s2919 = scalar_lea.vmem [#allocation2], %s2918
          %2920 = dma.done %s2916, 128
        $region44: #{tpu_custom_call.1} parent=39 // pred_fallthru
          _
      $region40: #{tpu_custom_call.1} parent=5 // pred_fallthru
        _
    $region6: #{tpu_custom_call.1} parent=1 // loop_footer
      %s16 = sadd.s32 1, %s12
    $region7: #{tpu_custom_call.1} parent=1 // loop_footer_branch
      %11 = sbr.rel target = $region3
    $region8: #{tpu_custom_call.1} parent=1 // loop_exit
      _
    %2921 = vsyncpa [#allocation3], 1
    %s2922 = scalar_lea.sflag [#allocation3], 1
    %2923 = vsyncpa %s2922, 1

</llo_original>
